<compile_context>
chip_gen: v7x
topology: tpu7x:2x2x1
jax: 0.10.0
libtpu: 0.0.40
codegen_flags: <defaults>
</compile_context>

<pallas_src>
import functools

import jax
import jax.numpy as jnp
from jax.experimental import pallas as pl
from jax.experimental.pallas import tpu as pltpu  # noqa: F401  (TPU backend)


def stock_attention_kernel(x_ref, tem_ref, wemb_ref, bemb_ref,
                           ln1w_ref, ln1b_ref, wqkv_ref, bqkv_ref,
                           wproj_ref, bproj_ref, ln2w_ref, ln2b_ref,
                           wfc1_ref, bfc1_ref, wfc2_ref, bfc2_ref,
                           whead_ref, bhead_ref, out_ref, *, n_head):
    B, L, Din = x_ref.shape
    H = wemb_ref.shape[1]
    n_layers = wqkv_ref.shape[0]
    dh = L // n_head                 # heads split the sequence dim (torch semantics)
    BH = B * n_head
    eps = 1e-5

    def layernorm(h, w, b):
        mu = jnp.mean(h, axis=-1, keepdims=True)
        var = jnp.mean((h - mu) ** 2, axis=-1, keepdims=True)
        return (h - mu) * jax.lax.rsqrt(var + eps) * w + b

    def matmul(a, b):
        return jnp.dot(a, b, preferred_element_type=jnp.float32)

    # Embedding: one batch-merged matmul over all B*L rows.
    x = x_ref[...].reshape(B * L, Din)
    h = matmul(x, wemb_ref[...]) + bemb_ref[...]                    # (B*L, H)
    h = (h.reshape(B, L, H) + tem_ref[...]).reshape(B * L, H)       # + tem_emb

    # NOTE: n_layers is tiny here; for deep stacks switch this static unroll
    # to lax.fori_loop or a streamed layer grid axis.
    for l in range(n_layers):
        # ---- attention block: h = h + proj(attn(norm1(h))) ----
        hn = layernorm(h, ln1w_ref[l], ln1b_ref[l])
        # Scale is pre-folded into the q weight/bias (prepare_params); q/k/v
        # use separate weight slabs so no lane-offset slicing of activations.
        q = matmul(hn, wqkv_ref[l, 0]) + bqkv_ref[l, 0]             # (B*L, H)
        k = matmul(hn, wqkv_ref[l, 1]) + bqkv_ref[l, 1]
        v = matmul(hn, wqkv_ref[l, 2]) + bqkv_ref[l, 2]
        qh = q.reshape(BH, dh, H)
        kh = k.reshape(BH, dh, H)
        vh = v.reshape(BH, dh, H)
        s = jax.lax.dot_general(qh, kh, (((2,), (2,)), ((0,), (0,))),
                                preferred_element_type=jnp.float32)  # (BH,dh,dh)
        s = s - jnp.max(s, axis=-1, keepdims=True)
        p = jnp.exp(s)
        p = p * pl.reciprocal(jnp.sum(p, axis=-1, keepdims=True), approx=True)
        o = jax.lax.dot_general(p, vh, (((2,), (1,)), ((0,), (0,))),
                                preferred_element_type=jnp.float32)  # (BH,dh,H)
        attn = o.reshape(B * L, H)
        h = h + matmul(attn, wproj_ref[l]) + bproj_ref[l]
        # attn_drop / proj_drop are identity in eval mode.

        # ---- MLP block: h = h + fc2(relu(fc1(norm2(h)))) ----
        hn = layernorm(h, ln2w_ref[l], ln2b_ref[l])
        m = jnp.maximum(matmul(hn, wfc1_ref[l]) + bfc1_ref[l], 0.0)
        h = h + matmul(m, wfc2_ref[l]) + bfc2_ref[l]

    # AdaptiveAvgPool1d(1) over channels, flatten, head linear -- one matmul,
    # stored directly into out_ref.
    pooled = jnp.mean(h.reshape(B, L, H), axis=-1)                   # (B, L)
    out_ref[...] = matmul(pooled, whead_ref[...]) + bhead_ref[...]   # (B, out)


def make_params(key, in_dim, hid_dim, max_len, head, out_dim, layers):
    """Model parameters in (in_features, out_features) layout."""
    keys = jax.random.split(key, 13)
    init = lambda k, shape: jax.random.normal(k, shape, jnp.float32) * 0.05
    return dict(
        w_emb=init(keys[0], (in_dim, hid_dim)),
        b_emb=init(keys[1], (1, hid_dim)),
        tem_emb=init(keys[2], (max_len, hid_dim)),
        ln1_w=jnp.ones((layers, 1, hid_dim), jnp.float32),
        ln1_b=jnp.zeros((layers, 1, hid_dim), jnp.float32),
        w_qkv=init(keys[3], (layers, hid_dim, 3 * hid_dim)),
        b_qkv=init(keys[4], (layers, 1, 3 * hid_dim)),
        w_proj=init(keys[5], (layers, hid_dim, hid_dim)),
        b_proj=init(keys[6], (layers, 1, hid_dim)),
        ln2_w=jnp.ones((layers, 1, hid_dim), jnp.float32),
        ln2_b=jnp.zeros((layers, 1, hid_dim), jnp.float32),
        w_fc1=init(keys[7], (layers, hid_dim, hid_dim)),
        b_fc1=init(keys[8], (layers, 1, hid_dim)),
        w_fc2=init(keys[9], (layers, hid_dim, hid_dim)),
        b_fc2=init(keys[10], (layers, 1, hid_dim)),
        w_head=init(keys[11], (max_len, out_dim)),
        b_head=init(keys[12], (1, out_dim)),
    )


def prepare_params(params, head):
    """One-time transform of model params into kernel layout.

    * w_qkv (layers, H, 3H) -> (layers, 3, H, H) and b_qkv -> (layers, 3, 1, H)
      so q/k/v use separate weight slabs (no lane-offset activation slicing).
    * Attention scale (hid_dim // head) ** -0.5 folded into w_q / b_q.
    """
    H = params["w_emb"].shape[1]
    layers = params["w_qkv"].shape[0]
    scale = (H // head) ** -0.5
    w_qkv = params["w_qkv"].reshape(layers, H, 3, H).transpose(0, 2, 1, 3)
    b_qkv = params["b_qkv"].reshape(layers, 3, 1, H)
    w_qkv = w_qkv.at[:, 0].multiply(scale)
    b_qkv = b_qkv.at[:, 0].multiply(scale)
    out = dict(params)
    out["w_qkv"] = w_qkv
    out["b_qkv"] = b_qkv
    return out


def stock_attention_forward(x, kparams, head):
    B = x.shape[0]
    out_dim = kparams["w_head"].shape[1]
    args = [x, kparams["tem_emb"], kparams["w_emb"], kparams["b_emb"],
            kparams["ln1_w"], kparams["ln1_b"], kparams["w_qkv"], kparams["b_qkv"],
            kparams["w_proj"], kparams["b_proj"], kparams["ln2_w"], kparams["ln2_b"],
            kparams["w_fc1"], kparams["b_fc1"], kparams["w_fc2"], kparams["b_fc2"],
            kparams["w_head"], kparams["b_head"]]
    kernel = functools.partial(stock_attention_kernel, n_head=head)
    # Everything is tiny: no grid, full arrays resident in VMEM, single store.
    return pl.pallas_call(
        kernel,
        out_shape=jax.ShapeDtypeStruct((B, out_dim), jnp.float32),
    )(*args)


def reference(x, params, head):
    """Pure-JAX transcription of the PyTorch forward (eval mode)."""
    H = params["w_emb"].shape[1]
    B, L, _ = x.shape
    dh = L // head
    scale = (H // head) ** -0.5

    def ln(v, w, b):
        mu = v.mean(-1, keepdims=True)
        var = ((v - mu) ** 2).mean(-1, keepdims=True)
        return (v - mu) / jnp.sqrt(var + 1e-5) * w + b

    h = x @ params["w_emb"] + params["b_emb"] + params["tem_emb"]
    for l in range(params["w_qkv"].shape[0]):
        hn = ln(h, params["ln1_w"][l], params["ln1_b"][l])
        qkv = hn @ params["w_qkv"][l] + params["b_qkv"][l]
        q, k, v = qkv[..., :H], qkv[..., H:2 * H], qkv[..., 2 * H:]
        q = q.reshape(B, head, dh, H)
        k = k.reshape(B, head, dh, H)
        v = v.reshape(B, head, dh, H)
        attn = jax.nn.softmax(jnp.einsum('bhid,bhjd->bhij', q, k) * scale, axis=-1)
        o = jnp.einsum('bhij,bhjd->bhid', attn, v).reshape(B, L, H)
        h = h + (o @ params["w_proj"][l] + params["b_proj"][l])
        hn = ln(h, params["ln2_w"][l], params["ln2_b"][l])
        m = jnp.maximum(hn @ params["w_fc1"][l] + params["b_fc1"][l], 0.0)
        h = h + (m @ params["w_fc2"][l] + params["b_fc2"][l])
    pooled = h.mean(-1)                      # AdaptiveAvgPool1d(1) + flatten -> (B, L)
    return pooled @ params["w_head"] + params["b_head"]


if __name__ == "__main__":
    in_dim, hid_dim, max_len, head, out_dim, layers = 8, 32, 8, 2, 4, 2
    batch = 2

    key = jax.random.PRNGKey(0)
    kp, kx = jax.random.split(key)
    params = make_params(kp, in_dim, hid_dim, max_len, head, out_dim, layers)
    x = jax.random.normal(kx, (batch, max_len, in_dim), jnp.float32)

    kparams = prepare_params(params, head)      # one-time layout / scale-fold
    out = stock_attention_forward(x, kparams, head)
    out = jax.block_until_ready(out)

    ref = reference(x, params, head)
    assert out.shape == (batch, out_dim), out.shape
    # Slightly looser tolerance: the softmax denominator uses the EUP approx
    # reciprocal (pl.reciprocal(approx=True)) vs. the exact divide in the ref.
    assert jnp.allclose(out, ref, atol=2e-3, rtol=2e-3), (out, ref)
    print("KERNEL_OK")
</pallas_src>

<mosaic_0001>
module attributes {stable_mosaic.version = 11 : i64} {
  func.func @stock_attention_kernel(%arg0: memref<2x8x8xf32, #tpu.memory_space<vmem>>, %arg1: memref<8x32xf32, #tpu.memory_space<vmem>>, %arg2: memref<8x32xf32, #tpu.memory_space<vmem>>, %arg3: memref<1x32xf32, #tpu.memory_space<vmem>>, %arg4: memref<2x1x32xf32, #tpu.memory_space<vmem>>, %arg5: memref<2x1x32xf32, #tpu.memory_space<vmem>>, %arg6: memref<2x3x32x32xf32, #tpu.memory_space<vmem>>, %arg7: memref<2x3x1x32xf32, #tpu.memory_space<vmem>>, %arg8: memref<2x32x32xf32, #tpu.memory_space<vmem>>, %arg9: memref<2x1x32xf32, #tpu.memory_space<vmem>>, %arg10: memref<2x1x32xf32, #tpu.memory_space<vmem>>, %arg11: memref<2x1x32xf32, #tpu.memory_space<vmem>>, %arg12: memref<2x32x32xf32, #tpu.memory_space<vmem>>, %arg13: memref<2x1x32xf32, #tpu.memory_space<vmem>>, %arg14: memref<2x32x32xf32, #tpu.memory_space<vmem>>, %arg15: memref<2x1x32xf32, #tpu.memory_space<vmem>>, %arg16: memref<8x4xf32, #tpu.memory_space<vmem>>, %arg17: memref<1x4xf32, #tpu.memory_space<vmem>>, %arg18: memref<2x4xf32, #tpu.memory_space<vmem>>) attributes {dimension_semantics = [], scalar_prefetch = 0 : i64, scratch_operands = 0 : i64, tpu.core_type = #tpu.core_type<tc>} {
    %c0 = arith.constant 0 : index
    %c0_0 = arith.constant 0 : index
    %c0_1 = arith.constant 0 : index
    %0 = vector.load %arg0[%c0, %c0_0, %c0_1] : memref<2x8x8xf32, #tpu.memory_space<vmem>>, vector<2x8x8xf32>
    %1 = vector.shape_cast %0 : vector<2x8x8xf32> to vector<16x8xf32>
    %c0_2 = arith.constant 0 : index
    %c0_3 = arith.constant 0 : index
    %2 = vector.load %arg2[%c0_2, %c0_3] : memref<8x32xf32, #tpu.memory_space<vmem>>, vector<8x32xf32>
    %cst = arith.constant dense<0.000000e+00> : vector<16x32xf32>
    %3 = tpu.matmul %1, %2, %cst {dimension_numbers = #tpu.dot_dimension_numbers<[1], [0], [0], [1], [0, 0, 1, 1], [], []>} : vector<16x8xf32>, vector<8x32xf32>, vector<16x32xf32> -> vector<16x32xf32>
    %c0_4 = arith.constant 0 : index
    %c0_5 = arith.constant 0 : index
    %4 = vector.load %arg3[%c0_4, %c0_5] : memref<1x32xf32, #tpu.memory_space<vmem>>, vector<1x32xf32>
    %5 = vector.broadcast %4 : vector<1x32xf32> to vector<16x32xf32>
    %6 = arith.addf %3, %5 : vector<16x32xf32>
    %7 = vector.shape_cast %6 : vector<16x32xf32> to vector<2x8x32xf32>
    %c0_6 = arith.constant 0 : index
    %c0_7 = arith.constant 0 : index
    %8 = vector.load %arg1[%c0_6, %c0_7] : memref<8x32xf32, #tpu.memory_space<vmem>>, vector<8x32xf32>
    %9 = vector.shape_cast %8 : vector<8x32xf32> to vector<1x8x32xf32>
    %10 = vector.broadcast %9 : vector<1x8x32xf32> to vector<2x8x32xf32>
    %11 = arith.addf %7, %10 : vector<2x8x32xf32>
    %12 = vector.shape_cast %11 : vector<2x8x32xf32> to vector<16x32xf32>
    %c0_8 = arith.constant 0 : index
    %c0_9 = arith.constant 0 : index
    %c0_10 = arith.constant 0 : index
    %13 = vector.load %arg4[%c0_8, %c0_9, %c0_10] : memref<2x1x32xf32, #tpu.memory_space<vmem>>, vector<1x1x32xf32>
    %14 = vector.shape_cast %13 : vector<1x1x32xf32> to vector<1x32xf32>
    %c0_11 = arith.constant 0 : index
    %c0_12 = arith.constant 0 : index
    %c0_13 = arith.constant 0 : index
    %15 = vector.load %arg5[%c0_11, %c0_12, %c0_13] : memref<2x1x32xf32, #tpu.memory_space<vmem>>, vector<1x1x32xf32>
    %16 = vector.shape_cast %15 : vector<1x1x32xf32> to vector<1x32xf32>
    %cst_14 = arith.constant dense<0.000000e+00> : vector<16xf32>
    %17 = vector.multi_reduction <add>, %12, %cst_14 [1] : vector<16x32xf32> to vector<16xf32>
    %18 = vector.shape_cast %17 : vector<16xf32> to vector<16x1xf32>
    %cst_15 = arith.constant 3.200000e+01 : f32
    %19 = vector.broadcast %cst_15 : f32 to vector<16x1xf32>
    %20 = arith.divf %18, %19 : vector<16x1xf32>
    %21 = vector.broadcast %20 : vector<16x1xf32> to vector<16x32xf32>
    %22 = arith.subf %12, %21 : vector<16x32xf32>
    %23 = arith.mulf %22, %22 : vector<16x32xf32>
    %cst_16 = arith.constant dense<0.000000e+00> : vector<16xf32>
    %24 = vector.multi_reduction <add>, %23, %cst_16 [1] : vector<16x32xf32> to vector<16xf32>
    %25 = vector.shape_cast %24 : vector<16xf32> to vector<16x1xf32>
    %cst_17 = arith.constant 3.200000e+01 : f32
    %26 = vector.broadcast %cst_17 : f32 to vector<16x1xf32>
    %27 = arith.divf %25, %26 : vector<16x1xf32>
    %28 = vector.broadcast %20 : vector<16x1xf32> to vector<16x32xf32>
    %29 = arith.subf %12, %28 : vector<16x32xf32>
    %cst_18 = arith.constant 9.99999974E-6 : f32
    %30 = vector.broadcast %cst_18 : f32 to vector<16x1xf32>
    %31 = arith.addf %27, %30 : vector<16x1xf32>
    %32 = math.rsqrt %31 : vector<16x1xf32>
    %33 = vector.broadcast %32 : vector<16x1xf32> to vector<16x32xf32>
    %34 = arith.mulf %29, %33 : vector<16x32xf32>
    %35 = vector.broadcast %14 : vector<1x32xf32> to vector<16x32xf32>
    %36 = arith.mulf %34, %35 : vector<16x32xf32>
    %37 = vector.broadcast %16 : vector<1x32xf32> to vector<16x32xf32>
    %38 = arith.addf %36, %37 : vector<16x32xf32>
    %c0_19 = arith.constant 0 : index
    %c0_20 = arith.constant 0 : index
    %c0_21 = arith.constant 0 : index
    %c0_22 = arith.constant 0 : index
    %39 = vector.load %arg6[%c0_19, %c0_20, %c0_21, %c0_22] : memref<2x3x32x32xf32, #tpu.memory_space<vmem>>, vector<1x1x32x32xf32>
    %40 = vector.shape_cast %39 : vector<1x1x32x32xf32> to vector<32x32xf32>
    %cst_23 = arith.constant dense<0.000000e+00> : vector<16x32xf32>
    %41 = tpu.matmul %38, %40, %cst_23 {dimension_numbers = #tpu.dot_dimension_numbers<[1], [0], [0], [1], [0, 0, 1, 1], [], []>} : vector<16x32xf32>, vector<32x32xf32>, vector<16x32xf32> -> vector<16x32xf32>
    %c0_24 = arith.constant 0 : index
    %c0_25 = arith.constant 0 : index
    %c0_26 = arith.constant 0 : index
    %c0_27 = arith.constant 0 : index
    %42 = vector.load %arg7[%c0_24, %c0_25, %c0_26, %c0_27] : memref<2x3x1x32xf32, #tpu.memory_space<vmem>>, vector<1x1x1x32xf32>
    %43 = vector.shape_cast %42 : vector<1x1x1x32xf32> to vector<1x32xf32>
    %44 = vector.broadcast %43 : vector<1x32xf32> to vector<16x32xf32>
    %45 = arith.addf %41, %44 : vector<16x32xf32>
    %c0_28 = arith.constant 0 : index
    %c1 = arith.constant 1 : index
    %c0_29 = arith.constant 0 : index
    %c0_30 = arith.constant 0 : index
    %46 = vector.load %arg6[%c0_28, %c1, %c0_29, %c0_30] : memref<2x3x32x32xf32, #tpu.memory_space<vmem>>, vector<1x1x32x32xf32>
    %47 = vector.shape_cast %46 : vector<1x1x32x32xf32> to vector<32x32xf32>
    %cst_31 = arith.constant dense<0.000000e+00> : vector<16x32xf32>
    %48 = tpu.matmul %38, %47, %cst_31 {dimension_numbers = #tpu.dot_dimension_numbers<[1], [0], [0], [1], [0, 0, 1, 1], [], []>} : vector<16x32xf32>, vector<32x32xf32>, vector<16x32xf32> -> vector<16x32xf32>
    %c0_32 = arith.constant 0 : index
    %c1_33 = arith.constant 1 : index
    %c0_34 = arith.constant 0 : index
    %c0_35 = arith.constant 0 : index
    %49 = vector.load %arg7[%c0_32, %c1_33, %c0_34, %c0_35] : memref<2x3x1x32xf32, #tpu.memory_space<vmem>>, vector<1x1x1x32xf32>
    %50 = vector.shape_cast %49 : vector<1x1x1x32xf32> to vector<1x32xf32>
    %51 = vector.broadcast %50 : vector<1x32xf32> to vector<16x32xf32>
    %52 = arith.addf %48, %51 : vector<16x32xf32>
    %c0_36 = arith.constant 0 : index
    %c2 = arith.constant 2 : index
    %c0_37 = arith.constant 0 : index
    %c0_38 = arith.constant 0 : index
    %53 = vector.load %arg6[%c0_36, %c2, %c0_37, %c0_38] : memref<2x3x32x32xf32, #tpu.memory_space<vmem>>, vector<1x1x32x32xf32>
    %54 = vector.shape_cast %53 : vector<1x1x32x32xf32> to vector<32x32xf32>
    %cst_39 = arith.constant dense<0.000000e+00> : vector<16x32xf32>
    %55 = tpu.matmul %38, %54, %cst_39 {dimension_numbers = #tpu.dot_dimension_numbers<[1], [0], [0], [1], [0, 0, 1, 1], [], []>} : vector<16x32xf32>, vector<32x32xf32>, vector<16x32xf32> -> vector<16x32xf32>
    %c0_40 = arith.constant 0 : index
    %c2_41 = arith.constant 2 : index
    %c0_42 = arith.constant 0 : index
    %c0_43 = arith.constant 0 : index
    %56 = vector.load %arg7[%c0_40, %c2_41, %c0_42, %c0_43] : memref<2x3x1x32xf32, #tpu.memory_space<vmem>>, vector<1x1x1x32xf32>
    %57 = vector.shape_cast %56 : vector<1x1x1x32xf32> to vector<1x32xf32>
    %58 = vector.broadcast %57 : vector<1x32xf32> to vector<16x32xf32>
    %59 = arith.addf %55, %58 : vector<16x32xf32>
    %60 = vector.shape_cast %45 : vector<16x32xf32> to vector<4x4x32xf32>
    %61 = vector.shape_cast %52 : vector<16x32xf32> to vector<4x4x32xf32>
    %62 = vector.shape_cast %59 : vector<16x32xf32> to vector<4x4x32xf32>
    %cst_44 = arith.constant dense<0.000000e+00> : vector<4x4x4xf32>
    %63 = tpu.matmul %60, %61, %cst_44 {dimension_numbers = #tpu.dot_dimension_numbers<[2], [2], [1], [1], [0, 0, 0, 1, 1, 1], [0], [0]>} : vector<4x4x32xf32>, vector<4x4x32xf32>, vector<4x4x4xf32> -> vector<4x4x4xf32>
    %cst_45 = arith.constant dense<0xFF800000> : vector<4x4xf32>
    %64 = vector.multi_reduction <maximumf>, %63, %cst_45 [2] : vector<4x4x4xf32> to vector<4x4xf32>
    %65 = vector.shape_cast %64 : vector<4x4xf32> to vector<4x4x1xf32>
    %66 = vector.broadcast %65 : vector<4x4x1xf32> to vector<4x4x4xf32>
    %67 = arith.subf %63, %66 : vector<4x4x4xf32>
    %68 = math.exp %67 : vector<4x4x4xf32>
    %cst_46 = arith.constant dense<0.000000e+00> : vector<4x4xf32>
    %69 = vector.multi_reduction <add>, %68, %cst_46 [2] : vector<4x4x4xf32> to vector<4x4xf32>
    %70 = vector.shape_cast %69 : vector<4x4xf32> to vector<4x4x1xf32>
    %71 = tpu.reciprocal %70 {approx = true} : vector<4x4x1xf32> -> vector<4x4x1xf32>
    %72 = vector.broadcast %71 : vector<4x4x1xf32> to vector<4x4x4xf32>
    %73 = arith.mulf %68, %72 : vector<4x4x4xf32>
    %cst_47 = arith.constant dense<0.000000e+00> : vector<4x4x32xf32>
    %74 = tpu.matmul %73, %62, %cst_47 {dimension_numbers = #tpu.dot_dimension_numbers<[2], [1], [1], [2], [0, 0, 0, 1, 1, 2], [0], [0]>} : vector<4x4x4xf32>, vector<4x4x32xf32>, vector<4x4x32xf32> -> vector<4x4x32xf32>
    %75 = vector.shape_cast %74 : vector<4x4x32xf32> to vector<16x32xf32>
    %c0_48 = arith.constant 0 : index
    %c0_49 = arith.constant 0 : index
    %c0_50 = arith.constant 0 : index
    %76 = vector.load %arg8[%c0_48, %c0_49, %c0_50] : memref<2x32x32xf32, #tpu.memory_space<vmem>>, vector<1x32x32xf32>
    %77 = vector.shape_cast %76 : vector<1x32x32xf32> to vector<32x32xf32>
    %cst_51 = arith.constant dense<0.000000e+00> : vector<16x32xf32>
    %78 = tpu.matmul %75, %77, %cst_51 {dimension_numbers = #tpu.dot_dimension_numbers<[1], [0], [0], [1], [0, 0, 1, 1], [], []>} : vector<16x32xf32>, vector<32x32xf32>, vector<16x32xf32> -> vector<16x32xf32>
    %79 = arith.addf %12, %78 : vector<16x32xf32>
    %c0_52 = arith.constant 0 : index
    %c0_53 = arith.constant 0 : index
    %c0_54 = arith.constant 0 : index
    %80 = vector.load %arg9[%c0_52, %c0_53, %c0_54] : memref<2x1x32xf32, #tpu.memory_space<vmem>>, vector<1x1x32xf32>
    %81 = vector.shape_cast %80 : vector<1x1x32xf32> to vector<1x32xf32>
    %82 = vector.broadcast %81 : vector<1x32xf32> to vector<16x32xf32>
    %83 = arith.addf %79, %82 : vector<16x32xf32>
    %c0_55 = arith.constant 0 : index
    %c0_56 = arith.constant 0 : index
    %c0_57 = arith.constant 0 : index
    %84 = vector.load %arg10[%c0_55, %c0_56, %c0_57] : memref<2x1x32xf32, #tpu.memory_space<vmem>>, vector<1x1x32xf32>
    %85 = vector.shape_cast %84 : vector<1x1x32xf32> to vector<1x32xf32>
    %c0_58 = arith.constant 0 : index
    %c0_59 = arith.constant 0 : index
    %c0_60 = arith.constant 0 : index
    %86 = vector.load %arg11[%c0_58, %c0_59, %c0_60] : memref<2x1x32xf32, #tpu.memory_space<vmem>>, vector<1x1x32xf32>
    %87 = vector.shape_cast %86 : vector<1x1x32xf32> to vector<1x32xf32>
    %cst_61 = arith.constant dense<0.000000e+00> : vector<16xf32>
    %88 = vector.multi_reduction <add>, %83, %cst_61 [1] : vector<16x32xf32> to vector<16xf32>
    %89 = vector.shape_cast %88 : vector<16xf32> to vector<16x1xf32>
    %cst_62 = arith.constant 3.200000e+01 : f32
    %90 = vector.broadcast %cst_62 : f32 to vector<16x1xf32>
    %91 = arith.divf %89, %90 : vector<16x1xf32>
    %92 = vector.broadcast %91 : vector<16x1xf32> to vector<16x32xf32>
    %93 = arith.subf %83, %92 : vector<16x32xf32>
    %94 = arith.mulf %93, %93 : vector<16x32xf32>
    %cst_63 = arith.constant dense<0.000000e+00> : vector<16xf32>
    %95 = vector.multi_reduction <add>, %94, %cst_63 [1] : vector<16x32xf32> to vector<16xf32>
    %96 = vector.shape_cast %95 : vector<16xf32> to vector<16x1xf32>
    %cst_64 = arith.constant 3.200000e+01 : f32
    %97 = vector.broadcast %cst_64 : f32 to vector<16x1xf32>
    %98 = arith.divf %96, %97 : vector<16x1xf32>
    %99 = vector.broadcast %91 : vector<16x1xf32> to vector<16x32xf32>
    %100 = arith.subf %83, %99 : vector<16x32xf32>
    %cst_65 = arith.constant 9.99999974E-6 : f32
    %101 = vector.broadcast %cst_65 : f32 to vector<16x1xf32>
    %102 = arith.addf %98, %101 : vector<16x1xf32>
    %103 = math.rsqrt %102 : vector<16x1xf32>
    %104 = vector.broadcast %103 : vector<16x1xf32> to vector<16x32xf32>
    %105 = arith.mulf %100, %104 : vector<16x32xf32>
    %106 = vector.broadcast %85 : vector<1x32xf32> to vector<16x32xf32>
    %107 = arith.mulf %105, %106 : vector<16x32xf32>
    %108 = vector.broadcast %87 : vector<1x32xf32> to vector<16x32xf32>
    %109 = arith.addf %107, %108 : vector<16x32xf32>
    %c0_66 = arith.constant 0 : index
    %c0_67 = arith.constant 0 : index
    %c0_68 = arith.constant 0 : index
    %110 = vector.load %arg12[%c0_66, %c0_67, %c0_68] : memref<2x32x32xf32, #tpu.memory_space<vmem>>, vector<1x32x32xf32>
    %111 = vector.shape_cast %110 : vector<1x32x32xf32> to vector<32x32xf32>
    %cst_69 = arith.constant dense<0.000000e+00> : vector<16x32xf32>
    %112 = tpu.matmul %109, %111, %cst_69 {dimension_numbers = #tpu.dot_dimension_numbers<[1], [0], [0], [1], [0, 0, 1, 1], [], []>} : vector<16x32xf32>, vector<32x32xf32>, vector<16x32xf32> -> vector<16x32xf32>
    %c0_70 = arith.constant 0 : index
    %c0_71 = arith.constant 0 : index
    %c0_72 = arith.constant 0 : index
    %113 = vector.load %arg13[%c0_70, %c0_71, %c0_72] : memref<2x1x32xf32, #tpu.memory_space<vmem>>, vector<1x1x32xf32>
    %114 = vector.shape_cast %113 : vector<1x1x32xf32> to vector<1x32xf32>
    %115 = vector.broadcast %114 : vector<1x32xf32> to vector<16x32xf32>
    %116 = arith.addf %112, %115 : vector<16x32xf32>
    %cst_73 = arith.constant 0.000000e+00 : f32
    %117 = vector.broadcast %cst_73 : f32 to vector<16x32xf32>
    %118 = arith.maximumf %116, %117 : vector<16x32xf32>
    %c0_74 = arith.constant 0 : index
    %c0_75 = arith.constant 0 : index
    %c0_76 = arith.constant 0 : index
    %119 = vector.load %arg14[%c0_74, %c0_75, %c0_76] : memref<2x32x32xf32, #tpu.memory_space<vmem>>, vector<1x32x32xf32>
    %120 = vector.shape_cast %119 : vector<1x32x32xf32> to vector<32x32xf32>
    %cst_77 = arith.constant dense<0.000000e+00> : vector<16x32xf32>
    %121 = tpu.matmul %118, %120, %cst_77 {dimension_numbers = #tpu.dot_dimension_numbers<[1], [0], [0], [1], [0, 0, 1, 1], [], []>} : vector<16x32xf32>, vector<32x32xf32>, vector<16x32xf32> -> vector<16x32xf32>
    %122 = arith.addf %83, %121 : vector<16x32xf32>
    %c0_78 = arith.constant 0 : index
    %c0_79 = arith.constant 0 : index
    %c0_80 = arith.constant 0 : index
    %123 = vector.load %arg15[%c0_78, %c0_79, %c0_80] : memref<2x1x32xf32, #tpu.memory_space<vmem>>, vector<1x1x32xf32>
    %124 = vector.shape_cast %123 : vector<1x1x32xf32> to vector<1x32xf32>
    %125 = vector.broadcast %124 : vector<1x32xf32> to vector<16x32xf32>
    %126 = arith.addf %122, %125 : vector<16x32xf32>
    %c1_81 = arith.constant 1 : index
    %c0_82 = arith.constant 0 : index
    %c0_83 = arith.constant 0 : index
    %127 = vector.load %arg4[%c1_81, %c0_82, %c0_83] : memref<2x1x32xf32, #tpu.memory_space<vmem>>, vector<1x1x32xf32>
    %128 = vector.shape_cast %127 : vector<1x1x32xf32> to vector<1x32xf32>
    %c1_84 = arith.constant 1 : index
    %c0_85 = arith.constant 0 : index
    %c0_86 = arith.constant 0 : index
    %129 = vector.load %arg5[%c1_84, %c0_85, %c0_86] : memref<2x1x32xf32, #tpu.memory_space<vmem>>, vector<1x1x32xf32>
    %130 = vector.shape_cast %129 : vector<1x1x32xf32> to vector<1x32xf32>
    %cst_87 = arith.constant dense<0.000000e+00> : vector<16xf32>
    %131 = vector.multi_reduction <add>, %126, %cst_87 [1] : vector<16x32xf32> to vector<16xf32>
    %132 = vector.shape_cast %131 : vector<16xf32> to vector<16x1xf32>
    %cst_88 = arith.constant 3.200000e+01 : f32
    %133 = vector.broadcast %cst_88 : f32 to vector<16x1xf32>
    %134 = arith.divf %132, %133 : vector<16x1xf32>
    %135 = vector.broadcast %134 : vector<16x1xf32> to vector<16x32xf32>
    %136 = arith.subf %126, %135 : vector<16x32xf32>
    %137 = arith.mulf %136, %136 : vector<16x32xf32>
    %cst_89 = arith.constant dense<0.000000e+00> : vector<16xf32>
    %138 = vector.multi_reduction <add>, %137, %cst_89 [1] : vector<16x32xf32> to vector<16xf32>
    %139 = vector.shape_cast %138 : vector<16xf32> to vector<16x1xf32>
    %cst_90 = arith.constant 3.200000e+01 : f32
    %140 = vector.broadcast %cst_90 : f32 to vector<16x1xf32>
    %141 = arith.divf %139, %140 : vector<16x1xf32>
    %142 = vector.broadcast %134 : vector<16x1xf32> to vector<16x32xf32>
    %143 = arith.subf %126, %142 : vector<16x32xf32>
    %cst_91 = arith.constant 9.99999974E-6 : f32
    %144 = vector.broadcast %cst_91 : f32 to vector<16x1xf32>
    %145 = arith.addf %141, %144 : vector<16x1xf32>
    %146 = math.rsqrt %145 : vector<16x1xf32>
    %147 = vector.broadcast %146 : vector<16x1xf32> to vector<16x32xf32>
    %148 = arith.mulf %143, %147 : vector<16x32xf32>
    %149 = vector.broadcast %128 : vector<1x32xf32> to vector<16x32xf32>
    %150 = arith.mulf %148, %149 : vector<16x32xf32>
    %151 = vector.broadcast %130 : vector<1x32xf32> to vector<16x32xf32>
    %152 = arith.addf %150, %151 : vector<16x32xf32>
    %c1_92 = arith.constant 1 : index
    %c0_93 = arith.constant 0 : index
    %c0_94 = arith.constant 0 : index
    %c0_95 = arith.constant 0 : index
    %153 = vector.load %arg6[%c1_92, %c0_93, %c0_94, %c0_95] : memref<2x3x32x32xf32, #tpu.memory_space<vmem>>, vector<1x1x32x32xf32>
    %154 = vector.shape_cast %153 : vector<1x1x32x32xf32> to vector<32x32xf32>
    %cst_96 = arith.constant dense<0.000000e+00> : vector<16x32xf32>
    %155 = tpu.matmul %152, %154, %cst_96 {dimension_numbers = #tpu.dot_dimension_numbers<[1], [0], [0], [1], [0, 0, 1, 1], [], []>} : vector<16x32xf32>, vector<32x32xf32>, vector<16x32xf32> -> vector<16x32xf32>
    %c1_97 = arith.constant 1 : index
    %c0_98 = arith.constant 0 : index
    %c0_99 = arith.constant 0 : index
    %c0_100 = arith.constant 0 : index
    %156 = vector.load %arg7[%c1_97, %c0_98, %c0_99, %c0_100] : memref<2x3x1x32xf32, #tpu.memory_space<vmem>>, vector<1x1x1x32xf32>
    %157 = vector.shape_cast %156 : vector<1x1x1x32xf32> to vector<1x32xf32>
    %158 = vector.broadcast %157 : vector<1x32xf32> to vector<16x32xf32>
    %159 = arith.addf %155, %158 : vector<16x32xf32>
    %c1_101 = arith.constant 1 : index
    %c1_102 = arith.constant 1 : index
    %c0_103 = arith.constant 0 : index
    %c0_104 = arith.constant 0 : index
    %160 = vector.load %arg6[%c1_101, %c1_102, %c0_103, %c0_104] : memref<2x3x32x32xf32, #tpu.memory_space<vmem>>, vector<1x1x32x32xf32>
    %161 = vector.shape_cast %160 : vector<1x1x32x32xf32> to vector<32x32xf32>
    %cst_105 = arith.constant dense<0.000000e+00> : vector<16x32xf32>
    %162 = tpu.matmul %152, %161, %cst_105 {dimension_numbers = #tpu.dot_dimension_numbers<[1], [0], [0], [1], [0, 0, 1, 1], [], []>} : vector<16x32xf32>, vector<32x32xf32>, vector<16x32xf32> -> vector<16x32xf32>
    %c1_106 = arith.constant 1 : index
    %c1_107 = arith.constant 1 : index
    %c0_108 = arith.constant 0 : index
    %c0_109 = arith.constant 0 : index
    %163 = vector.load %arg7[%c1_106, %c1_107, %c0_108, %c0_109] : memref<2x3x1x32xf32, #tpu.memory_space<vmem>>, vector<1x1x1x32xf32>
    %164 = vector.shape_cast %163 : vector<1x1x1x32xf32> to vector<1x32xf32>
    %165 = vector.broadcast %164 : vector<1x32xf32> to vector<16x32xf32>
    %166 = arith.addf %162, %165 : vector<16x32xf32>
    %c1_110 = arith.constant 1 : index
    %c2_111 = arith.constant 2 : index
    %c0_112 = arith.constant 0 : index
    %c0_113 = arith.constant 0 : index
    %167 = vector.load %arg6[%c1_110, %c2_111, %c0_112, %c0_113] : memref<2x3x32x32xf32, #tpu.memory_space<vmem>>, vector<1x1x32x32xf32>
    %168 = vector.shape_cast %167 : vector<1x1x32x32xf32> to vector<32x32xf32>
    %cst_114 = arith.constant dense<0.000000e+00> : vector<16x32xf32>
    %169 = tpu.matmul %152, %168, %cst_114 {dimension_numbers = #tpu.dot_dimension_numbers<[1], [0], [0], [1], [0, 0, 1, 1], [], []>} : vector<16x32xf32>, vector<32x32xf32>, vector<16x32xf32> -> vector<16x32xf32>
    %c1_115 = arith.constant 1 : index
    %c2_116 = arith.constant 2 : index
    %c0_117 = arith.constant 0 : index
    %c0_118 = arith.constant 0 : index
    %170 = vector.load %arg7[%c1_115, %c2_116, %c0_117, %c0_118] : memref<2x3x1x32xf32, #tpu.memory_space<vmem>>, vector<1x1x1x32xf32>
    %171 = vector.shape_cast %170 : vector<1x1x1x32xf32> to vector<1x32xf32>
    %172 = vector.broadcast %171 : vector<1x32xf32> to vector<16x32xf32>
    %173 = arith.addf %169, %172 : vector<16x32xf32>
    %174 = vector.shape_cast %159 : vector<16x32xf32> to vector<4x4x32xf32>
    %175 = vector.shape_cast %166 : vector<16x32xf32> to vector<4x4x32xf32>
    %176 = vector.shape_cast %173 : vector<16x32xf32> to vector<4x4x32xf32>
    %cst_119 = arith.constant dense<0.000000e+00> : vector<4x4x4xf32>
    %177 = tpu.matmul %174, %175, %cst_119 {dimension_numbers = #tpu.dot_dimension_numbers<[2], [2], [1], [1], [0, 0, 0, 1, 1, 1], [0], [0]>} : vector<4x4x32xf32>, vector<4x4x32xf32>, vector<4x4x4xf32> -> vector<4x4x4xf32>
    %cst_120 = arith.constant dense<0xFF800000> : vector<4x4xf32>
    %178 = vector.multi_reduction <maximumf>, %177, %cst_120 [2] : vector<4x4x4xf32> to vector<4x4xf32>
    %179 = vector.shape_cast %178 : vector<4x4xf32> to vector<4x4x1xf32>
    %180 = vector.broadcast %179 : vector<4x4x1xf32> to vector<4x4x4xf32>
    %181 = arith.subf %177, %180 : vector<4x4x4xf32>
    %182 = math.exp %181 : vector<4x4x4xf32>
    %cst_121 = arith.constant dense<0.000000e+00> : vector<4x4xf32>
    %183 = vector.multi_reduction <add>, %182, %cst_121 [2] : vector<4x4x4xf32> to vector<4x4xf32>
    %184 = vector.shape_cast %183 : vector<4x4xf32> to vector<4x4x1xf32>
    %185 = tpu.reciprocal %184 {approx = true} : vector<4x4x1xf32> -> vector<4x4x1xf32>
    %186 = vector.broadcast %185 : vector<4x4x1xf32> to vector<4x4x4xf32>
    %187 = arith.mulf %182, %186 : vector<4x4x4xf32>
    %cst_122 = arith.constant dense<0.000000e+00> : vector<4x4x32xf32>
    %188 = tpu.matmul %187, %176, %cst_122 {dimension_numbers = #tpu.dot_dimension_numbers<[2], [1], [1], [2], [0, 0, 0, 1, 1, 2], [0], [0]>} : vector<4x4x4xf32>, vector<4x4x32xf32>, vector<4x4x32xf32> -> vector<4x4x32xf32>
    %189 = vector.shape_cast %188 : vector<4x4x32xf32> to vector<16x32xf32>
    %c1_123 = arith.constant 1 : index
    %c0_124 = arith.constant 0 : index
    %c0_125 = arith.constant 0 : index
    %190 = vector.load %arg8[%c1_123, %c0_124, %c0_125] : memref<2x32x32xf32, #tpu.memory_space<vmem>>, vector<1x32x32xf32>
    %191 = vector.shape_cast %190 : vector<1x32x32xf32> to vector<32x32xf32>
    %cst_126 = arith.constant dense<0.000000e+00> : vector<16x32xf32>
    %192 = tpu.matmul %189, %191, %cst_126 {dimension_numbers = #tpu.dot_dimension_numbers<[1], [0], [0], [1], [0, 0, 1, 1], [], []>} : vector<16x32xf32>, vector<32x32xf32>, vector<16x32xf32> -> vector<16x32xf32>
    %193 = arith.addf %126, %192 : vector<16x32xf32>
    %c1_127 = arith.constant 1 : index
    %c0_128 = arith.constant 0 : index
    %c0_129 = arith.constant 0 : index
    %194 = vector.load %arg9[%c1_127, %c0_128, %c0_129] : memref<2x1x32xf32, #tpu.memory_space<vmem>>, vector<1x1x32xf32>
    %195 = vector.shape_cast %194 : vector<1x1x32xf32> to vector<1x32xf32>
    %196 = vector.broadcast %195 : vector<1x32xf32> to vector<16x32xf32>
    %197 = arith.addf %193, %196 : vector<16x32xf32>
    %c1_130 = arith.constant 1 : index
    %c0_131 = arith.constant 0 : index
    %c0_132 = arith.constant 0 : index
    %198 = vector.load %arg10[%c1_130, %c0_131, %c0_132] : memref<2x1x32xf32, #tpu.memory_space<vmem>>, vector<1x1x32xf32>
    %199 = vector.shape_cast %198 : vector<1x1x32xf32> to vector<1x32xf32>
    %c1_133 = arith.constant 1 : index
    %c0_134 = arith.constant 0 : index
    %c0_135 = arith.constant 0 : index
    %200 = vector.load %arg11[%c1_133, %c0_134, %c0_135] : memref<2x1x32xf32, #tpu.memory_space<vmem>>, vector<1x1x32xf32>
    %201 = vector.shape_cast %200 : vector<1x1x32xf32> to vector<1x32xf32>
    %cst_136 = arith.constant dense<0.000000e+00> : vector<16xf32>
    %202 = vector.multi_reduction <add>, %197, %cst_136 [1] : vector<16x32xf32> to vector<16xf32>
    %203 = vector.shape_cast %202 : vector<16xf32> to vector<16x1xf32>
    %cst_137 = arith.constant 3.200000e+01 : f32
    %204 = vector.broadcast %cst_137 : f32 to vector<16x1xf32>
    %205 = arith.divf %203, %204 : vector<16x1xf32>
    %206 = vector.broadcast %205 : vector<16x1xf32> to vector<16x32xf32>
    %207 = arith.subf %197, %206 : vector<16x32xf32>
    %208 = arith.mulf %207, %207 : vector<16x32xf32>
    %cst_138 = arith.constant dense<0.000000e+00> : vector<16xf32>
    %209 = vector.multi_reduction <add>, %208, %cst_138 [1] : vector<16x32xf32> to vector<16xf32>
    %210 = vector.shape_cast %209 : vector<16xf32> to vector<16x1xf32>
    %cst_139 = arith.constant 3.200000e+01 : f32
    %211 = vector.broadcast %cst_139 : f32 to vector<16x1xf32>
    %212 = arith.divf %210, %211 : vector<16x1xf32>
    %213 = vector.broadcast %205 : vector<16x1xf32> to vector<16x32xf32>
    %214 = arith.subf %197, %213 : vector<16x32xf32>
    %cst_140 = arith.constant 9.99999974E-6 : f32
    %215 = vector.broadcast %cst_140 : f32 to vector<16x1xf32>
    %216 = arith.addf %212, %215 : vector<16x1xf32>
    %217 = math.rsqrt %216 : vector<16x1xf32>
    %218 = vector.broadcast %217 : vector<16x1xf32> to vector<16x32xf32>
    %219 = arith.mulf %214, %218 : vector<16x32xf32>
    %220 = vector.broadcast %199 : vector<1x32xf32> to vector<16x32xf32>
    %221 = arith.mulf %219, %220 : vector<16x32xf32>
    %222 = vector.broadcast %201 : vector<1x32xf32> to vector<16x32xf32>
    %223 = arith.addf %221, %222 : vector<16x32xf32>
    %c1_141 = arith.constant 1 : index
    %c0_142 = arith.constant 0 : index
    %c0_143 = arith.constant 0 : index
    %224 = vector.load %arg12[%c1_141, %c0_142, %c0_143] : memref<2x32x32xf32, #tpu.memory_space<vmem>>, vector<1x32x32xf32>
    %225 = vector.shape_cast %224 : vector<1x32x32xf32> to vector<32x32xf32>
    %cst_144 = arith.constant dense<0.000000e+00> : vector<16x32xf32>
    %226 = tpu.matmul %223, %225, %cst_144 {dimension_numbers = #tpu.dot_dimension_numbers<[1], [0], [0], [1], [0, 0, 1, 1], [], []>} : vector<16x32xf32>, vector<32x32xf32>, vector<16x32xf32> -> vector<16x32xf32>
    %c1_145 = arith.constant 1 : index
    %c0_146 = arith.constant 0 : index
    %c0_147 = arith.constant 0 : index
    %227 = vector.load %arg13[%c1_145, %c0_146, %c0_147] : memref<2x1x32xf32, #tpu.memory_space<vmem>>, vector<1x1x32xf32>
    %228 = vector.shape_cast %227 : vector<1x1x32xf32> to vector<1x32xf32>
    %229 = vector.broadcast %228 : vector<1x32xf32> to vector<16x32xf32>
    %230 = arith.addf %226, %229 : vector<16x32xf32>
    %cst_148 = arith.constant 0.000000e+00 : f32
    %231 = vector.broadcast %cst_148 : f32 to vector<16x32xf32>
    %232 = arith.maximumf %230, %231 : vector<16x32xf32>
    %c1_149 = arith.constant 1 : index
    %c0_150 = arith.constant 0 : index
    %c0_151 = arith.constant 0 : index
    %233 = vector.load %arg14[%c1_149, %c0_150, %c0_151] : memref<2x32x32xf32, #tpu.memory_space<vmem>>, vector<1x32x32xf32>
    %234 = vector.shape_cast %233 : vector<1x32x32xf32> to vector<32x32xf32>
    %cst_152 = arith.constant dense<0.000000e+00> : vector<16x32xf32>
    %235 = tpu.matmul %232, %234, %cst_152 {dimension_numbers = #tpu.dot_dimension_numbers<[1], [0], [0], [1], [0, 0, 1, 1], [], []>} : vector<16x32xf32>, vector<32x32xf32>, vector<16x32xf32> -> vector<16x32xf32>
    %236 = arith.addf %197, %235 : vector<16x32xf32>
    %c1_153 = arith.constant 1 : index
    %c0_154 = arith.constant 0 : index
    %c0_155 = arith.constant 0 : index
    %237 = vector.load %arg15[%c1_153, %c0_154, %c0_155] : memref<2x1x32xf32, #tpu.memory_space<vmem>>, vector<1x1x32xf32>
    %238 = vector.shape_cast %237 : vector<1x1x32xf32> to vector<1x32xf32>
    %239 = vector.broadcast %238 : vector<1x32xf32> to vector<16x32xf32>
    %240 = arith.addf %236, %239 : vector<16x32xf32>
    %241 = vector.shape_cast %240 : vector<16x32xf32> to vector<2x8x32xf32>
    %cst_156 = arith.constant dense<0.000000e+00> : vector<2x8xf32>
    %242 = vector.multi_reduction <add>, %241, %cst_156 [2] : vector<2x8x32xf32> to vector<2x8xf32>
    %cst_157 = arith.constant 3.200000e+01 : f32
    %243 = vector.broadcast %cst_157 : f32 to vector<2x8xf32>
    %244 = arith.divf %242, %243 : vector<2x8xf32>
    %c0_158 = arith.constant 0 : index
    %c0_159 = arith.constant 0 : index
    %245 = vector.load %arg16[%c0_158, %c0_159] : memref<8x4xf32, #tpu.memory_space<vmem>>, vector<8x4xf32>
    %cst_160 = arith.constant dense<0.000000e+00> : vector<2x4xf32>
    %246 = tpu.matmul %244, %245, %cst_160 {dimension_numbers = #tpu.dot_dimension_numbers<[1], [0], [0], [1], [0, 0, 1, 1], [], []>} : vector<2x8xf32>, vector<8x4xf32>, vector<2x4xf32> -> vector<2x4xf32>
    %c0_161 = arith.constant 0 : index
    %c0_162 = arith.constant 0 : index
    %247 = vector.load %arg17[%c0_161, %c0_162] : memref<1x4xf32, #tpu.memory_space<vmem>>, vector<1x4xf32>
    %248 = vector.broadcast %247 : vector<1x4xf32> to vector<2x4xf32>
    %249 = arith.addf %246, %248 : vector<2x4xf32>
    %c0_163 = arith.constant 0 : index
    %c0_164 = arith.constant 0 : index
    %250 = vector.load %arg18[%c0_163, %c0_164] : memref<2x4xf32, #tpu.memory_space<vmem>>, vector<2x4xf32>
    tpu.vector_store %arg18[%c0_163, %c0_164], %249 {strides = array<i32>} : memref<2x4xf32, #tpu.memory_space<vmem>>, vector<2x4xf32>,
    return
  }
}

</mosaic_0001>

<llo_original>
// kernel: tpu_custom_call.1
$region0: #{tpu_custom_call.1}
  #allocation0 [shape = 'u32[]', space=smem, size = 0x4, offset = 0x4, fixed_abs, tag = 'smem constant byte address 0x4 - core index']
  #allocation1 [shape = 'u32[144,128]{1,0:T(1,128)}', space=vmem, size = 0x12000, scoped, tag = 'internal scratch']
  %s0 = inlined_call_operand.hbm [shape: f32[2,8,8], index: 0, kind: input, shape index: {}]
  %s1 = inlined_call_operand.hbm [shape: f32[8,32], index: 1, kind: input, shape index: {}]
  %s2 = inlined_call_operand.hbm [shape: f32[8,32], index: 2, kind: input, shape index: {}]
  %s3 = inlined_call_operand.hbm [shape: f32[1,32], index: 3, kind: input, shape index: {}]
  %s4 = inlined_call_operand.hbm [shape: f32[2,1,32], index: 4, kind: input, shape index: {}]
  %s5 = inlined_call_operand.hbm [shape: f32[2,1,32], index: 5, kind: input, shape index: {}]
  %s6 = inlined_call_operand.hbm [shape: f32[2,3,32,32], index: 6, kind: input, shape index: {}]
  %s7 = inlined_call_operand.hbm [shape: f32[2,3,1,32], index: 7, kind: input, shape index: {}]
  %s8 = inlined_call_operand.hbm [shape: f32[2,32,32], index: 8, kind: input, shape index: {}]
  %s9 = inlined_call_operand.hbm [shape: f32[2,1,32], index: 9, kind: input, shape index: {}]
  %s10 = inlined_call_operand.hbm [shape: f32[2,1,32], index: 10, kind: input, shape index: {}]
  %s11 = inlined_call_operand.hbm [shape: f32[2,1,32], index: 11, kind: input, shape index: {}]
  %s12 = inlined_call_operand.hbm [shape: f32[2,32,32], index: 12, kind: input, shape index: {}]
  %s13 = inlined_call_operand.hbm [shape: f32[2,1,32], index: 13, kind: input, shape index: {}]
  %s14 = inlined_call_operand.vmem [shape: f32[2,32,32], index: 14, kind: input, shape index: {}]
  %s15 = inlined_call_operand.hbm [shape: f32[2,1,32], index: 15, kind: input, shape index: {}]
  %s16 = inlined_call_operand.vmem [shape: f32[8,4], index: 16, kind: input, shape index: {}]
  %s17 = inlined_call_operand.vmem [shape: f32[1,4], index: 17, kind: input, shape index: {}]
  %s18 = inlined_call_operand.hbm [shape: f32[2,4], index: 18, kind: output, shape index: {}]
  %s19 = sld [smem:[#allocation0]]
  $region142: #{tpu_custom_call.1} parent=0
    _
  %s21 = ssub.s32 1, %s19
  %s22 = scalar_select 0, %s21, %s19
  $region1: #{tpu_custom_call.1} parent=0
    #allocation2 [shape = 'u8[8192]{0}', space=vmem, size = 0x2000, scoped, tag = 'input window, operand 0, single buffered']
    #allocation3 [shape = 's32[1]{0}', space=sflag, size = 0x4, scoped, tag = 'scoped memory for tpu_custom_call.1']
    #allocation4 [shape = 's32[1]{0}', space=sflag, size = 0x4, scoped, tag = 'scoped memory for tpu_custom_call.1']
    #allocation5 [shape = 'u8[4096]{0}', space=vmem, size = 0x1000, scoped, tag = 'input window, operand 1, single buffered']
    #allocation6 [shape = 's32[1]{0}', space=sflag, size = 0x4, scoped, tag = 'scoped memory for tpu_custom_call.1']
    #allocation7 [shape = 'u8[4096]{0}', space=vmem, size = 0x1000, scoped, tag = 'input window, operand 2, single buffered']
    #allocation8 [shape = 'u8[512]{0}', space=vmem, size = 0x400, scoped, tag = 'input window, operand 3, single buffered']
    #allocation9 [shape = 's32[1]{0}', space=sflag, size = 0x4, scoped, tag = 'scoped memory for tpu_custom_call.1']
    #allocation10 [shape = 'u8[1024]{0}', space=vmem, size = 0x400, scoped, tag = 'input window, operand 4, single buffered']
    #allocation11 [shape = 'u8[1024]{0}', space=vmem, size = 0x400, scoped, tag = 'input window, operand 5, single buffered']
    #allocation12 [shape = 's32[1]{0}', space=sflag, size = 0x4, scoped, tag = 'scoped memory for tpu_custom_call.1']
    #allocation13 [shape = 'u8[98304]{0}', space=vmem, size = 0x18000, scoped, tag = 'input window, operand 6, single buffered']
    #allocation14 [shape = 'u8[3072]{0}', space=vmem, size = 0xc00, scoped, tag = 'input window, operand 7, single buffered']
    #allocation15 [shape = 's32[1]{0}', space=sflag, size = 0x4, scoped, tag = 'scoped memory for tpu_custom_call.1']
    #allocation16 [shape = 'u8[32768]{0}', space=vmem, size = 0x8000, scoped, tag = 'input window, operand 8, single buffered']
    #allocation17 [shape = 'u8[1024]{0}', space=vmem, size = 0x400, scoped, tag = 'input window, operand 9, single buffered']
    #allocation18 [shape = 's32[1]{0}', space=sflag, size = 0x4, scoped, tag = 'scoped memory for tpu_custom_call.1']
    #allocation19 [shape = 'u8[1024]{0}', space=vmem, size = 0x400, scoped, tag = 'input window, operand 10, single buffered']
    #allocation20 [shape = 'u8[1024]{0}', space=vmem, size = 0x400, scoped, tag = 'input window, operand 11, single buffered']
    #allocation21 [shape = 's32[1]{0}', space=sflag, size = 0x4, scoped, tag = 'scoped memory for tpu_custom_call.1']
    #allocation22 [shape = 'u8[32768]{0}', space=vmem, size = 0x8000, scoped, tag = 'input window, operand 12, single buffered']
    #allocation23 [shape = 'u8[1024]{0}', space=vmem, size = 0x400, scoped, tag = 'input window, operand 13, single buffered']
    #allocation24 [shape = 's32[1]{0}', space=sflag, size = 0x4, scoped, tag = 'scoped memory for tpu_custom_call.1']
    #allocation25 [shape = 'u8[1024]{0}', space=vmem, size = 0x400, scoped, tag = 'input window, operand 15, single buffered']
    #allocation26 [shape = 'u8[1024]{0}', space=vmem, size = 0x400, scoped, tag = 'output window, operand 0, single buffered']
    %23 = vsyncpa [#allocation3], 0
    %24 = vsyncpa [#allocation6], 0
    %25 = vsyncpa [#allocation9], 0
    %26 = vsyncpa [#allocation12], 0
    %27 = vsyncpa [#allocation15], 0
    %28 = vsyncpa [#allocation18], 0
    %29 = vsyncpa [#allocation21], 0
    %30 = vsyncpa [#allocation24], 0
    %31 = vsyncpa [#allocation4], 0
    // Predicated region
    $region2: #{tpu_custom_call.1} parent=1 // pred_check
      _
    $region3: #{tpu_custom_call.1} parent=1 // pred_check_branch
      %33 = sbr.rel (0) target = $region5
    $region4: #{tpu_custom_call.1} parent=1 // pred_region
      %s35 = ssub.s32 256, 256
      %36 = vsyncadd [#allocation3], %s35
      %s37 = sshll.u32 [#allocation2], 4
      %s38 = int_to_ptr.vmem [resolvable:$true] %s37
      %43 = dma.hbm_to_vmem [thread:$0]  %s0, 256, %s38, [#allocation3], 128, 128, 8
    $region5: #{tpu_custom_call.1} parent=1 // pred_fallthru
      _
    // Predicated region
    $region6: #{tpu_custom_call.1} parent=1 // pred_check
      _
    $region7: #{tpu_custom_call.1} parent=1 // pred_check_branch
      %45 = sbr.rel (0) target = $region9
    $region8: #{tpu_custom_call.1} parent=1 // pred_region
      %s47 = ssub.s32 128, 128
      %48 = vsyncadd [#allocation6], %s47
      %s50 = sshll.u32 [#allocation5], 4
      %s51 = int_to_ptr.vmem [resolvable:$true] %s50
      %53 = dma.hbm_to_vmem [thread:$0]  %s1, 128, %s51, [#allocation6]
    $region9: #{tpu_custom_call.1} parent=1 // pred_fallthru
      _
    // Predicated region
    $region10: #{tpu_custom_call.1} parent=1 // pred_check
      _
    $region11: #{tpu_custom_call.1} parent=1 // pred_check_branch
      %55 = sbr.rel (0) target = $region13
    $region12: #{tpu_custom_call.1} parent=1 // pred_region
      %s57 = ssub.s32 128, 128
      %58 = vsyncadd [#allocation6], %s57
      %s60 = sshll.u32 [#allocation7], 4
      %s61 = int_to_ptr.vmem [resolvable:$true] %s60
      %63 = dma.hbm_to_vmem [thread:$0]  %s2, 128, %s61, [#allocation6]
    $region13: #{tpu_custom_call.1} parent=1 // pred_fallthru
      _
    // Predicated region
    $region14: #{tpu_custom_call.1} parent=1 // pred_check
      _
    $region15: #{tpu_custom_call.1} parent=1 // pred_check_branch
      %65 = sbr.rel (0) target = $region17
    $region16: #{tpu_custom_call.1} parent=1 // pred_region
      %s67 = ssub.s32 16, 16
      %68 = vsyncadd [#allocation9], %s67
      %s70 = sshll.u32 [#allocation8], 4
      %s71 = int_to_ptr.vmem [resolvable:$true] %s70
      %73 = dma.hbm_to_vmem [thread:$0]  %s3, 16, %s71, [#allocation9]
    $region17: #{tpu_custom_call.1} parent=1 // pred_fallthru
      _
    // Predicated region
    $region18: #{tpu_custom_call.1} parent=1 // pred_check
      _
    $region19: #{tpu_custom_call.1} parent=1 // pred_check_branch
      %75 = sbr.rel (0) target = $region21
    $region20: #{tpu_custom_call.1} parent=1 // pred_region
      %s77 = ssub.s32 32, 32
      %78 = vsyncadd [#allocation9], %s77
      %s79 = sshll.u32 [#allocation10], 4
      %s80 = int_to_ptr.vmem [resolvable:$true] %s79
      %85 = dma.hbm_to_vmem [thread:$0]  %s4, 32, %s80, [#allocation9], 16, 16, 1
    $region21: #{tpu_custom_call.1} parent=1 // pred_fallthru
      _
    // Predicated region
    $region22: #{tpu_custom_call.1} parent=1 // pred_check
      _
    $region23: #{tpu_custom_call.1} parent=1 // pred_check_branch
      %87 = sbr.rel (0) target = $region25
    $region24: #{tpu_custom_call.1} parent=1 // pred_region
      %s89 = ssub.s32 32, 32
      %90 = vsyncadd [#allocation12], %s89
      %s91 = sshll.u32 [#allocation11], 4
      %s92 = int_to_ptr.vmem [resolvable:$true] %s91
      %97 = dma.hbm_to_vmem [thread:$0]  %s5, 32, %s92, [#allocation12], 16, 16, 1
    $region25: #{tpu_custom_call.1} parent=1 // pred_fallthru
      _
    // Predicated region
    $region26: #{tpu_custom_call.1} parent=1 // pred_check
      _
    $region27: #{tpu_custom_call.1} parent=1 // pred_check_branch
      %99 = sbr.rel (0) target = $region29
    $region28: #{tpu_custom_call.1} parent=1 // pred_region
      %s101 = ssub.s32 3072, 3072
      %102 = vsyncadd [#allocation12], %s101
      %s103 = sshll.u32 [#allocation13], 4
      %s104 = int_to_ptr.vmem [resolvable:$true] %s103
      %109 = dma.hbm_to_vmem [thread:$0]  %s6, 3072, %s104, [#allocation12], 128, 128, 8
    $region29: #{tpu_custom_call.1} parent=1 // pred_fallthru
      _
    // Predicated region
    $region30: #{tpu_custom_call.1} parent=1 // pred_check
      _
    $region31: #{tpu_custom_call.1} parent=1 // pred_check_branch
      %111 = sbr.rel (0) target = $region33
    $region32: #{tpu_custom_call.1} parent=1 // pred_region
      %s113 = ssub.s32 96, 96
      %114 = vsyncadd [#allocation15], %s113
      %s115 = sshll.u32 [#allocation14], 4
      %s116 = int_to_ptr.vmem [resolvable:$true] %s115
      %121 = dma.hbm_to_vmem [thread:$0]  %s7, 96, %s116, [#allocation15], 16, 16, 1
    $region33: #{tpu_custom_call.1} parent=1 // pred_fallthru
      _
    // Predicated region
    $region34: #{tpu_custom_call.1} parent=1 // pred_check
      _
    $region35: #{tpu_custom_call.1} parent=1 // pred_check_branch
      %123 = sbr.rel (0) target = $region37
    $region36: #{tpu_custom_call.1} parent=1 // pred_region
      %s125 = ssub.s32 1024, 1024
      %126 = vsyncadd [#allocation15], %s125
      %s127 = sshll.u32 [#allocation16], 4
      %s128 = int_to_ptr.vmem [resolvable:$true] %s127
      %133 = dma.hbm_to_vmem [thread:$0]  %s8, 1024, %s128, [#allocation15], 128, 128, 8
    $region37: #{tpu_custom_call.1} parent=1 // pred_fallthru
      _
    // Predicated region
    $region38: #{tpu_custom_call.1} parent=1 // pred_check
      _
    $region39: #{tpu_custom_call.1} parent=1 // pred_check_branch
      %135 = sbr.rel (0) target = $region41
    $region40: #{tpu_custom_call.1} parent=1 // pred_region
      %s137 = ssub.s32 32, 32
      %138 = vsyncadd [#allocation18], %s137
      %s139 = sshll.u32 [#allocation17], 4
      %s140 = int_to_ptr.vmem [resolvable:$true] %s139
      %145 = dma.hbm_to_vmem [thread:$0]  %s9, 32, %s140, [#allocation18], 16, 16, 1
    $region41: #{tpu_custom_call.1} parent=1 // pred_fallthru
      _
    // Predicated region
    $region42: #{tpu_custom_call.1} parent=1 // pred_check
      _
    $region43: #{tpu_custom_call.1} parent=1 // pred_check_branch
      %147 = sbr.rel (0) target = $region45
    $region44: #{tpu_custom_call.1} parent=1 // pred_region
      %s149 = ssub.s32 32, 32
      %150 = vsyncadd [#allocation18], %s149
      %s151 = sshll.u32 [#allocation19], 4
      %s152 = int_to_ptr.vmem [resolvable:$true] %s151
      %157 = dma.hbm_to_vmem [thread:$0]  %s10, 32, %s152, [#allocation18], 16, 16, 1
    $region45: #{tpu_custom_call.1} parent=1 // pred_fallthru
      _
    // Predicated region
    $region46: #{tpu_custom_call.1} parent=1 // pred_check
      _
    $region47: #{tpu_custom_call.1} parent=1 // pred_check_branch
      %159 = sbr.rel (0) target = $region49
    $region48: #{tpu_custom_call.1} parent=1 // pred_region
      %s161 = ssub.s32 32, 32
      %162 = vsyncadd [#allocation21], %s161
      %s163 = sshll.u32 [#allocation20], 4
      %s164 = int_to_ptr.vmem [resolvable:$true] %s163
      %169 = dma.hbm_to_vmem [thread:$0]  %s11, 32, %s164, [#allocation21], 16, 16, 1
    $region49: #{tpu_custom_call.1} parent=1 // pred_fallthru
      _
    // Predicated region
    $region50: #{tpu_custom_call.1} parent=1 // pred_check
      _
    $region51: #{tpu_custom_call.1} parent=1 // pred_check_branch
      %171 = sbr.rel (0) target = $region53
    $region52: #{tpu_custom_call.1} parent=1 // pred_region
      %s173 = ssub.s32 1024, 1024
      %174 = vsyncadd [#allocation21], %s173
      %s175 = sshll.u32 [#allocation22], 4
      %s176 = int_to_ptr.vmem [resolvable:$true] %s175
      %181 = dma.hbm_to_vmem [thread:$0]  %s12, 1024, %s176, [#allocation21], 128, 128, 8
    $region53: #{tpu_custom_call.1} parent=1 // pred_fallthru
      _
    // Predicated region
    $region54: #{tpu_custom_call.1} parent=1 // pred_check
      _
    $region55: #{tpu_custom_call.1} parent=1 // pred_check_branch
      %183 = sbr.rel (0) target = $region57
    $region56: #{tpu_custom_call.1} parent=1 // pred_region
      %s185 = ssub.s32 32, 32
      %186 = vsyncadd [#allocation24], %s185
      %s187 = sshll.u32 [#allocation23], 4
      %s188 = int_to_ptr.vmem [resolvable:$true] %s187
      %193 = dma.hbm_to_vmem [thread:$0]  %s13, 32, %s188, [#allocation24], 16, 16, 1
    $region57: #{tpu_custom_call.1} parent=1 // pred_fallthru
      _
    // Predicated region
    $region58: #{tpu_custom_call.1} parent=1 // pred_check
      _
    $region59: #{tpu_custom_call.1} parent=1 // pred_check_branch
      %195 = sbr.rel (0) target = $region61
    $region60: #{tpu_custom_call.1} parent=1 // pred_region
      _
    $region61: #{tpu_custom_call.1} parent=1 // pred_fallthru
      _
    // Predicated region
    $region62: #{tpu_custom_call.1} parent=1 // pred_check
      _
    $region63: #{tpu_custom_call.1} parent=1 // pred_check_branch
      %197 = sbr.rel (0) target = $region65
    $region64: #{tpu_custom_call.1} parent=1 // pred_region
      %s199 = ssub.s32 32, 32
      %200 = vsyncadd [#allocation24], %s199
      %s201 = sshll.u32 [#allocation25], 4
      %s202 = int_to_ptr.vmem [resolvable:$true] %s201
      %207 = dma.hbm_to_vmem [thread:$0]  %s15, 32, %s202, [#allocation24], 16, 16, 1
    $region65: #{tpu_custom_call.1} parent=1 // pred_fallthru
      _
    // Predicated region
    $region66: #{tpu_custom_call.1} parent=1 // pred_check
      _
    $region67: #{tpu_custom_call.1} parent=1 // pred_check_branch
      %209 = sbr.rel (0) target = $region69
    $region68: #{tpu_custom_call.1} parent=1 // pred_region
      _
    $region69: #{tpu_custom_call.1} parent=1 // pred_fallthru
      _
    // Predicated region
    $region70: #{tpu_custom_call.1} parent=1 // pred_check
      _
    $region71: #{tpu_custom_call.1} parent=1 // pred_check_branch
      %211 = sbr.rel (0) target = $region73
    $region72: #{tpu_custom_call.1} parent=1 // pred_region
      _
    $region73: #{tpu_custom_call.1} parent=1 // pred_fallthru
      _
    // Predicated region
    $region74: #{tpu_custom_call.1} parent=1 // pred_check
      _
    $region75: #{tpu_custom_call.1} parent=1 // pred_check_branch
      %213 = sbr.rel (0) target = $region77
    $region76: #{tpu_custom_call.1} parent=1 // pred_region
      %214 = dma.done [#allocation3], 256
    $region77: #{tpu_custom_call.1} parent=1 // pred_fallthru
      _
    // Predicated region
    $region78: #{tpu_custom_call.1} parent=1 // pred_check
      _
    $region79: #{tpu_custom_call.1} parent=1 // pred_check_branch
      %216 = sbr.rel (0) target = $region81
    $region80: #{tpu_custom_call.1} parent=1 // pred_region
      %217 = dma.done [#allocation6], 128
    $region81: #{tpu_custom_call.1} parent=1 // pred_fallthru
      _
    // Predicated region
    $region82: #{tpu_custom_call.1} parent=1 // pred_check
      _
    $region83: #{tpu_custom_call.1} parent=1 // pred_check_branch
      %219 = sbr.rel (0) target = $region85
    $region84: #{tpu_custom_call.1} parent=1 // pred_region
      %220 = dma.done [#allocation6], 128
    $region85: #{tpu_custom_call.1} parent=1 // pred_fallthru
      _
    // Predicated region
    $region86: #{tpu_custom_call.1} parent=1 // pred_check
      _
    $region87: #{tpu_custom_call.1} parent=1 // pred_check_branch
      %222 = sbr.rel (0) target = $region89
    $region88: #{tpu_custom_call.1} parent=1 // pred_region
      %223 = dma.done [#allocation9], 16
    $region89: #{tpu_custom_call.1} parent=1 // pred_fallthru
      _
    // Predicated region
    $region90: #{tpu_custom_call.1} parent=1 // pred_check
      _
    $region91: #{tpu_custom_call.1} parent=1 // pred_check_branch
      %225 = sbr.rel (0) target = $region93
    $region92: #{tpu_custom_call.1} parent=1 // pred_region
      %226 = dma.done [#allocation9], 32
    $region93: #{tpu_custom_call.1} parent=1 // pred_fallthru
      _
    // Predicated region
    $region94: #{tpu_custom_call.1} parent=1 // pred_check
      _
    $region95: #{tpu_custom_call.1} parent=1 // pred_check_branch
      %228 = sbr.rel (0) target = $region97
    $region96: #{tpu_custom_call.1} parent=1 // pred_region
      %229 = dma.done [#allocation12], 32
    $region97: #{tpu_custom_call.1} parent=1 // pred_fallthru
      _
    // Predicated region
    $region98: #{tpu_custom_call.1} parent=1 // pred_check
      _
    $region99: #{tpu_custom_call.1} parent=1 // pred_check_branch
      %231 = sbr.rel (0) target = $region101
    $region100: #{tpu_custom_call.1} parent=1 // pred_region
      %232 = dma.done [#allocation12], 3072
    $region101: #{tpu_custom_call.1} parent=1 // pred_fallthru
      _
    // Predicated region
    $region102: #{tpu_custom_call.1} parent=1 // pred_check
      _
    $region103: #{tpu_custom_call.1} parent=1 // pred_check_branch
      %234 = sbr.rel (0) target = $region105
    $region104: #{tpu_custom_call.1} parent=1 // pred_region
      %235 = dma.done [#allocation15], 96
    $region105: #{tpu_custom_call.1} parent=1 // pred_fallthru
      _
    // Predicated region
    $region106: #{tpu_custom_call.1} parent=1 // pred_check
      _
    $region107: #{tpu_custom_call.1} parent=1 // pred_check_branch
      %237 = sbr.rel (0) target = $region109
    $region108: #{tpu_custom_call.1} parent=1 // pred_region
      %238 = dma.done [#allocation15], 1024
    $region109: #{tpu_custom_call.1} parent=1 // pred_fallthru
      _
    // Predicated region
    $region110: #{tpu_custom_call.1} parent=1 // pred_check
      _
    $region111: #{tpu_custom_call.1} parent=1 // pred_check_branch
      %240 = sbr.rel (0) target = $region113
    $region112: #{tpu_custom_call.1} parent=1 // pred_region
      %241 = dma.done [#allocation18], 32
    $region113: #{tpu_custom_call.1} parent=1 // pred_fallthru
      _
    // Predicated region
    $region114: #{tpu_custom_call.1} parent=1 // pred_check
      _
    $region115: #{tpu_custom_call.1} parent=1 // pred_check_branch
      %243 = sbr.rel (0) target = $region117
    $region116: #{tpu_custom_call.1} parent=1 // pred_region
      %244 = dma.done [#allocation18], 32
    $region117: #{tpu_custom_call.1} parent=1 // pred_fallthru
      _
    // Predicated region
    $region118: #{tpu_custom_call.1} parent=1 // pred_check
      _
    $region119: #{tpu_custom_call.1} parent=1 // pred_check_branch
      %246 = sbr.rel (0) target = $region121
    $region120: #{tpu_custom_call.1} parent=1 // pred_region
      %247 = dma.done [#allocation21], 32
    $region121: #{tpu_custom_call.1} parent=1 // pred_fallthru
      _
    // Predicated region
    $region122: #{tpu_custom_call.1} parent=1 // pred_check
      _
    $region123: #{tpu_custom_call.1} parent=1 // pred_check_branch
      %249 = sbr.rel (0) target = $region125
    $region124: #{tpu_custom_call.1} parent=1 // pred_region
      %250 = dma.done [#allocation21], 1024
    $region125: #{tpu_custom_call.1} parent=1 // pred_fallthru
      _
    // Predicated region
    $region126: #{tpu_custom_call.1} parent=1 // pred_check
      _
    $region127: #{tpu_custom_call.1} parent=1 // pred_check_branch
      %252 = sbr.rel (0) target = $region129
    $region128: #{tpu_custom_call.1} parent=1 // pred_region
      %253 = dma.done [#allocation24], 32
    $region129: #{tpu_custom_call.1} parent=1 // pred_fallthru
      _
    // Predicated region
    $region130: #{tpu_custom_call.1} parent=1 // pred_check
      _
    $region131: #{tpu_custom_call.1} parent=1 // pred_check_branch
      %255 = sbr.rel (0) target = $region133
    $region132: #{tpu_custom_call.1} parent=1 // pred_region
      %256 = dma.done [#allocation24], 32
    $region133: #{tpu_custom_call.1} parent=1 // pred_fallthru
      _
    %v257 = vld [vmem:[#allocation2] sm:$0xff]
    %v258 = vld [vmem:[#allocation2 + $0x8] sm:$0xff]
    %v259 = vld [vmem:[#allocation7] sm:$0xff]
    %v260 = vld [vmem:[#allocation8] sm:$0x1]
    %v262 = vlaneseq
    %v263 = vshrl.u32 %v262, 7
    %v264 = vsub.s32 0, %v263
    %v265 = vrot.slane %v260, %v264
    %vm267 = vcmask 64512
    %v269 = vsel %vm267, %v257, 0
    %v272 = vsel %vm267, %v258, 0
    %274 = vmatprep.subr.mxu0 0.0
    %275 = vmatpush1.msra.mxu0 %v259
    %276 = vmatprep.subr.mxu0 0.0
    %277 = vmatpush1.msra.mxu0 0.0
    %278 = vmatprep.subr.mxu0 0.0
    %279 = vmatpush1.msra.mxu0 0.0
    %280 = vmatprep.subr.mxu0 0.0
    %281 = vmatpush1.msra.mxu0 0.0
    %282 = vmatprep.subr.mxu0 0.0
    %283 = vmatpush1.msra.mxu0 0.0
    %284 = vmatprep.subr.mxu0 0.0
    %285 = vmatpush1.msra.mxu0 0.0
    %286 = vmatprep.subr.mxu0 0.0
    %287 = vmatpush1.msra.mxu0 0.0
    %288 = vmatprep.subr.mxu0 0.0
    %289 = vmatpush1.msra.mxu0 0.0
    %290 = vmatprep.subr.mxu0 0.0
    %291 = vmatpush1.msra.mxu0 0.0
    %292 = vmatprep.subr.mxu0 0.0
    %293 = vmatpush1.msra.mxu0 0.0
    %294 = vmatprep.subr.mxu0 0.0
    %295 = vmatpush1.msra.mxu0 0.0
    %296 = vmatprep.subr.mxu0 0.0
    %297 = vmatpush1.msra.mxu0 0.0
    %298 = vmatprep.subr.mxu0 0.0
    %299 = vmatpush1.msra.mxu0 0.0
    %300 = vmatprep.subr.mxu0 0.0
    %301 = vmatpush1.msra.mxu0 0.0
    %302 = vmatprep.subr.mxu0 0.0
    %303 = vmatpush1.msra.mxu0 0.0
    %304 = vmatprep.subr.mxu0 0.0
    %305 = vmatpush1.msra.mxu0 0.0
    %306 = vmatprep.subr.mxu0 0.0
    %307 = vmatpush1.msra.mxu0 0.0
    %308 = vmatprep.subr.mxu0 0.0
    %309 = vmatpush1.msra.mxu0 0.0
    %310 = vmatprep.subr.mxu0 0.0
    %311 = vmatpush1.msra.mxu0 0.0
    %312 = vmatprep.subr.mxu0 0.0
    %313 = vmatpush1.msra.mxu0 0.0
    %314 = vmatprep.subr.mxu0 0.0
    %315 = vmatpush1.msra.mxu0 0.0
    %316 = vmatprep.subr.mxu0 0.0
    %317 = vmatpush1.msra.mxu0 0.0
    %318 = vmatprep.subr.mxu0 0.0
    %319 = vmatpush1.msra.mxu0 0.0
    %320 = vmatprep.subr.mxu0 0.0
    %321 = vmatpush1.msra.mxu0 0.0
    %322 = vmatprep.subr.mxu0 0.0
    %323 = vmatpush1.msra.mxu0 0.0
    %324 = vmatprep.subr.mxu0 0.0
    %325 = vmatpush1.msra.mxu0 0.0
    %326 = vmatprep.subr.mxu0 0.0
    %327 = vmatpush1.msra.mxu0 0.0
    %328 = vmatprep.subr.mxu0 0.0
    %329 = vmatpush1.msra.mxu0 0.0
    %330 = vmatprep.subr.mxu0 0.0
    %331 = vmatpush1.msra.mxu0 0.0
    %332 = vmatprep.subr.mxu0 0.0
    %333 = vmatpush1.msra.mxu0 0.0
    %334 = vmatprep.subr.mxu0 0.0
    %335 = vmatpush1.msra.mxu0 0.0
    %336 = vmatprep.subr.mxu0 0.0
    %337 = vmatpush1.msra.mxu0 0.0
    %338 = vmatprep.mubr.f32.mxu0 0.0
    %339 = vmatmul.mubr.f32.gmra.mrb[0].mxu0 %v269
    %v340 = vpop.f32.mrb[0].mxu0
    %v341 = vadd.f32 %v265, %v340
    %v342 = vpop.f32.mrb[0].mxu0
    %343 = vmatprep.mubr.f32.mxu0 0.0
    %344 = vmatmul.mubr.f32.gmra.mrb[0].mxu0 %v272
    %v345 = vpop.f32.mrb[0].mxu0
    %v346 = vadd.f32 %v265, %v345
    %v347 = vpop.f32.mrb[0].mxu0
    %348 = vdwg.mxu0
    %v349 = vld [vmem:[#allocation5] sm:$0xff]
    %v350 = vadd.f32 %v341, %v349
    %v351 = vadd.f32 %v346, %v349
    %v352 = vld [vmem:[#allocation10] sm:$0x1]
    %v353 = vld [vmem:[#allocation11] sm:$0x1]
    %vm354 = vcmask 261120
    %v355 = vsel %vm354, %v350, 0.0
    %356 = vadd.xlane.f32.xlu0 %v355
    %v357 = vpop.xlane.xlu0 %356
    %v358 = vsel %vm354, %v351, 0.0
    %359 = vadd.xlane.f32.xlu0 %v358
    %v360 = vpop.xlane.xlu0 %359
    %v361 = vrcp.pop 32.0
    %v362 = vmul.f32 %v357, %v361
    %v363 = vmul.f32 %v360, %v361
    %v364 = vsub.f32 %v350, %v362
    %v365 = vsub.f32 %v351, %v363
    %v366 = vmul.f32 %v364, %v364
    %v367 = vmul.f32 %v365, %v365
    %v368 = vsel %vm354, %v366, 0.0
    %369 = vadd.xlane.f32.xlu0 %v368
    %v370 = vpop.xlane.xlu0 %369
    %v371 = vsel %vm354, %v367, 0.0
    %372 = vadd.xlane.f32.xlu0 %v371
    %v373 = vpop.xlane.xlu0 %372
    %v374 = vmul.f32 %v370, %v361
    %v375 = vmul.f32 %v373, %v361
    %v376 = vadd.f32 %v374, 1e-05
    %v377 = vadd.f32 %v375, 1e-05
    %v378 = vrsqrt.pop %v376
    %v379 = vrsqrt.pop %v377
    %v380 = vmul.f32 %v364, %v378
    %v381 = vmul.f32 %v365, %v379
    %v383 = vlaneseq
    %v384 = vshrl.u32 %v383, 7
    %v385 = vsub.s32 0, %v384
    %v386 = vrot.slane %v352, %v385
    %v388 = vmul.f32 %v380, %v386
    %v389 = vmul.f32 %v381, %v386
    %v391 = vlaneseq
    %v392 = vshrl.u32 %v391, 7
    %v393 = vsub.s32 0, %v392
    %v394 = vrot.slane %v353, %v393
    %v396 = vadd.f32 %v388, %v394
    %v397 = vadd.f32 %v389, %v394
    %v398 = vld [vmem:[#allocation13] sm:$0xff]
    %v399 = vld [vmem:[#allocation13 + $0x8] sm:$0xff]
    %v400 = vld [vmem:[#allocation13 + $0x10] sm:$0xff]
    %v401 = vld [vmem:[#allocation13 + $0x18] sm:$0xff]
    %v402 = vld [vmem:[#allocation14] sm:$0x1]
    %v404 = vlaneseq
    %v405 = vshrl.u32 %v404, 7
    %v406 = vsub.s32 0, %v405
    %v407 = vrot.slane %v402, %v406
    %v410 = vsel %vm354, %v396, 0
    %v413 = vsel %vm354, %v397, 0
    %415 = vmatprep.subr.mxu0 0.0
    %416 = vmatpush1.msra.mxu0 %v398
    %417 = vmatprep.subr.mxu0 0.0
    %418 = vmatpush1.msra.mxu0 %v399
    %419 = vmatprep.subr.mxu0 0.0
    %420 = vmatpush1.msra.mxu0 %v400
    %421 = vmatprep.subr.mxu0 0.0
    %422 = vmatpush1.msra.mxu0 %v401
    %423 = vmatprep.subr.mxu0 0.0
    %424 = vmatpush1.msra.mxu0 0.0
    %425 = vmatprep.subr.mxu0 0.0
    %426 = vmatpush1.msra.mxu0 0.0
    %427 = vmatprep.subr.mxu0 0.0
    %428 = vmatpush1.msra.mxu0 0.0
    %429 = vmatprep.subr.mxu0 0.0
    %430 = vmatpush1.msra.mxu0 0.0
    %431 = vmatprep.subr.mxu0 0.0
    %432 = vmatpush1.msra.mxu0 0.0
    %433 = vmatprep.subr.mxu0 0.0
    %434 = vmatpush1.msra.mxu0 0.0
    %435 = vmatprep.subr.mxu0 0.0
    %436 = vmatpush1.msra.mxu0 0.0
    %437 = vmatprep.subr.mxu0 0.0
    %438 = vmatpush1.msra.mxu0 0.0
    %439 = vmatprep.subr.mxu0 0.0
    %440 = vmatpush1.msra.mxu0 0.0
    %441 = vmatprep.subr.mxu0 0.0
    %442 = vmatpush1.msra.mxu0 0.0
    %443 = vmatprep.subr.mxu0 0.0
    %444 = vmatpush1.msra.mxu0 0.0
    %445 = vmatprep.subr.mxu0 0.0
    %446 = vmatpush1.msra.mxu0 0.0
    %447 = vmatprep.subr.mxu0 0.0
    %448 = vmatpush1.msra.mxu0 0.0
    %449 = vmatprep.subr.mxu0 0.0
    %450 = vmatpush1.msra.mxu0 0.0
    %451 = vmatprep.subr.mxu0 0.0
    %452 = vmatpush1.msra.mxu0 0.0
    %453 = vmatprep.subr.mxu0 0.0
    %454 = vmatpush1.msra.mxu0 0.0
    %455 = vmatprep.subr.mxu0 0.0
    %456 = vmatpush1.msra.mxu0 0.0
    %457 = vmatprep.subr.mxu0 0.0
    %458 = vmatpush1.msra.mxu0 0.0
    %459 = vmatprep.subr.mxu0 0.0
    %460 = vmatpush1.msra.mxu0 0.0
    %461 = vmatprep.subr.mxu0 0.0
    %462 = vmatpush1.msra.mxu0 0.0
    %463 = vmatprep.subr.mxu0 0.0
    %464 = vmatpush1.msra.mxu0 0.0
    %465 = vmatprep.subr.mxu0 0.0
    %466 = vmatpush1.msra.mxu0 0.0
    %467 = vmatprep.subr.mxu0 0.0
    %468 = vmatpush1.msra.mxu0 0.0
    %469 = vmatprep.subr.mxu0 0.0
    %470 = vmatpush1.msra.mxu0 0.0
    %471 = vmatprep.subr.mxu0 0.0
    %472 = vmatpush1.msra.mxu0 0.0
    %473 = vmatprep.subr.mxu0 0.0
    %474 = vmatpush1.msra.mxu0 0.0
    %475 = vmatprep.subr.mxu0 0.0
    %476 = vmatpush1.msra.mxu0 0.0
    %477 = vmatprep.subr.mxu0 0.0
    %478 = vmatpush1.msra.mxu0 0.0
    %479 = vmatprep.mubr.f32.mxu0 0.0
    %480 = vmatmul.mubr.f32.gmra.mrb[0].mxu0 %v410
    %v481 = vpop.f32.mrb[0].mxu0
    %v482 = vadd.f32 %v407, %v481
    %v483 = vpop.f32.mrb[0].mxu0
    %484 = vmatprep.mubr.f32.mxu0 0.0
    %485 = vmatmul.mubr.f32.gmra.mrb[0].mxu0 %v413
    %v486 = vpop.f32.mrb[0].mxu0
    %v487 = vadd.f32 %v407, %v486
    %v488 = vpop.f32.mrb[0].mxu0
    %489 = vdwg.mxu0
    %s490 = scalar_lea.vmem [#allocation13], 32
    %v491 = vld [vmem:[%s490] sm:$0xff]
    %v492 = vld [vmem:[%s490 + $0x8] sm:$0xff]
    %v493 = vld [vmem:[%s490 + $0x10] sm:$0xff]
    %v494 = vld [vmem:[%s490 + $0x18] sm:$0xff]
    %s495 = scalar_lea.vmem [#allocation14], 1
    %v496 = vld [vmem:[%s495] sm:$0x1]
    %v498 = vlaneseq
    %v499 = vshrl.u32 %v498, 7
    %v500 = vsub.s32 0, %v499
    %v501 = vrot.slane %v496, %v500
    %503 = vmatprep.subr.mxu0 0.0
    %504 = vmatpush1.msra.mxu0 %v491
    %505 = vmatprep.subr.mxu0 0.0
    %506 = vmatpush1.msra.mxu0 %v492
    %507 = vmatprep.subr.mxu0 0.0
    %508 = vmatpush1.msra.mxu0 %v493
    %509 = vmatprep.subr.mxu0 0.0
    %510 = vmatpush1.msra.mxu0 %v494
    %511 = vmatprep.subr.mxu0 0.0
    %512 = vmatpush1.msra.mxu0 0.0
    %513 = vmatprep.subr.mxu0 0.0
    %514 = vmatpush1.msra.mxu0 0.0
    %515 = vmatprep.subr.mxu0 0.0
    %516 = vmatpush1.msra.mxu0 0.0
    %517 = vmatprep.subr.mxu0 0.0
    %518 = vmatpush1.msra.mxu0 0.0
    %519 = vmatprep.subr.mxu0 0.0
    %520 = vmatpush1.msra.mxu0 0.0
    %521 = vmatprep.subr.mxu0 0.0
    %522 = vmatpush1.msra.mxu0 0.0
    %523 = vmatprep.subr.mxu0 0.0
    %524 = vmatpush1.msra.mxu0 0.0
    %525 = vmatprep.subr.mxu0 0.0
    %526 = vmatpush1.msra.mxu0 0.0
    %527 = vmatprep.subr.mxu0 0.0
    %528 = vmatpush1.msra.mxu0 0.0
    %529 = vmatprep.subr.mxu0 0.0
    %530 = vmatpush1.msra.mxu0 0.0
    %531 = vmatprep.subr.mxu0 0.0
    %532 = vmatpush1.msra.mxu0 0.0
    %533 = vmatprep.subr.mxu0 0.0
    %534 = vmatpush1.msra.mxu0 0.0
    %535 = vmatprep.subr.mxu0 0.0
    %536 = vmatpush1.msra.mxu0 0.0
    %537 = vmatprep.subr.mxu0 0.0
    %538 = vmatpush1.msra.mxu0 0.0
    %539 = vmatprep.subr.mxu0 0.0
    %540 = vmatpush1.msra.mxu0 0.0
    %541 = vmatprep.subr.mxu0 0.0
    %542 = vmatpush1.msra.mxu0 0.0
    %543 = vmatprep.subr.mxu0 0.0
    %544 = vmatpush1.msra.mxu0 0.0
    %545 = vmatprep.subr.mxu0 0.0
    %546 = vmatpush1.msra.mxu0 0.0
    %547 = vmatprep.subr.mxu0 0.0
    %548 = vmatpush1.msra.mxu0 0.0
    %549 = vmatprep.subr.mxu0 0.0
    %550 = vmatpush1.msra.mxu0 0.0
    %551 = vmatprep.subr.mxu0 0.0
    %552 = vmatpush1.msra.mxu0 0.0
    %553 = vmatprep.subr.mxu0 0.0
    %554 = vmatpush1.msra.mxu0 0.0
    %555 = vmatprep.subr.mxu0 0.0
    %556 = vmatpush1.msra.mxu0 0.0
    %557 = vmatprep.subr.mxu0 0.0
    %558 = vmatpush1.msra.mxu0 0.0
    %559 = vmatprep.subr.mxu0 0.0
    %560 = vmatpush1.msra.mxu0 0.0
    %561 = vmatprep.subr.mxu0 0.0
    %562 = vmatpush1.msra.mxu0 0.0
    %563 = vmatprep.subr.mxu0 0.0
    %564 = vmatpush1.msra.mxu0 0.0
    %565 = vmatprep.subr.mxu0 0.0
    %566 = vmatpush1.msra.mxu0 0.0
    %567 = vmatprep.mubr.f32.mxu0 0.0
    %568 = vmatmul.mubr.f32.gmra.mrb[0].mxu0 %v410
    %v569 = vpop.f32.mrb[0].mxu0
    %v570 = vadd.f32 %v501, %v569
    %v571 = vpop.f32.mrb[0].mxu0
    %572 = vmatprep.mubr.f32.mxu0 0.0
    %573 = vmatmul.mubr.f32.gmra.mrb[0].mxu0 %v413
    %v574 = vpop.f32.mrb[0].mxu0
    %v575 = vadd.f32 %v501, %v574
    %v576 = vpop.f32.mrb[0].mxu0
    %577 = vdwg.mxu0
    %s578 = scalar_lea.vmem [#allocation13], 64
    %v579 = vld [vmem:[%s578] sm:$0xff]
    %v580 = vld [vmem:[%s578 + $0x8] sm:$0xff]
    %v581 = vld [vmem:[%s578 + $0x10] sm:$0xff]
    %v582 = vld [vmem:[%s578 + $0x18] sm:$0xff]
    %s583 = scalar_lea.vmem [#allocation14], 2
    %v584 = vld [vmem:[%s583] sm:$0x1]
    %v586 = vlaneseq
    %v587 = vshrl.u32 %v586, 7
    %v588 = vsub.s32 0, %v587
    %v589 = vrot.slane %v584, %v588
    %591 = vmatprep.subr.mxu0 0.0
    %592 = vmatpush1.msra.mxu0 %v579
    %593 = vmatprep.subr.mxu0 0.0
    %594 = vmatpush1.msra.mxu0 %v580
    %595 = vmatprep.subr.mxu0 0.0
    %596 = vmatpush1.msra.mxu0 %v581
    %597 = vmatprep.subr.mxu0 0.0
    %598 = vmatpush1.msra.mxu0 %v582
    %599 = vmatprep.subr.mxu0 0.0
    %600 = vmatpush1.msra.mxu0 0.0
    %601 = vmatprep.subr.mxu0 0.0
    %602 = vmatpush1.msra.mxu0 0.0
    %603 = vmatprep.subr.mxu0 0.0
    %604 = vmatpush1.msra.mxu0 0.0
    %605 = vmatprep.subr.mxu0 0.0
    %606 = vmatpush1.msra.mxu0 0.0
    %607 = vmatprep.subr.mxu0 0.0
    %608 = vmatpush1.msra.mxu0 0.0
    %609 = vmatprep.subr.mxu0 0.0
    %610 = vmatpush1.msra.mxu0 0.0
    %611 = vmatprep.subr.mxu0 0.0
    %612 = vmatpush1.msra.mxu0 0.0
    %613 = vmatprep.subr.mxu0 0.0
    %614 = vmatpush1.msra.mxu0 0.0
    %615 = vmatprep.subr.mxu0 0.0
    %616 = vmatpush1.msra.mxu0 0.0
    %617 = vmatprep.subr.mxu0 0.0
    %618 = vmatpush1.msra.mxu0 0.0
    %619 = vmatprep.subr.mxu0 0.0
    %620 = vmatpush1.msra.mxu0 0.0
    %621 = vmatprep.subr.mxu0 0.0
    %622 = vmatpush1.msra.mxu0 0.0
    %623 = vmatprep.subr.mxu0 0.0
    %624 = vmatpush1.msra.mxu0 0.0
    %625 = vmatprep.subr.mxu0 0.0
    %626 = vmatpush1.msra.mxu0 0.0
    %627 = vmatprep.subr.mxu0 0.0
    %628 = vmatpush1.msra.mxu0 0.0
    %629 = vmatprep.subr.mxu0 0.0
    %630 = vmatpush1.msra.mxu0 0.0
    %631 = vmatprep.subr.mxu0 0.0
    %632 = vmatpush1.msra.mxu0 0.0
    %633 = vmatprep.subr.mxu0 0.0
    %634 = vmatpush1.msra.mxu0 0.0
    %635 = vmatprep.subr.mxu0 0.0
    %636 = vmatpush1.msra.mxu0 0.0
    %637 = vmatprep.subr.mxu0 0.0
    %638 = vmatpush1.msra.mxu0 0.0
    %639 = vmatprep.subr.mxu0 0.0
    %640 = vmatpush1.msra.mxu0 0.0
    %641 = vmatprep.subr.mxu0 0.0
    %642 = vmatpush1.msra.mxu0 0.0
    %643 = vmatprep.subr.mxu0 0.0
    %644 = vmatpush1.msra.mxu0 0.0
    %645 = vmatprep.subr.mxu0 0.0
    %646 = vmatpush1.msra.mxu0 0.0
    %647 = vmatprep.subr.mxu0 0.0
    %648 = vmatpush1.msra.mxu0 0.0
    %649 = vmatprep.subr.mxu0 0.0
    %650 = vmatpush1.msra.mxu0 0.0
    %651 = vmatprep.subr.mxu0 0.0
    %652 = vmatpush1.msra.mxu0 0.0
    %653 = vmatprep.subr.mxu0 0.0
    %654 = vmatpush1.msra.mxu0 0.0
    %655 = vmatprep.mubr.f32.mxu0 0.0
    %656 = vmatmul.mubr.f32.gmra.mrb[0].mxu0 %v410
    %v657 = vpop.f32.mrb[0].mxu0
    %v658 = vadd.f32 %v589, %v657
    %v659 = vpop.f32.mrb[0].mxu0
    %660 = vmatprep.mubr.f32.mxu0 0.0
    %661 = vmatmul.mubr.f32.gmra.mrb[0].mxu0 %v413
    %v662 = vpop.f32.mrb[0].mxu0
    %v663 = vadd.f32 %v589, %v662
    %v664 = vpop.f32.mrb[0].mxu0
    %665 = vdwg.mxu0
    %v668 = vcombine.high %v482, %v482
    %v669 = vcombine.high %v487, %v487
    %v672 = vcombine.high %v570, %v570
    %v673 = vcombine.high %v575, %v575
    %v676 = vcombine.high %v658, %v658
    %v677 = vcombine.high %v663, %v663
    %v678 = vsel %vm354, %v482, 0
    %v680 = vsel %vm354, %v570, 0
    %682 = vmatprep.subr.mxu0 0.0
    %683 = vmatpush1.xpose.msra.mxu0 %v680
    %684 = vmatprep.subr.mxu0 0.0
    %685 = vmatpush1.xpose.msra.mxu0 0.0
    %686 = vmatprep.subr.mxu0 0.0
    %687 = vmatpush1.xpose.msra.mxu0 0.0
    %688 = vmatprep.subr.mxu0 0.0
    %689 = vmatpush1.xpose.msra.mxu0 0.0
    %690 = vmatprep.subr.mxu0 0.0
    %691 = vmatpush1.xpose.msra.mxu0 0.0
    %692 = vmatprep.subr.mxu0 0.0
    %693 = vmatpush1.xpose.msra.mxu0 0.0
    %694 = vmatprep.subr.mxu0 0.0
    %695 = vmatpush1.xpose.msra.mxu0 0.0
    %696 = vmatprep.subr.mxu0 0.0
    %697 = vmatpush1.xpose.msra.mxu0 0.0
    %698 = vmatprep.subr.mxu0 0.0
    %699 = vmatpush1.xpose.msra.mxu0 0.0
    %700 = vmatprep.subr.mxu0 0.0
    %701 = vmatpush1.xpose.msra.mxu0 0.0
    %702 = vmatprep.subr.mxu0 0.0
    %703 = vmatpush1.xpose.msra.mxu0 0.0
    %704 = vmatprep.subr.mxu0 0.0
    %705 = vmatpush1.xpose.msra.mxu0 0.0
    %706 = vmatprep.subr.mxu0 0.0
    %707 = vmatpush1.xpose.msra.mxu0 0.0
    %708 = vmatprep.subr.mxu0 0.0
    %709 = vmatpush1.xpose.msra.mxu0 0.0
    %710 = vmatprep.subr.mxu0 0.0
    %711 = vmatpush1.xpose.msra.mxu0 0.0
    %712 = vmatprep.subr.mxu0 0.0
    %713 = vmatpush1.xpose.msra.mxu0 0.0
    %714 = vmatprep.subr.mxu0 0.0
    %715 = vmatpush1.xpose.msra.mxu0 0.0
    %716 = vmatprep.subr.mxu0 0.0
    %717 = vmatpush1.xpose.msra.mxu0 0.0
    %718 = vmatprep.subr.mxu0 0.0
    %719 = vmatpush1.xpose.msra.mxu0 0.0
    %720 = vmatprep.subr.mxu0 0.0
    %721 = vmatpush1.xpose.msra.mxu0 0.0
    %722 = vmatprep.subr.mxu0 0.0
    %723 = vmatpush1.xpose.msra.mxu0 0.0
    %724 = vmatprep.subr.mxu0 0.0
    %725 = vmatpush1.xpose.msra.mxu0 0.0
    %726 = vmatprep.subr.mxu0 0.0
    %727 = vmatpush1.xpose.msra.mxu0 0.0
    %728 = vmatprep.subr.mxu0 0.0
    %729 = vmatpush1.xpose.msra.mxu0 0.0
    %730 = vmatprep.subr.mxu0 0.0
    %731 = vmatpush1.xpose.msra.mxu0 0.0
    %732 = vmatprep.subr.mxu0 0.0
    %733 = vmatpush1.xpose.msra.mxu0 0.0
    %734 = vmatprep.subr.mxu0 0.0
    %735 = vmatpush1.xpose.msra.mxu0 0.0
    %736 = vmatprep.subr.mxu0 0.0
    %737 = vmatpush1.xpose.msra.mxu0 0.0
    %738 = vmatprep.subr.mxu0 0.0
    %739 = vmatpush1.xpose.msra.mxu0 0.0
    %740 = vmatprep.subr.mxu0 0.0
    %741 = vmatpush1.xpose.msra.mxu0 0.0
    %742 = vmatprep.subr.mxu0 0.0
    %743 = vmatpush1.xpose.msra.mxu0 0.0
    %744 = vmatprep.subr.mxu0 0.0
    %745 = vmatpush1.xpose.msra.mxu0 0.0
    %746 = vmatprep.mubr.f32.mxu0 0.0
    %747 = vmatmul.mubr.f32.gmra.mrb[0].mxu0 %v678
    %v748 = vpop.f32.mrb[0].mxu0
    %v749 = vadd.f32 0.0, %v748
    %v750 = vpop.f32.mrb[0].mxu0
    %751 = vdwg.mxu0
    %v752 = vsel %vm354, %v668, 0
    %v754 = vsel %vm354, %v672, 0
    %756 = vmatprep.subr.mxu0 0.0
    %757 = vmatpush1.xpose.msra.mxu0 %v754
    %758 = vmatprep.subr.mxu0 0.0
    %759 = vmatpush1.xpose.msra.mxu0 0.0
    %760 = vmatprep.subr.mxu0 0.0
    %761 = vmatpush1.xpose.msra.mxu0 0.0
    %762 = vmatprep.subr.mxu0 0.0
    %763 = vmatpush1.xpose.msra.mxu0 0.0
    %764 = vmatprep.subr.mxu0 0.0
    %765 = vmatpush1.xpose.msra.mxu0 0.0
    %766 = vmatprep.subr.mxu0 0.0
    %767 = vmatpush1.xpose.msra.mxu0 0.0
    %768 = vmatprep.subr.mxu0 0.0
    %769 = vmatpush1.xpose.msra.mxu0 0.0
    %770 = vmatprep.subr.mxu0 0.0
    %771 = vmatpush1.xpose.msra.mxu0 0.0
    %772 = vmatprep.subr.mxu0 0.0
    %773 = vmatpush1.xpose.msra.mxu0 0.0
    %774 = vmatprep.subr.mxu0 0.0
    %775 = vmatpush1.xpose.msra.mxu0 0.0
    %776 = vmatprep.subr.mxu0 0.0
    %777 = vmatpush1.xpose.msra.mxu0 0.0
    %778 = vmatprep.subr.mxu0 0.0
    %779 = vmatpush1.xpose.msra.mxu0 0.0
    %780 = vmatprep.subr.mxu0 0.0
    %781 = vmatpush1.xpose.msra.mxu0 0.0
    %782 = vmatprep.subr.mxu0 0.0
    %783 = vmatpush1.xpose.msra.mxu0 0.0
    %784 = vmatprep.subr.mxu0 0.0
    %785 = vmatpush1.xpose.msra.mxu0 0.0
    %786 = vmatprep.subr.mxu0 0.0
    %787 = vmatpush1.xpose.msra.mxu0 0.0
    %788 = vmatprep.subr.mxu0 0.0
    %789 = vmatpush1.xpose.msra.mxu0 0.0
    %790 = vmatprep.subr.mxu0 0.0
    %791 = vmatpush1.xpose.msra.mxu0 0.0
    %792 = vmatprep.subr.mxu0 0.0
    %793 = vmatpush1.xpose.msra.mxu0 0.0
    %794 = vmatprep.subr.mxu0 0.0
    %795 = vmatpush1.xpose.msra.mxu0 0.0
    %796 = vmatprep.subr.mxu0 0.0
    %797 = vmatpush1.xpose.msra.mxu0 0.0
    %798 = vmatprep.subr.mxu0 0.0
    %799 = vmatpush1.xpose.msra.mxu0 0.0
    %800 = vmatprep.subr.mxu0 0.0
    %801 = vmatpush1.xpose.msra.mxu0 0.0
    %802 = vmatprep.subr.mxu0 0.0
    %803 = vmatpush1.xpose.msra.mxu0 0.0
    %804 = vmatprep.subr.mxu0 0.0
    %805 = vmatpush1.xpose.msra.mxu0 0.0
    %806 = vmatprep.subr.mxu0 0.0
    %807 = vmatpush1.xpose.msra.mxu0 0.0
    %808 = vmatprep.subr.mxu0 0.0
    %809 = vmatpush1.xpose.msra.mxu0 0.0
    %810 = vmatprep.subr.mxu0 0.0
    %811 = vmatpush1.xpose.msra.mxu0 0.0
    %812 = vmatprep.subr.mxu0 0.0
    %813 = vmatpush1.xpose.msra.mxu0 0.0
    %814 = vmatprep.subr.mxu0 0.0
    %815 = vmatpush1.xpose.msra.mxu0 0.0
    %816 = vmatprep.subr.mxu0 0.0
    %817 = vmatpush1.xpose.msra.mxu0 0.0
    %818 = vmatprep.subr.mxu0 0.0
    %819 = vmatpush1.xpose.msra.mxu0 0.0
    %820 = vmatprep.mubr.f32.mxu0 0.0
    %821 = vmatmul.mubr.f32.gmra.mrb[0].mxu0 %v752
    %v822 = vpop.f32.mrb[0].mxu0
    %v823 = vadd.f32 0.0, %v822
    %v824 = vpop.f32.mrb[0].mxu0
    %825 = vdwg.mxu0
    %v826 = vsel %vm354, %v487, 0
    %v828 = vsel %vm354, %v575, 0
    %830 = vmatprep.subr.mxu0 0.0
    %831 = vmatpush1.xpose.msra.mxu0 %v828
    %832 = vmatprep.subr.mxu0 0.0
    %833 = vmatpush1.xpose.msra.mxu0 0.0
    %834 = vmatprep.subr.mxu0 0.0
    %835 = vmatpush1.xpose.msra.mxu0 0.0
    %836 = vmatprep.subr.mxu0 0.0
    %837 = vmatpush1.xpose.msra.mxu0 0.0
    %838 = vmatprep.subr.mxu0 0.0
    %839 = vmatpush1.xpose.msra.mxu0 0.0
    %840 = vmatprep.subr.mxu0 0.0
    %841 = vmatpush1.xpose.msra.mxu0 0.0
    %842 = vmatprep.subr.mxu0 0.0
    %843 = vmatpush1.xpose.msra.mxu0 0.0
    %844 = vmatprep.subr.mxu0 0.0
    %845 = vmatpush1.xpose.msra.mxu0 0.0
    %846 = vmatprep.subr.mxu0 0.0
    %847 = vmatpush1.xpose.msra.mxu0 0.0
    %848 = vmatprep.subr.mxu0 0.0
    %849 = vmatpush1.xpose.msra.mxu0 0.0
    %850 = vmatprep.subr.mxu0 0.0
    %851 = vmatpush1.xpose.msra.mxu0 0.0
    %852 = vmatprep.subr.mxu0 0.0
    %853 = vmatpush1.xpose.msra.mxu0 0.0
    %854 = vmatprep.subr.mxu0 0.0
    %855 = vmatpush1.xpose.msra.mxu0 0.0
    %856 = vmatprep.subr.mxu0 0.0
    %857 = vmatpush1.xpose.msra.mxu0 0.0
    %858 = vmatprep.subr.mxu0 0.0
    %859 = vmatpush1.xpose.msra.mxu0 0.0
    %860 = vmatprep.subr.mxu0 0.0
    %861 = vmatpush1.xpose.msra.mxu0 0.0
    %862 = vmatprep.subr.mxu0 0.0
    %863 = vmatpush1.xpose.msra.mxu0 0.0
    %864 = vmatprep.subr.mxu0 0.0
    %865 = vmatpush1.xpose.msra.mxu0 0.0
    %866 = vmatprep.subr.mxu0 0.0
    %867 = vmatpush1.xpose.msra.mxu0 0.0
    %868 = vmatprep.subr.mxu0 0.0
    %869 = vmatpush1.xpose.msra.mxu0 0.0
    %870 = vmatprep.subr.mxu0 0.0
    %871 = vmatpush1.xpose.msra.mxu0 0.0
    %872 = vmatprep.subr.mxu0 0.0
    %873 = vmatpush1.xpose.msra.mxu0 0.0
    %874 = vmatprep.subr.mxu0 0.0
    %875 = vmatpush1.xpose.msra.mxu0 0.0
    %876 = vmatprep.subr.mxu0 0.0
    %877 = vmatpush1.xpose.msra.mxu0 0.0
    %878 = vmatprep.subr.mxu0 0.0
    %879 = vmatpush1.xpose.msra.mxu0 0.0
    %880 = vmatprep.subr.mxu0 0.0
    %881 = vmatpush1.xpose.msra.mxu0 0.0
    %882 = vmatprep.subr.mxu0 0.0
    %883 = vmatpush1.xpose.msra.mxu0 0.0
    %884 = vmatprep.subr.mxu0 0.0
    %885 = vmatpush1.xpose.msra.mxu0 0.0
    %886 = vmatprep.subr.mxu0 0.0
    %887 = vmatpush1.xpose.msra.mxu0 0.0
    %888 = vmatprep.subr.mxu0 0.0
    %889 = vmatpush1.xpose.msra.mxu0 0.0
    %890 = vmatprep.subr.mxu0 0.0
    %891 = vmatpush1.xpose.msra.mxu0 0.0
    %892 = vmatprep.subr.mxu0 0.0
    %893 = vmatpush1.xpose.msra.mxu0 0.0
    %894 = vmatprep.mubr.f32.mxu0 0.0
    %895 = vmatmul.mubr.f32.gmra.mrb[0].mxu0 %v826
    %v896 = vpop.f32.mrb[0].mxu0
    %v897 = vadd.f32 0.0, %v896
    %v898 = vpop.f32.mrb[0].mxu0
    %899 = vdwg.mxu0
    %v900 = vsel %vm354, %v669, 0
    %v902 = vsel %vm354, %v673, 0
    %904 = vmatprep.subr.mxu0 0.0
    %905 = vmatpush1.xpose.msra.mxu0 %v902
    %906 = vmatprep.subr.mxu0 0.0
    %907 = vmatpush1.xpose.msra.mxu0 0.0
    %908 = vmatprep.subr.mxu0 0.0
    %909 = vmatpush1.xpose.msra.mxu0 0.0
    %910 = vmatprep.subr.mxu0 0.0
    %911 = vmatpush1.xpose.msra.mxu0 0.0
    %912 = vmatprep.subr.mxu0 0.0
    %913 = vmatpush1.xpose.msra.mxu0 0.0
    %914 = vmatprep.subr.mxu0 0.0
    %915 = vmatpush1.xpose.msra.mxu0 0.0
    %916 = vmatprep.subr.mxu0 0.0
    %917 = vmatpush1.xpose.msra.mxu0 0.0
    %918 = vmatprep.subr.mxu0 0.0
    %919 = vmatpush1.xpose.msra.mxu0 0.0
    %920 = vmatprep.subr.mxu0 0.0
    %921 = vmatpush1.xpose.msra.mxu0 0.0
    %922 = vmatprep.subr.mxu0 0.0
    %923 = vmatpush1.xpose.msra.mxu0 0.0
    %924 = vmatprep.subr.mxu0 0.0
    %925 = vmatpush1.xpose.msra.mxu0 0.0
    %926 = vmatprep.subr.mxu0 0.0
    %927 = vmatpush1.xpose.msra.mxu0 0.0
    %928 = vmatprep.subr.mxu0 0.0
    %929 = vmatpush1.xpose.msra.mxu0 0.0
    %930 = vmatprep.subr.mxu0 0.0
    %931 = vmatpush1.xpose.msra.mxu0 0.0
    %932 = vmatprep.subr.mxu0 0.0
    %933 = vmatpush1.xpose.msra.mxu0 0.0
    %934 = vmatprep.subr.mxu0 0.0
    %935 = vmatpush1.xpose.msra.mxu0 0.0
    %936 = vmatprep.subr.mxu0 0.0
    %937 = vmatpush1.xpose.msra.mxu0 0.0
    %938 = vmatprep.subr.mxu0 0.0
    %939 = vmatpush1.xpose.msra.mxu0 0.0
    %940 = vmatprep.subr.mxu0 0.0
    %941 = vmatpush1.xpose.msra.mxu0 0.0
    %942 = vmatprep.subr.mxu0 0.0
    %943 = vmatpush1.xpose.msra.mxu0 0.0
    %944 = vmatprep.subr.mxu0 0.0
    %945 = vmatpush1.xpose.msra.mxu0 0.0
    %946 = vmatprep.subr.mxu0 0.0
    %947 = vmatpush1.xpose.msra.mxu0 0.0
    %948 = vmatprep.subr.mxu0 0.0
    %949 = vmatpush1.xpose.msra.mxu0 0.0
    %950 = vmatprep.subr.mxu0 0.0
    %951 = vmatpush1.xpose.msra.mxu0 0.0
    %952 = vmatprep.subr.mxu0 0.0
    %953 = vmatpush1.xpose.msra.mxu0 0.0
    %954 = vmatprep.subr.mxu0 0.0
    %955 = vmatpush1.xpose.msra.mxu0 0.0
    %956 = vmatprep.subr.mxu0 0.0
    %957 = vmatpush1.xpose.msra.mxu0 0.0
    %958 = vmatprep.subr.mxu0 0.0
    %959 = vmatpush1.xpose.msra.mxu0 0.0
    %960 = vmatprep.subr.mxu0 0.0
    %961 = vmatpush1.xpose.msra.mxu0 0.0
    %962 = vmatprep.subr.mxu0 0.0
    %963 = vmatpush1.xpose.msra.mxu0 0.0
    %964 = vmatprep.subr.mxu0 0.0
    %965 = vmatpush1.xpose.msra.mxu0 0.0
    %966 = vmatprep.subr.mxu0 0.0
    %967 = vmatpush1.xpose.msra.mxu0 0.0
    %968 = vmatprep.mubr.f32.mxu0 0.0
    %969 = vmatmul.mubr.f32.gmra.mrb[0].mxu0 %v900
    %v970 = vpop.f32.mrb[0].mxu0
    %v971 = vadd.f32 0.0, %v970
    %v972 = vpop.f32.mrb[0].mxu0
    %973 = vdwg.mxu0
    %vm974 = vcmask 27648
    %v975 = vsel %vm974, %v749, -inf
    %976 = vmax.xlane.f32.xlu0 %v975
    %v977 = vpop.xlane.xlu0 %976
    %v978 = vsel %vm974, %v823, -inf
    %979 = vmax.xlane.f32.xlu0 %v978
    %v980 = vpop.xlane.xlu0 %979
    %v981 = vsel %vm974, %v897, -inf
    %982 = vmax.xlane.f32.xlu0 %v981
    %v983 = vpop.xlane.xlu0 %982
    %v984 = vsel %vm974, %v971, -inf
    %985 = vmax.xlane.f32.xlu0 %v984
    %v986 = vpop.xlane.xlu0 %985
    %v987 = vsub.f32 %v749, %v977
    %v988 = vsub.f32 %v823, %v980
    %v989 = vsub.f32 %v897, %v983
    %v990 = vsub.f32 %v971, %v986
    %v991 = vmul.f32 %v987, 1.442695
    %v992 = vpow.pop %v991
    %v993 = vmul.f32 %v988, 1.442695
    %v994 = vpow.pop %v993
    %v995 = vmul.f32 %v989, 1.442695
    %v996 = vpow.pop %v995
    %v997 = vmul.f32 %v990, 1.442695
    %v998 = vpow.pop %v997
    %v999 = vsel %vm974, %v992, 0.0
    %1000 = vadd.xlane.f32.xlu0 %v999
    %v1001 = vpop.xlane.xlu0 %1000
    %v1002 = vsel %vm974, %v994, 0.0
    %1003 = vadd.xlane.f32.xlu0 %v1002
    %v1004 = vpop.xlane.xlu0 %1003
    %v1005 = vsel %vm974, %v996, 0.0
    %1006 = vadd.xlane.f32.xlu0 %v1005
    %v1007 = vpop.xlane.xlu0 %1006
    %v1008 = vsel %vm974, %v998, 0.0
    %1009 = vadd.xlane.f32.xlu0 %v1008
    %v1010 = vpop.xlane.xlu0 %1009
    %v1011 = vrcp.pop %v1001
    %v1012 = vrcp.pop %v1004
    %v1013 = vrcp.pop %v1007
    %v1014 = vrcp.pop %v1010
    %v1015 = vmul.f32 %v992, %v1011
    %v1016 = vmul.f32 %v994, %v1012
    %v1017 = vmul.f32 %v996, %v1013
    %v1018 = vmul.f32 %v998, %v1014
    %vm1019 = vcmask 31744
    %v1021 = vsel %vm1019, %v1015, 0
    %vm1023 = vcmask 1043456
    %v1024 = vsel %vm1023, %v658, 0
    %1026 = vmatprep.subr.mxu0 0.0
    %1027 = vmatpush1.msra.mxu0 %v1024
    %1028 = vmatprep.subr.mxu0 0.0
    %1029 = vmatpush1.msra.mxu0 0.0
    %1030 = vmatprep.subr.mxu0 0.0
    %1031 = vmatpush1.msra.mxu0 0.0
    %1032 = vmatprep.subr.mxu0 0.0
    %1033 = vmatpush1.msra.mxu0 0.0
    %1034 = vmatprep.subr.mxu0 0.0
    %1035 = vmatpush1.msra.mxu0 0.0
    %1036 = vmatprep.subr.mxu0 0.0
    %1037 = vmatpush1.msra.mxu0 0.0
    %1038 = vmatprep.subr.mxu0 0.0
    %1039 = vmatpush1.msra.mxu0 0.0
    %1040 = vmatprep.subr.mxu0 0.0
    %1041 = vmatpush1.msra.mxu0 0.0
    %1042 = vmatprep.subr.mxu0 0.0
    %1043 = vmatpush1.msra.mxu0 0.0
    %1044 = vmatprep.subr.mxu0 0.0
    %1045 = vmatpush1.msra.mxu0 0.0
    %1046 = vmatprep.subr.mxu0 0.0
    %1047 = vmatpush1.msra.mxu0 0.0
    %1048 = vmatprep.subr.mxu0 0.0
    %1049 = vmatpush1.msra.mxu0 0.0
    %1050 = vmatprep.subr.mxu0 0.0
    %1051 = vmatpush1.msra.mxu0 0.0
    %1052 = vmatprep.subr.mxu0 0.0
    %1053 = vmatpush1.msra.mxu0 0.0
    %1054 = vmatprep.subr.mxu0 0.0
    %1055 = vmatpush1.msra.mxu0 0.0
    %1056 = vmatprep.subr.mxu0 0.0
    %1057 = vmatpush1.msra.mxu0 0.0
    %1058 = vmatprep.subr.mxu0 0.0
    %1059 = vmatpush1.msra.mxu0 0.0
    %1060 = vmatprep.subr.mxu0 0.0
    %1061 = vmatpush1.msra.mxu0 0.0
    %1062 = vmatprep.subr.mxu0 0.0
    %1063 = vmatpush1.msra.mxu0 0.0
    %1064 = vmatprep.subr.mxu0 0.0
    %1065 = vmatpush1.msra.mxu0 0.0
    %1066 = vmatprep.subr.mxu0 0.0
    %1067 = vmatpush1.msra.mxu0 0.0
    %1068 = vmatprep.subr.mxu0 0.0
    %1069 = vmatpush1.msra.mxu0 0.0
    %1070 = vmatprep.subr.mxu0 0.0
    %1071 = vmatpush1.msra.mxu0 0.0
    %1072 = vmatprep.subr.mxu0 0.0
    %1073 = vmatpush1.msra.mxu0 0.0
    %1074 = vmatprep.subr.mxu0 0.0
    %1075 = vmatpush1.msra.mxu0 0.0
    %1076 = vmatprep.subr.mxu0 0.0
    %1077 = vmatpush1.msra.mxu0 0.0
    %1078 = vmatprep.subr.mxu0 0.0
    %1079 = vmatpush1.msra.mxu0 0.0
    %1080 = vmatprep.subr.mxu0 0.0
    %1081 = vmatpush1.msra.mxu0 0.0
    %1082 = vmatprep.subr.mxu0 0.0
    %1083 = vmatpush1.msra.mxu0 0.0
    %1084 = vmatprep.subr.mxu0 0.0
    %1085 = vmatpush1.msra.mxu0 0.0
    %1086 = vmatprep.subr.mxu0 0.0
    %1087 = vmatpush1.msra.mxu0 0.0
    %1088 = vmatprep.subr.mxu0 0.0
    %1089 = vmatpush1.msra.mxu0 0.0
    %1090 = vmatprep.mubr.f32.mxu0 0.0
    %1091 = vmatmul.mubr.f32.gmra.mrb[0].mxu0 %v1021
    %v1092 = vpop.f32.mrb[0].mxu0
    %v1093 = vadd.f32 0.0, %v1092
    %v1094 = vpop.f32.mrb[0].mxu0
    %1095 = vdwg.mxu0
    %v1097 = vsel %vm1019, %v1016, 0
    %v1099 = vsel %vm1023, %v676, 0
    %1101 = vmatprep.subr.mxu0 0.0
    %1102 = vmatpush1.msra.mxu0 %v1099
    %1103 = vmatprep.subr.mxu0 0.0
    %1104 = vmatpush1.msra.mxu0 0.0
    %1105 = vmatprep.subr.mxu0 0.0
    %1106 = vmatpush1.msra.mxu0 0.0
    %1107 = vmatprep.subr.mxu0 0.0
    %1108 = vmatpush1.msra.mxu0 0.0
    %1109 = vmatprep.subr.mxu0 0.0
    %1110 = vmatpush1.msra.mxu0 0.0
    %1111 = vmatprep.subr.mxu0 0.0
    %1112 = vmatpush1.msra.mxu0 0.0
    %1113 = vmatprep.subr.mxu0 0.0
    %1114 = vmatpush1.msra.mxu0 0.0
    %1115 = vmatprep.subr.mxu0 0.0
    %1116 = vmatpush1.msra.mxu0 0.0
    %1117 = vmatprep.subr.mxu0 0.0
    %1118 = vmatpush1.msra.mxu0 0.0
    %1119 = vmatprep.subr.mxu0 0.0
    %1120 = vmatpush1.msra.mxu0 0.0
    %1121 = vmatprep.subr.mxu0 0.0
    %1122 = vmatpush1.msra.mxu0 0.0
    %1123 = vmatprep.subr.mxu0 0.0
    %1124 = vmatpush1.msra.mxu0 0.0
    %1125 = vmatprep.subr.mxu0 0.0
    %1126 = vmatpush1.msra.mxu0 0.0
    %1127 = vmatprep.subr.mxu0 0.0
    %1128 = vmatpush1.msra.mxu0 0.0
    %1129 = vmatprep.subr.mxu0 0.0
    %1130 = vmatpush1.msra.mxu0 0.0
    %1131 = vmatprep.subr.mxu0 0.0
    %1132 = vmatpush1.msra.mxu0 0.0
    %1133 = vmatprep.subr.mxu0 0.0
    %1134 = vmatpush1.msra.mxu0 0.0
    %1135 = vmatprep.subr.mxu0 0.0
    %1136 = vmatpush1.msra.mxu0 0.0
    %1137 = vmatprep.subr.mxu0 0.0
    %1138 = vmatpush1.msra.mxu0 0.0
    %1139 = vmatprep.subr.mxu0 0.0
    %1140 = vmatpush1.msra.mxu0 0.0
    %1141 = vmatprep.subr.mxu0 0.0
    %1142 = vmatpush1.msra.mxu0 0.0
    %1143 = vmatprep.subr.mxu0 0.0
    %1144 = vmatpush1.msra.mxu0 0.0
    %1145 = vmatprep.subr.mxu0 0.0
    %1146 = vmatpush1.msra.mxu0 0.0
    %1147 = vmatprep.subr.mxu0 0.0
    %1148 = vmatpush1.msra.mxu0 0.0
    %1149 = vmatprep.subr.mxu0 0.0
    %1150 = vmatpush1.msra.mxu0 0.0
    %1151 = vmatprep.subr.mxu0 0.0
    %1152 = vmatpush1.msra.mxu0 0.0
    %1153 = vmatprep.subr.mxu0 0.0
    %1154 = vmatpush1.msra.mxu0 0.0
    %1155 = vmatprep.subr.mxu0 0.0
    %1156 = vmatpush1.msra.mxu0 0.0
    %1157 = vmatprep.subr.mxu0 0.0
    %1158 = vmatpush1.msra.mxu0 0.0
    %1159 = vmatprep.subr.mxu0 0.0
    %1160 = vmatpush1.msra.mxu0 0.0
    %1161 = vmatprep.subr.mxu0 0.0
    %1162 = vmatpush1.msra.mxu0 0.0
    %1163 = vmatprep.subr.mxu0 0.0
    %1164 = vmatpush1.msra.mxu0 0.0
    %1165 = vmatprep.mubr.f32.mxu0 0.0
    %1166 = vmatmul.mubr.f32.gmra.mrb[0].mxu0 %v1097
    %v1167 = vpop.f32.mrb[0].mxu0
    %v1168 = vadd.f32 0.0, %v1167
    %v1169 = vpop.f32.mrb[0].mxu0
    %1170 = vdwg.mxu0
    %v1172 = vsel %vm1019, %v1017, 0
    %v1174 = vsel %vm1023, %v663, 0
    %1176 = vmatprep.subr.mxu0 0.0
    %1177 = vmatpush1.msra.mxu0 %v1174
    %1178 = vmatprep.subr.mxu0 0.0
    %1179 = vmatpush1.msra.mxu0 0.0
    %1180 = vmatprep.subr.mxu0 0.0
    %1181 = vmatpush1.msra.mxu0 0.0
    %1182 = vmatprep.subr.mxu0 0.0
    %1183 = vmatpush1.msra.mxu0 0.0
    %1184 = vmatprep.subr.mxu0 0.0
    %1185 = vmatpush1.msra.mxu0 0.0
    %1186 = vmatprep.subr.mxu0 0.0
    %1187 = vmatpush1.msra.mxu0 0.0
    %1188 = vmatprep.subr.mxu0 0.0
    %1189 = vmatpush1.msra.mxu0 0.0
    %1190 = vmatprep.subr.mxu0 0.0
    %1191 = vmatpush1.msra.mxu0 0.0
    %1192 = vmatprep.subr.mxu0 0.0
    %1193 = vmatpush1.msra.mxu0 0.0
    %1194 = vmatprep.subr.mxu0 0.0
    %1195 = vmatpush1.msra.mxu0 0.0
    %1196 = vmatprep.subr.mxu0 0.0
    %1197 = vmatpush1.msra.mxu0 0.0
    %1198 = vmatprep.subr.mxu0 0.0
    %1199 = vmatpush1.msra.mxu0 0.0
    %1200 = vmatprep.subr.mxu0 0.0
    %1201 = vmatpush1.msra.mxu0 0.0
    %1202 = vmatprep.subr.mxu0 0.0
    %1203 = vmatpush1.msra.mxu0 0.0
    %1204 = vmatprep.subr.mxu0 0.0
    %1205 = vmatpush1.msra.mxu0 0.0
    %1206 = vmatprep.subr.mxu0 0.0
    %1207 = vmatpush1.msra.mxu0 0.0
    %1208 = vmatprep.subr.mxu0 0.0
    %1209 = vmatpush1.msra.mxu0 0.0
    %1210 = vmatprep.subr.mxu0 0.0
    %1211 = vmatpush1.msra.mxu0 0.0
    %1212 = vmatprep.subr.mxu0 0.0
    %1213 = vmatpush1.msra.mxu0 0.0
    %1214 = vmatprep.subr.mxu0 0.0
    %1215 = vmatpush1.msra.mxu0 0.0
    %1216 = vmatprep.subr.mxu0 0.0
    %1217 = vmatpush1.msra.mxu0 0.0
    %1218 = vmatprep.subr.mxu0 0.0
    %1219 = vmatpush1.msra.mxu0 0.0
    %1220 = vmatprep.subr.mxu0 0.0
    %1221 = vmatpush1.msra.mxu0 0.0
    %1222 = vmatprep.subr.mxu0 0.0
    %1223 = vmatpush1.msra.mxu0 0.0
    %1224 = vmatprep.subr.mxu0 0.0
    %1225 = vmatpush1.msra.mxu0 0.0
    %1226 = vmatprep.subr.mxu0 0.0
    %1227 = vmatpush1.msra.mxu0 0.0
    %1228 = vmatprep.subr.mxu0 0.0
    %1229 = vmatpush1.msra.mxu0 0.0
    %1230 = vmatprep.subr.mxu0 0.0
    %1231 = vmatpush1.msra.mxu0 0.0
    %1232 = vmatprep.subr.mxu0 0.0
    %1233 = vmatpush1.msra.mxu0 0.0
    %1234 = vmatprep.subr.mxu0 0.0
    %1235 = vmatpush1.msra.mxu0 0.0
    %1236 = vmatprep.subr.mxu0 0.0
    %1237 = vmatpush1.msra.mxu0 0.0
    %1238 = vmatprep.subr.mxu0 0.0
    %1239 = vmatpush1.msra.mxu0 0.0
    %1240 = vmatprep.mubr.f32.mxu0 0.0
    %1241 = vmatmul.mubr.f32.gmra.mrb[0].mxu0 %v1172
    %v1242 = vpop.f32.mrb[0].mxu0
    %v1243 = vadd.f32 0.0, %v1242
    %v1244 = vpop.f32.mrb[0].mxu0
    %1245 = vdwg.mxu0
    %v1247 = vsel %vm1019, %v1018, 0
    %v1249 = vsel %vm1023, %v677, 0
    %1251 = vmatprep.subr.mxu0 0.0
    %1252 = vmatpush1.msra.mxu0 %v1249
    %1253 = vmatprep.subr.mxu0 0.0
    %1254 = vmatpush1.msra.mxu0 0.0
    %1255 = vmatprep.subr.mxu0 0.0
    %1256 = vmatpush1.msra.mxu0 0.0
    %1257 = vmatprep.subr.mxu0 0.0
    %1258 = vmatpush1.msra.mxu0 0.0
    %1259 = vmatprep.subr.mxu0 0.0
    %1260 = vmatpush1.msra.mxu0 0.0
    %1261 = vmatprep.subr.mxu0 0.0
    %1262 = vmatpush1.msra.mxu0 0.0
    %1263 = vmatprep.subr.mxu0 0.0
    %1264 = vmatpush1.msra.mxu0 0.0
    %1265 = vmatprep.subr.mxu0 0.0
    %1266 = vmatpush1.msra.mxu0 0.0
    %1267 = vmatprep.subr.mxu0 0.0
    %1268 = vmatpush1.msra.mxu0 0.0
    %1269 = vmatprep.subr.mxu0 0.0
    %1270 = vmatpush1.msra.mxu0 0.0
    %1271 = vmatprep.subr.mxu0 0.0
    %1272 = vmatpush1.msra.mxu0 0.0
    %1273 = vmatprep.subr.mxu0 0.0
    %1274 = vmatpush1.msra.mxu0 0.0
    %1275 = vmatprep.subr.mxu0 0.0
    %1276 = vmatpush1.msra.mxu0 0.0
    %1277 = vmatprep.subr.mxu0 0.0
    %1278 = vmatpush1.msra.mxu0 0.0
    %1279 = vmatprep.subr.mxu0 0.0
    %1280 = vmatpush1.msra.mxu0 0.0
    %1281 = vmatprep.subr.mxu0 0.0
    %1282 = vmatpush1.msra.mxu0 0.0
    %1283 = vmatprep.subr.mxu0 0.0
    %1284 = vmatpush1.msra.mxu0 0.0
    %1285 = vmatprep.subr.mxu0 0.0
    %1286 = vmatpush1.msra.mxu0 0.0
    %1287 = vmatprep.subr.mxu0 0.0
    %1288 = vmatpush1.msra.mxu0 0.0
    %1289 = vmatprep.subr.mxu0 0.0
    %1290 = vmatpush1.msra.mxu0 0.0
    %1291 = vmatprep.subr.mxu0 0.0
    %1292 = vmatpush1.msra.mxu0 0.0
    %1293 = vmatprep.subr.mxu0 0.0
    %1294 = vmatpush1.msra.mxu0 0.0
    %1295 = vmatprep.subr.mxu0 0.0
    %1296 = vmatpush1.msra.mxu0 0.0
    %1297 = vmatprep.subr.mxu0 0.0
    %1298 = vmatpush1.msra.mxu0 0.0
    %1299 = vmatprep.subr.mxu0 0.0
    %1300 = vmatpush1.msra.mxu0 0.0
    %1301 = vmatprep.subr.mxu0 0.0
    %1302 = vmatpush1.msra.mxu0 0.0
    %1303 = vmatprep.subr.mxu0 0.0
    %1304 = vmatpush1.msra.mxu0 0.0
    %1305 = vmatprep.subr.mxu0 0.0
    %1306 = vmatpush1.msra.mxu0 0.0
    %1307 = vmatprep.subr.mxu0 0.0
    %1308 = vmatpush1.msra.mxu0 0.0
    %1309 = vmatprep.subr.mxu0 0.0
    %1310 = vmatpush1.msra.mxu0 0.0
    %1311 = vmatprep.subr.mxu0 0.0
    %1312 = vmatpush1.msra.mxu0 0.0
    %1313 = vmatprep.subr.mxu0 0.0
    %1314 = vmatpush1.msra.mxu0 0.0
    %1315 = vmatprep.mubr.f32.mxu0 0.0
    %1316 = vmatmul.mubr.f32.gmra.mrb[0].mxu0 %v1247
    %v1317 = vpop.f32.mrb[0].mxu0
    %v1318 = vadd.f32 0.0, %v1317
    %v1319 = vpop.f32.mrb[0].mxu0
    %1320 = vdwg.mxu0
    %v1321 = vld [vmem:[#allocation16] sm:$0xff]
    %v1322 = vld [vmem:[#allocation16 + $0x8] sm:$0xff]
    %v1323 = vld [vmem:[#allocation16 + $0x10] sm:$0xff]
    %v1324 = vld [vmem:[#allocation16 + $0x18] sm:$0xff]
    %v1329 = vcombine.low %v1093, %v1168
    %v1330 = vcombine.low %v1243, %v1318
    %v1331 = vsel %vm354, %v1329, 0
    %v1333 = vsel %vm354, %v1330, 0
    %1335 = vmatprep.subr.mxu0 0.0
    %1336 = vmatpush1.msra.mxu0 %v1321
    %1337 = vmatprep.subr.mxu0 0.0
    %1338 = vmatpush1.msra.mxu0 %v1322
    %1339 = vmatprep.subr.mxu0 0.0
    %1340 = vmatpush1.msra.mxu0 %v1323
    %1341 = vmatprep.subr.mxu0 0.0
    %1342 = vmatpush1.msra.mxu0 %v1324
    %1343 = vmatprep.subr.mxu0 0.0
    %1344 = vmatpush1.msra.mxu0 0.0
    %1345 = vmatprep.subr.mxu0 0.0
    %1346 = vmatpush1.msra.mxu0 0.0
    %1347 = vmatprep.subr.mxu0 0.0
    %1348 = vmatpush1.msra.mxu0 0.0
    %1349 = vmatprep.subr.mxu0 0.0
    %1350 = vmatpush1.msra.mxu0 0.0
    %1351 = vmatprep.subr.mxu0 0.0
    %1352 = vmatpush1.msra.mxu0 0.0
    %1353 = vmatprep.subr.mxu0 0.0
    %1354 = vmatpush1.msra.mxu0 0.0
    %1355 = vmatprep.subr.mxu0 0.0
    %1356 = vmatpush1.msra.mxu0 0.0
    %1357 = vmatprep.subr.mxu0 0.0
    %1358 = vmatpush1.msra.mxu0 0.0
    %1359 = vmatprep.subr.mxu0 0.0
    %1360 = vmatpush1.msra.mxu0 0.0
    %1361 = vmatprep.subr.mxu0 0.0
    %1362 = vmatpush1.msra.mxu0 0.0
    %1363 = vmatprep.subr.mxu0 0.0
    %1364 = vmatpush1.msra.mxu0 0.0
    %1365 = vmatprep.subr.mxu0 0.0
    %1366 = vmatpush1.msra.mxu0 0.0
    %1367 = vmatprep.subr.mxu0 0.0
    %1368 = vmatpush1.msra.mxu0 0.0
    %1369 = vmatprep.subr.mxu0 0.0
    %1370 = vmatpush1.msra.mxu0 0.0
    %1371 = vmatprep.subr.mxu0 0.0
    %1372 = vmatpush1.msra.mxu0 0.0
    %1373 = vmatprep.subr.mxu0 0.0
    %1374 = vmatpush1.msra.mxu0 0.0
    %1375 = vmatprep.subr.mxu0 0.0
    %1376 = vmatpush1.msra.mxu0 0.0
    %1377 = vmatprep.subr.mxu0 0.0
    %1378 = vmatpush1.msra.mxu0 0.0
    %1379 = vmatprep.subr.mxu0 0.0
    %1380 = vmatpush1.msra.mxu0 0.0
    %1381 = vmatprep.subr.mxu0 0.0
    %1382 = vmatpush1.msra.mxu0 0.0
    %1383 = vmatprep.subr.mxu0 0.0
    %1384 = vmatpush1.msra.mxu0 0.0
    %1385 = vmatprep.subr.mxu0 0.0
    %1386 = vmatpush1.msra.mxu0 0.0
    %1387 = vmatprep.subr.mxu0 0.0
    %1388 = vmatpush1.msra.mxu0 0.0
    %1389 = vmatprep.subr.mxu0 0.0
    %1390 = vmatpush1.msra.mxu0 0.0
    %1391 = vmatprep.subr.mxu0 0.0
    %1392 = vmatpush1.msra.mxu0 0.0
    %1393 = vmatprep.subr.mxu0 0.0
    %1394 = vmatpush1.msra.mxu0 0.0
    %1395 = vmatprep.subr.mxu0 0.0
    %1396 = vmatpush1.msra.mxu0 0.0
    %1397 = vmatprep.subr.mxu0 0.0
    %1398 = vmatpush1.msra.mxu0 0.0
    %1399 = vmatprep.mubr.f32.mxu0 0.0
    %1400 = vmatmul.mubr.f32.gmra.mrb[0].mxu0 %v1331
    %v1401 = vpop.f32.mrb[0].mxu0
    %v1402 = vadd.f32 0.0, %v1401
    %v1403 = vpop.f32.mrb[0].mxu0
    %1404 = vmatprep.mubr.f32.mxu0 0.0
    %1405 = vmatmul.mubr.f32.gmra.mrb[0].mxu0 %v1333
    %v1406 = vpop.f32.mrb[0].mxu0
    %v1407 = vadd.f32 0.0, %v1406
    %v1408 = vpop.f32.mrb[0].mxu0
    %1409 = vdwg.mxu0
    %v1410 = vadd.f32 %v350, %v1402
    %v1411 = vadd.f32 %v351, %v1407
    %v1412 = vld [vmem:[#allocation17] sm:$0x1]
    %v1414 = vlaneseq
    %v1415 = vshrl.u32 %v1414, 7
    %v1416 = vsub.s32 0, %v1415
    %v1417 = vrot.slane %v1412, %v1416
    %v1419 = vadd.f32 %v1410, %v1417
    %v1420 = vadd.f32 %v1411, %v1417
    %v1421 = vld [vmem:[#allocation19] sm:$0x1]
    %v1422 = vld [vmem:[#allocation20] sm:$0x1]
    %v1423 = vsel %vm354, %v1419, 0.0
    %1424 = vadd.xlane.f32.xlu0 %v1423
    %v1425 = vpop.xlane.xlu0 %1424
    %v1426 = vsel %vm354, %v1420, 0.0
    %1427 = vadd.xlane.f32.xlu0 %v1426
    %v1428 = vpop.xlane.xlu0 %1427
    %v1429 = vmul.f32 %v1425, %v361
    %v1430 = vmul.f32 %v1428, %v361
    %v1431 = vsub.f32 %v1419, %v1429
    %v1432 = vsub.f32 %v1420, %v1430
    %v1433 = vmul.f32 %v1431, %v1431
    %v1434 = vmul.f32 %v1432, %v1432
    %v1435 = vsel %vm354, %v1433, 0.0
    %1436 = vadd.xlane.f32.xlu0 %v1435
    %v1437 = vpop.xlane.xlu0 %1436
    %v1438 = vsel %vm354, %v1434, 0.0
    %1439 = vadd.xlane.f32.xlu0 %v1438
    %v1440 = vpop.xlane.xlu0 %1439
    %v1441 = vmul.f32 %v1437, %v361
    %v1442 = vmul.f32 %v1440, %v361
    %v1443 = vadd.f32 %v1441, 1e-05
    %v1444 = vadd.f32 %v1442, 1e-05
    %v1445 = vrsqrt.pop %v1443
    %v1446 = vrsqrt.pop %v1444
    %v1447 = vmul.f32 %v1431, %v1445
    %v1448 = vmul.f32 %v1432, %v1446
    %v1450 = vlaneseq
    %v1451 = vshrl.u32 %v1450, 7
    %v1452 = vsub.s32 0, %v1451
    %v1453 = vrot.slane %v1421, %v1452
    %v1455 = vmul.f32 %v1447, %v1453
    %v1456 = vmul.f32 %v1448, %v1453
    %v1458 = vlaneseq
    %v1459 = vshrl.u32 %v1458, 7
    %v1460 = vsub.s32 0, %v1459
    %v1461 = vrot.slane %v1422, %v1460
    %v1463 = vadd.f32 %v1455, %v1461
    %v1464 = vadd.f32 %v1456, %v1461
    %v1465 = vld [vmem:[#allocation22] sm:$0xff]
    %v1466 = vld [vmem:[#allocation22 + $0x8] sm:$0xff]
    %v1467 = vld [vmem:[#allocation22 + $0x10] sm:$0xff]
    %v1468 = vld [vmem:[#allocation22 + $0x18] sm:$0xff]
    %v1469 = vld [vmem:[#allocation23] sm:$0x1]
    %v1471 = vlaneseq
    %v1472 = vshrl.u32 %v1471, 7
    %v1473 = vsub.s32 0, %v1472
    %v1474 = vrot.slane %v1469, %v1473
    %v1477 = vsel %vm354, %v1463, 0
    %v1480 = vsel %vm354, %v1464, 0
    %1482 = vmatprep.subr.mxu0 0.0
    %1483 = vmatpush1.msra.mxu0 %v1465
    %1484 = vmatprep.subr.mxu0 0.0
    %1485 = vmatpush1.msra.mxu0 %v1466
    %1486 = vmatprep.subr.mxu0 0.0
    %1487 = vmatpush1.msra.mxu0 %v1467
    %1488 = vmatprep.subr.mxu0 0.0
    %1489 = vmatpush1.msra.mxu0 %v1468
    %1490 = vmatprep.subr.mxu0 0.0
    %1491 = vmatpush1.msra.mxu0 0.0
    %1492 = vmatprep.subr.mxu0 0.0
    %1493 = vmatpush1.msra.mxu0 0.0
    %1494 = vmatprep.subr.mxu0 0.0
    %1495 = vmatpush1.msra.mxu0 0.0
    %1496 = vmatprep.subr.mxu0 0.0
    %1497 = vmatpush1.msra.mxu0 0.0
    %1498 = vmatprep.subr.mxu0 0.0
    %1499 = vmatpush1.msra.mxu0 0.0
    %1500 = vmatprep.subr.mxu0 0.0
    %1501 = vmatpush1.msra.mxu0 0.0
    %1502 = vmatprep.subr.mxu0 0.0
    %1503 = vmatpush1.msra.mxu0 0.0
    %1504 = vmatprep.subr.mxu0 0.0
    %1505 = vmatpush1.msra.mxu0 0.0
    %1506 = vmatprep.subr.mxu0 0.0
    %1507 = vmatpush1.msra.mxu0 0.0
    %1508 = vmatprep.subr.mxu0 0.0
    %1509 = vmatpush1.msra.mxu0 0.0
    %1510 = vmatprep.subr.mxu0 0.0
    %1511 = vmatpush1.msra.mxu0 0.0
    %1512 = vmatprep.subr.mxu0 0.0
    %1513 = vmatpush1.msra.mxu0 0.0
    %1514 = vmatprep.subr.mxu0 0.0
    %1515 = vmatpush1.msra.mxu0 0.0
    %1516 = vmatprep.subr.mxu0 0.0
    %1517 = vmatpush1.msra.mxu0 0.0
    %1518 = vmatprep.subr.mxu0 0.0
    %1519 = vmatpush1.msra.mxu0 0.0
    %1520 = vmatprep.subr.mxu0 0.0
    %1521 = vmatpush1.msra.mxu0 0.0
    %1522 = vmatprep.subr.mxu0 0.0
    %1523 = vmatpush1.msra.mxu0 0.0
    %1524 = vmatprep.subr.mxu0 0.0
    %1525 = vmatpush1.msra.mxu0 0.0
    %1526 = vmatprep.subr.mxu0 0.0
    %1527 = vmatpush1.msra.mxu0 0.0
    %1528 = vmatprep.subr.mxu0 0.0
    %1529 = vmatpush1.msra.mxu0 0.0
    %1530 = vmatprep.subr.mxu0 0.0
    %1531 = vmatpush1.msra.mxu0 0.0
    %1532 = vmatprep.subr.mxu0 0.0
    %1533 = vmatpush1.msra.mxu0 0.0
    %1534 = vmatprep.subr.mxu0 0.0
    %1535 = vmatpush1.msra.mxu0 0.0
    %1536 = vmatprep.subr.mxu0 0.0
    %1537 = vmatpush1.msra.mxu0 0.0
    %1538 = vmatprep.subr.mxu0 0.0
    %1539 = vmatpush1.msra.mxu0 0.0
    %1540 = vmatprep.subr.mxu0 0.0
    %1541 = vmatpush1.msra.mxu0 0.0
    %1542 = vmatprep.subr.mxu0 0.0
    %1543 = vmatpush1.msra.mxu0 0.0
    %1544 = vmatprep.subr.mxu0 0.0
    %1545 = vmatpush1.msra.mxu0 0.0
    %1546 = vmatprep.mubr.f32.mxu0 0.0
    %1547 = vmatmul.mubr.f32.gmra.mrb[0].mxu0 %v1477
    %v1548 = vpop.f32.mrb[0].mxu0
    %v1549 = vadd.f32 %v1474, %v1548
    %v1550 = vpop.f32.mrb[0].mxu0
    %1551 = vmatprep.mubr.f32.mxu0 0.0
    %1552 = vmatmul.mubr.f32.gmra.mrb[0].mxu0 %v1480
    %v1553 = vpop.f32.mrb[0].mxu0
    %v1554 = vadd.f32 %v1474, %v1553
    %v1555 = vpop.f32.mrb[0].mxu0
    %1556 = vdwg.mxu0
    %v1557 = vmax.f32 %v1549, 0.0
    %v1558 = vmax.f32 %v1554, 0.0
    %v1559 = vld [vmem:[%s14] sm:$0xff]
    %v1560 = vld [vmem:[%s14 + $0x8] sm:$0xff]
    %v1561 = vld [vmem:[%s14 + $0x10] sm:$0xff]
    %v1562 = vld [vmem:[%s14 + $0x18] sm:$0xff]
    %v1564 = vsel %vm354, %v1557, 0
    %v1567 = vsel %vm354, %v1558, 0
    %1569 = vmatprep.subr.mxu0 0.0
    %1570 = vmatpush1.msra.mxu0 %v1559
    %1571 = vmatprep.subr.mxu0 0.0
    %1572 = vmatpush1.msra.mxu0 %v1560
    %1573 = vmatprep.subr.mxu0 0.0
    %1574 = vmatpush1.msra.mxu0 %v1561
    %1575 = vmatprep.subr.mxu0 0.0
    %1576 = vmatpush1.msra.mxu0 %v1562
    %1577 = vmatprep.subr.mxu0 0.0
    %1578 = vmatpush1.msra.mxu0 0.0
    %1579 = vmatprep.subr.mxu0 0.0
    %1580 = vmatpush1.msra.mxu0 0.0
    %1581 = vmatprep.subr.mxu0 0.0
    %1582 = vmatpush1.msra.mxu0 0.0
    %1583 = vmatprep.subr.mxu0 0.0
    %1584 = vmatpush1.msra.mxu0 0.0
    %1585 = vmatprep.subr.mxu0 0.0
    %1586 = vmatpush1.msra.mxu0 0.0
    %1587 = vmatprep.subr.mxu0 0.0
    %1588 = vmatpush1.msra.mxu0 0.0
    %1589 = vmatprep.subr.mxu0 0.0
    %1590 = vmatpush1.msra.mxu0 0.0
    %1591 = vmatprep.subr.mxu0 0.0
    %1592 = vmatpush1.msra.mxu0 0.0
    %1593 = vmatprep.subr.mxu0 0.0
    %1594 = vmatpush1.msra.mxu0 0.0
    %1595 = vmatprep.subr.mxu0 0.0
    %1596 = vmatpush1.msra.mxu0 0.0
    %1597 = vmatprep.subr.mxu0 0.0
    %1598 = vmatpush1.msra.mxu0 0.0
    %1599 = vmatprep.subr.mxu0 0.0
    %1600 = vmatpush1.msra.mxu0 0.0
    %1601 = vmatprep.subr.mxu0 0.0
    %1602 = vmatpush1.msra.mxu0 0.0
    %1603 = vmatprep.subr.mxu0 0.0
    %1604 = vmatpush1.msra.mxu0 0.0
    %1605 = vmatprep.subr.mxu0 0.0
    %1606 = vmatpush1.msra.mxu0 0.0
    %1607 = vmatprep.subr.mxu0 0.0
    %1608 = vmatpush1.msra.mxu0 0.0
    %1609 = vmatprep.subr.mxu0 0.0
    %1610 = vmatpush1.msra.mxu0 0.0
    %1611 = vmatprep.subr.mxu0 0.0
    %1612 = vmatpush1.msra.mxu0 0.0
    %1613 = vmatprep.subr.mxu0 0.0
    %1614 = vmatpush1.msra.mxu0 0.0
    %1615 = vmatprep.subr.mxu0 0.0
    %1616 = vmatpush1.msra.mxu0 0.0
    %1617 = vmatprep.subr.mxu0 0.0
    %1618 = vmatpush1.msra.mxu0 0.0
    %1619 = vmatprep.subr.mxu0 0.0
    %1620 = vmatpush1.msra.mxu0 0.0
    %1621 = vmatprep.subr.mxu0 0.0
    %1622 = vmatpush1.msra.mxu0 0.0
    %1623 = vmatprep.subr.mxu0 0.0
    %1624 = vmatpush1.msra.mxu0 0.0
    %1625 = vmatprep.subr.mxu0 0.0
    %1626 = vmatpush1.msra.mxu0 0.0
    %1627 = vmatprep.subr.mxu0 0.0
    %1628 = vmatpush1.msra.mxu0 0.0
    %1629 = vmatprep.subr.mxu0 0.0
    %1630 = vmatpush1.msra.mxu0 0.0
    %1631 = vmatprep.subr.mxu0 0.0
    %1632 = vmatpush1.msra.mxu0 0.0
    %1633 = vmatprep.mubr.f32.mxu0 0.0
    %1634 = vmatmul.mubr.f32.gmra.mrb[0].mxu0 %v1564
    %v1635 = vpop.f32.mrb[0].mxu0
    %v1636 = vadd.f32 0.0, %v1635
    %v1637 = vpop.f32.mrb[0].mxu0
    %1638 = vmatprep.mubr.f32.mxu0 0.0
    %1639 = vmatmul.mubr.f32.gmra.mrb[0].mxu0 %v1567
    %v1640 = vpop.f32.mrb[0].mxu0
    %v1641 = vadd.f32 0.0, %v1640
    %v1642 = vpop.f32.mrb[0].mxu0
    %1643 = vdwg.mxu0
    %v1644 = vadd.f32 %v1419, %v1636
    %v1645 = vadd.f32 %v1420, %v1641
    %v1646 = vld [vmem:[#allocation25] sm:$0x1]
    %v1648 = vlaneseq
    %v1649 = vshrl.u32 %v1648, 7
    %v1650 = vsub.s32 0, %v1649
    %v1651 = vrot.slane %v1646, %v1650
    %v1653 = vadd.f32 %v1644, %v1651
    %v1654 = vadd.f32 %v1645, %v1651
    %s1655 = scalar_lea.vmem [#allocation10], 1
    %v1656 = vld [vmem:[%s1655] sm:$0x1]
    %s1657 = scalar_lea.vmem [#allocation11], 1
    %v1658 = vld [vmem:[%s1657] sm:$0x1]
    %v1659 = vsel %vm354, %v1653, 0.0
    %1660 = vadd.xlane.f32.xlu0 %v1659
    %v1661 = vpop.xlane.xlu0 %1660
    %v1662 = vsel %vm354, %v1654, 0.0
    %1663 = vadd.xlane.f32.xlu0 %v1662
    %v1664 = vpop.xlane.xlu0 %1663
    %v1665 = vmul.f32 %v1661, %v361
    %v1666 = vmul.f32 %v1664, %v361
    %v1667 = vsub.f32 %v1653, %v1665
    %v1668 = vsub.f32 %v1654, %v1666
    %v1669 = vmul.f32 %v1667, %v1667
    %v1670 = vmul.f32 %v1668, %v1668
    %v1671 = vsel %vm354, %v1669, 0.0
    %1672 = vadd.xlane.f32.xlu0 %v1671
    %v1673 = vpop.xlane.xlu0 %1672
    %v1674 = vsel %vm354, %v1670, 0.0
    %1675 = vadd.xlane.f32.xlu0 %v1674
    %v1676 = vpop.xlane.xlu0 %1675
    %v1677 = vmul.f32 %v1673, %v361
    %v1678 = vmul.f32 %v1676, %v361
    %v1679 = vadd.f32 %v1677, 1e-05
    %v1680 = vadd.f32 %v1678, 1e-05
    %v1681 = vrsqrt.pop %v1679
    %v1682 = vrsqrt.pop %v1680
    %v1683 = vmul.f32 %v1667, %v1681
    %v1684 = vmul.f32 %v1668, %v1682
    %v1686 = vlaneseq
    %v1687 = vshrl.u32 %v1686, 7
    %v1688 = vsub.s32 0, %v1687
    %v1689 = vrot.slane %v1656, %v1688
    %v1691 = vmul.f32 %v1683, %v1689
    %v1692 = vmul.f32 %v1684, %v1689
    %v1694 = vlaneseq
    %v1695 = vshrl.u32 %v1694, 7
    %v1696 = vsub.s32 0, %v1695
    %v1697 = vrot.slane %v1658, %v1696
    %v1699 = vadd.f32 %v1691, %v1697
    %v1700 = vadd.f32 %v1692, %v1697
    %s1701 = scalar_lea.vmem [#allocation13], 96
    %v1702 = vld [vmem:[%s1701] sm:$0xff]
    %v1703 = vld [vmem:[%s1701 + $0x8] sm:$0xff]
    %v1704 = vld [vmem:[%s1701 + $0x10] sm:$0xff]
    %v1705 = vld [vmem:[%s1701 + $0x18] sm:$0xff]
    %s1706 = scalar_lea.vmem [#allocation14], 3
    %v1707 = vld [vmem:[%s1706] sm:$0x1]
    %v1709 = vlaneseq
    %v1710 = vshrl.u32 %v1709, 7
    %v1711 = vsub.s32 0, %v1710
    %v1712 = vrot.slane %v1707, %v1711
    %v1715 = vsel %vm354, %v1699, 0
    %v1718 = vsel %vm354, %v1700, 0
    %1720 = vmatprep.subr.mxu0 0.0
    %1721 = vmatpush1.msra.mxu0 %v1702
    %1722 = vmatprep.subr.mxu0 0.0
    %1723 = vmatpush1.msra.mxu0 %v1703
    %1724 = vmatprep.subr.mxu0 0.0
    %1725 = vmatpush1.msra.mxu0 %v1704
    %1726 = vmatprep.subr.mxu0 0.0
    %1727 = vmatpush1.msra.mxu0 %v1705
    %1728 = vmatprep.subr.mxu0 0.0
    %1729 = vmatpush1.msra.mxu0 0.0
    %1730 = vmatprep.subr.mxu0 0.0
    %1731 = vmatpush1.msra.mxu0 0.0
    %1732 = vmatprep.subr.mxu0 0.0
    %1733 = vmatpush1.msra.mxu0 0.0
    %1734 = vmatprep.subr.mxu0 0.0
    %1735 = vmatpush1.msra.mxu0 0.0
    %1736 = vmatprep.subr.mxu0 0.0
    %1737 = vmatpush1.msra.mxu0 0.0
    %1738 = vmatprep.subr.mxu0 0.0
    %1739 = vmatpush1.msra.mxu0 0.0
    %1740 = vmatprep.subr.mxu0 0.0
    %1741 = vmatpush1.msra.mxu0 0.0
    %1742 = vmatprep.subr.mxu0 0.0
    %1743 = vmatpush1.msra.mxu0 0.0
    %1744 = vmatprep.subr.mxu0 0.0
    %1745 = vmatpush1.msra.mxu0 0.0
    %1746 = vmatprep.subr.mxu0 0.0
    %1747 = vmatpush1.msra.mxu0 0.0
    %1748 = vmatprep.subr.mxu0 0.0
    %1749 = vmatpush1.msra.mxu0 0.0
    %1750 = vmatprep.subr.mxu0 0.0
    %1751 = vmatpush1.msra.mxu0 0.0
    %1752 = vmatprep.subr.mxu0 0.0
    %1753 = vmatpush1.msra.mxu0 0.0
    %1754 = vmatprep.subr.mxu0 0.0
    %1755 = vmatpush1.msra.mxu0 0.0
    %1756 = vmatprep.subr.mxu0 0.0
    %1757 = vmatpush1.msra.mxu0 0.0
    %1758 = vmatprep.subr.mxu0 0.0
    %1759 = vmatpush1.msra.mxu0 0.0
    %1760 = vmatprep.subr.mxu0 0.0
    %1761 = vmatpush1.msra.mxu0 0.0
    %1762 = vmatprep.subr.mxu0 0.0
    %1763 = vmatpush1.msra.mxu0 0.0
    %1764 = vmatprep.subr.mxu0 0.0
    %1765 = vmatpush1.msra.mxu0 0.0
    %1766 = vmatprep.subr.mxu0 0.0
    %1767 = vmatpush1.msra.mxu0 0.0
    %1768 = vmatprep.subr.mxu0 0.0
    %1769 = vmatpush1.msra.mxu0 0.0
    %1770 = vmatprep.subr.mxu0 0.0
    %1771 = vmatpush1.msra.mxu0 0.0
    %1772 = vmatprep.subr.mxu0 0.0
    %1773 = vmatpush1.msra.mxu0 0.0
    %1774 = vmatprep.subr.mxu0 0.0
    %1775 = vmatpush1.msra.mxu0 0.0
    %1776 = vmatprep.subr.mxu0 0.0
    %1777 = vmatpush1.msra.mxu0 0.0
    %1778 = vmatprep.subr.mxu0 0.0
    %1779 = vmatpush1.msra.mxu0 0.0
    %1780 = vmatprep.subr.mxu0 0.0
    %1781 = vmatpush1.msra.mxu0 0.0
    %1782 = vmatprep.subr.mxu0 0.0
    %1783 = vmatpush1.msra.mxu0 0.0
    %1784 = vmatprep.mubr.f32.mxu0 0.0
    %1785 = vmatmul.mubr.f32.gmra.mrb[0].mxu0 %v1715
    %v1786 = vpop.f32.mrb[0].mxu0
    %v1787 = vadd.f32 %v1712, %v1786
    %v1788 = vpop.f32.mrb[0].mxu0
    %1789 = vmatprep.mubr.f32.mxu0 0.0
    %1790 = vmatmul.mubr.f32.gmra.mrb[0].mxu0 %v1718
    %v1791 = vpop.f32.mrb[0].mxu0
    %v1792 = vadd.f32 %v1712, %v1791
    %v1793 = vpop.f32.mrb[0].mxu0
    %1794 = vdwg.mxu0
    %s1795 = scalar_lea.vmem [#allocation13], 128
    %v1796 = vld [vmem:[%s1795] sm:$0xff]
    %v1797 = vld [vmem:[%s1795 + $0x8] sm:$0xff]
    %v1798 = vld [vmem:[%s1795 + $0x10] sm:$0xff]
    %v1799 = vld [vmem:[%s1795 + $0x18] sm:$0xff]
    %s1800 = scalar_lea.vmem [#allocation14], 4
    %v1801 = vld [vmem:[%s1800] sm:$0x1]
    %v1803 = vlaneseq
    %v1804 = vshrl.u32 %v1803, 7
    %v1805 = vsub.s32 0, %v1804
    %v1806 = vrot.slane %v1801, %v1805
    %1808 = vmatprep.subr.mxu0 0.0
    %1809 = vmatpush1.msra.mxu0 %v1796
    %1810 = vmatprep.subr.mxu0 0.0
    %1811 = vmatpush1.msra.mxu0 %v1797
    %1812 = vmatprep.subr.mxu0 0.0
    %1813 = vmatpush1.msra.mxu0 %v1798
    %1814 = vmatprep.subr.mxu0 0.0
    %1815 = vmatpush1.msra.mxu0 %v1799
    %1816 = vmatprep.subr.mxu0 0.0
    %1817 = vmatpush1.msra.mxu0 0.0
    %1818 = vmatprep.subr.mxu0 0.0
    %1819 = vmatpush1.msra.mxu0 0.0
    %1820 = vmatprep.subr.mxu0 0.0
    %1821 = vmatpush1.msra.mxu0 0.0
    %1822 = vmatprep.subr.mxu0 0.0
    %1823 = vmatpush1.msra.mxu0 0.0
    %1824 = vmatprep.subr.mxu0 0.0
    %1825 = vmatpush1.msra.mxu0 0.0
    %1826 = vmatprep.subr.mxu0 0.0
    %1827 = vmatpush1.msra.mxu0 0.0
    %1828 = vmatprep.subr.mxu0 0.0
    %1829 = vmatpush1.msra.mxu0 0.0
    %1830 = vmatprep.subr.mxu0 0.0
    %1831 = vmatpush1.msra.mxu0 0.0
    %1832 = vmatprep.subr.mxu0 0.0
    %1833 = vmatpush1.msra.mxu0 0.0
    %1834 = vmatprep.subr.mxu0 0.0
    %1835 = vmatpush1.msra.mxu0 0.0
    %1836 = vmatprep.subr.mxu0 0.0
    %1837 = vmatpush1.msra.mxu0 0.0
    %1838 = vmatprep.subr.mxu0 0.0
    %1839 = vmatpush1.msra.mxu0 0.0
    %1840 = vmatprep.subr.mxu0 0.0
    %1841 = vmatpush1.msra.mxu0 0.0
    %1842 = vmatprep.subr.mxu0 0.0
    %1843 = vmatpush1.msra.mxu0 0.0
    %1844 = vmatprep.subr.mxu0 0.0
    %1845 = vmatpush1.msra.mxu0 0.0
    %1846 = vmatprep.subr.mxu0 0.0
    %1847 = vmatpush1.msra.mxu0 0.0
    %1848 = vmatprep.subr.mxu0 0.0
    %1849 = vmatpush1.msra.mxu0 0.0
    %1850 = vmatprep.subr.mxu0 0.0
    %1851 = vmatpush1.msra.mxu0 0.0
    %1852 = vmatprep.subr.mxu0 0.0
    %1853 = vmatpush1.msra.mxu0 0.0
    %1854 = vmatprep.subr.mxu0 0.0
    %1855 = vmatpush1.msra.mxu0 0.0
    %1856 = vmatprep.subr.mxu0 0.0
    %1857 = vmatpush1.msra.mxu0 0.0
    %1858 = vmatprep.subr.mxu0 0.0
    %1859 = vmatpush1.msra.mxu0 0.0
    %1860 = vmatprep.subr.mxu0 0.0
    %1861 = vmatpush1.msra.mxu0 0.0
    %1862 = vmatprep.subr.mxu0 0.0
    %1863 = vmatpush1.msra.mxu0 0.0
    %1864 = vmatprep.subr.mxu0 0.0
    %1865 = vmatpush1.msra.mxu0 0.0
    %1866 = vmatprep.subr.mxu0 0.0
    %1867 = vmatpush1.msra.mxu0 0.0
    %1868 = vmatprep.subr.mxu0 0.0
    %1869 = vmatpush1.msra.mxu0 0.0
    %1870 = vmatprep.subr.mxu0 0.0
    %1871 = vmatpush1.msra.mxu0 0.0
    %1872 = vmatprep.mubr.f32.mxu0 0.0
    %1873 = vmatmul.mubr.f32.gmra.mrb[0].mxu0 %v1715
    %v1874 = vpop.f32.mrb[0].mxu0
    %v1875 = vadd.f32 %v1806, %v1874
    %v1876 = vpop.f32.mrb[0].mxu0
    %1877 = vmatprep.mubr.f32.mxu0 0.0
    %1878 = vmatmul.mubr.f32.gmra.mrb[0].mxu0 %v1718
    %v1879 = vpop.f32.mrb[0].mxu0
    %v1880 = vadd.f32 %v1806, %v1879
    %v1881 = vpop.f32.mrb[0].mxu0
    %1882 = vdwg.mxu0
    %s1883 = scalar_lea.vmem [#allocation13], 160
    %v1884 = vld [vmem:[%s1883] sm:$0xff]
    %v1885 = vld [vmem:[%s1883 + $0x8] sm:$0xff]
    %v1886 = vld [vmem:[%s1883 + $0x10] sm:$0xff]
    %v1887 = vld [vmem:[%s1883 + $0x18] sm:$0xff]
    %s1888 = scalar_lea.vmem [#allocation14], 5
    %v1889 = vld [vmem:[%s1888] sm:$0x1]
    %v1891 = vlaneseq
    %v1892 = vshrl.u32 %v1891, 7
    %v1893 = vsub.s32 0, %v1892
    %v1894 = vrot.slane %v1889, %v1893
    %1896 = vmatprep.subr.mxu0 0.0
    %1897 = vmatpush1.msra.mxu0 %v1884
    %1898 = vmatprep.subr.mxu0 0.0
    %1899 = vmatpush1.msra.mxu0 %v1885
    %1900 = vmatprep.subr.mxu0 0.0
    %1901 = vmatpush1.msra.mxu0 %v1886
    %1902 = vmatprep.subr.mxu0 0.0
    %1903 = vmatpush1.msra.mxu0 %v1887
    %1904 = vmatprep.subr.mxu0 0.0
    %1905 = vmatpush1.msra.mxu0 0.0
    %1906 = vmatprep.subr.mxu0 0.0
    %1907 = vmatpush1.msra.mxu0 0.0
    %1908 = vmatprep.subr.mxu0 0.0
    %1909 = vmatpush1.msra.mxu0 0.0
    %1910 = vmatprep.subr.mxu0 0.0
    %1911 = vmatpush1.msra.mxu0 0.0
    %1912 = vmatprep.subr.mxu0 0.0
    %1913 = vmatpush1.msra.mxu0 0.0
    %1914 = vmatprep.subr.mxu0 0.0
    %1915 = vmatpush1.msra.mxu0 0.0
    %1916 = vmatprep.subr.mxu0 0.0
    %1917 = vmatpush1.msra.mxu0 0.0
    %1918 = vmatprep.subr.mxu0 0.0
    %1919 = vmatpush1.msra.mxu0 0.0
    %1920 = vmatprep.subr.mxu0 0.0
    %1921 = vmatpush1.msra.mxu0 0.0
    %1922 = vmatprep.subr.mxu0 0.0
    %1923 = vmatpush1.msra.mxu0 0.0
    %1924 = vmatprep.subr.mxu0 0.0
    %1925 = vmatpush1.msra.mxu0 0.0
    %1926 = vmatprep.subr.mxu0 0.0
    %1927 = vmatpush1.msra.mxu0 0.0
    %1928 = vmatprep.subr.mxu0 0.0
    %1929 = vmatpush1.msra.mxu0 0.0
    %1930 = vmatprep.subr.mxu0 0.0
    %1931 = vmatpush1.msra.mxu0 0.0
    %1932 = vmatprep.subr.mxu0 0.0
    %1933 = vmatpush1.msra.mxu0 0.0
    %1934 = vmatprep.subr.mxu0 0.0
    %1935 = vmatpush1.msra.mxu0 0.0
    %1936 = vmatprep.subr.mxu0 0.0
    %1937 = vmatpush1.msra.mxu0 0.0
    %1938 = vmatprep.subr.mxu0 0.0
    %1939 = vmatpush1.msra.mxu0 0.0
    %1940 = vmatprep.subr.mxu0 0.0
    %1941 = vmatpush1.msra.mxu0 0.0
    %1942 = vmatprep.subr.mxu0 0.0
    %1943 = vmatpush1.msra.mxu0 0.0
    %1944 = vmatprep.subr.mxu0 0.0
    %1945 = vmatpush1.msra.mxu0 0.0
    %1946 = vmatprep.subr.mxu0 0.0
    %1947 = vmatpush1.msra.mxu0 0.0
    %1948 = vmatprep.subr.mxu0 0.0
    %1949 = vmatpush1.msra.mxu0 0.0
    %1950 = vmatprep.subr.mxu0 0.0
    %1951 = vmatpush1.msra.mxu0 0.0
    %1952 = vmatprep.subr.mxu0 0.0
    %1953 = vmatpush1.msra.mxu0 0.0
    %1954 = vmatprep.subr.mxu0 0.0
    %1955 = vmatpush1.msra.mxu0 0.0
    %1956 = vmatprep.subr.mxu0 0.0
    %1957 = vmatpush1.msra.mxu0 0.0
    %1958 = vmatprep.subr.mxu0 0.0
    %1959 = vmatpush1.msra.mxu0 0.0
    %1960 = vmatprep.mubr.f32.mxu0 0.0
    %1961 = vmatmul.mubr.f32.gmra.mrb[0].mxu0 %v1715
    %v1962 = vpop.f32.mrb[0].mxu0
    %v1963 = vadd.f32 %v1894, %v1962
    %v1964 = vpop.f32.mrb[0].mxu0
    %1965 = vmatprep.mubr.f32.mxu0 0.0
    %1966 = vmatmul.mubr.f32.gmra.mrb[0].mxu0 %v1718
    %v1967 = vpop.f32.mrb[0].mxu0
    %v1968 = vadd.f32 %v1894, %v1967
    %v1969 = vpop.f32.mrb[0].mxu0
    %1970 = vdwg.mxu0
    %v1973 = vcombine.high %v1787, %v1787
    %v1974 = vcombine.high %v1792, %v1792
    %v1977 = vcombine.high %v1875, %v1875
    %v1978 = vcombine.high %v1880, %v1880
    %v1981 = vcombine.high %v1963, %v1963
    %v1982 = vcombine.high %v1968, %v1968
    %v1983 = vsel %vm354, %v1787, 0
    %v1985 = vsel %vm354, %v1875, 0
    %1987 = vmatprep.subr.mxu0 0.0
    %1988 = vmatpush1.xpose.msra.mxu0 %v1985
    %1989 = vmatprep.subr.mxu0 0.0
    %1990 = vmatpush1.xpose.msra.mxu0 0.0
    %1991 = vmatprep.subr.mxu0 0.0
    %1992 = vmatpush1.xpose.msra.mxu0 0.0
    %1993 = vmatprep.subr.mxu0 0.0
    %1994 = vmatpush1.xpose.msra.mxu0 0.0
    %1995 = vmatprep.subr.mxu0 0.0
    %1996 = vmatpush1.xpose.msra.mxu0 0.0
    %1997 = vmatprep.subr.mxu0 0.0
    %1998 = vmatpush1.xpose.msra.mxu0 0.0
    %1999 = vmatprep.subr.mxu0 0.0
    %2000 = vmatpush1.xpose.msra.mxu0 0.0
    %2001 = vmatprep.subr.mxu0 0.0
    %2002 = vmatpush1.xpose.msra.mxu0 0.0
    %2003 = vmatprep.subr.mxu0 0.0
    %2004 = vmatpush1.xpose.msra.mxu0 0.0
    %2005 = vmatprep.subr.mxu0 0.0
    %2006 = vmatpush1.xpose.msra.mxu0 0.0
    %2007 = vmatprep.subr.mxu0 0.0
    %2008 = vmatpush1.xpose.msra.mxu0 0.0
    %2009 = vmatprep.subr.mxu0 0.0
    %2010 = vmatpush1.xpose.msra.mxu0 0.0
    %2011 = vmatprep.subr.mxu0 0.0
    %2012 = vmatpush1.xpose.msra.mxu0 0.0
    %2013 = vmatprep.subr.mxu0 0.0
    %2014 = vmatpush1.xpose.msra.mxu0 0.0
    %2015 = vmatprep.subr.mxu0 0.0
    %2016 = vmatpush1.xpose.msra.mxu0 0.0
    %2017 = vmatprep.subr.mxu0 0.0
    %2018 = vmatpush1.xpose.msra.mxu0 0.0
    %2019 = vmatprep.subr.mxu0 0.0
    %2020 = vmatpush1.xpose.msra.mxu0 0.0
    %2021 = vmatprep.subr.mxu0 0.0
    %2022 = vmatpush1.xpose.msra.mxu0 0.0
    %2023 = vmatprep.subr.mxu0 0.0
    %2024 = vmatpush1.xpose.msra.mxu0 0.0
    %2025 = vmatprep.subr.mxu0 0.0
    %2026 = vmatpush1.xpose.msra.mxu0 0.0
    %2027 = vmatprep.subr.mxu0 0.0
    %2028 = vmatpush1.xpose.msra.mxu0 0.0
    %2029 = vmatprep.subr.mxu0 0.0
    %2030 = vmatpush1.xpose.msra.mxu0 0.0
    %2031 = vmatprep.subr.mxu0 0.0
    %2032 = vmatpush1.xpose.msra.mxu0 0.0
    %2033 = vmatprep.subr.mxu0 0.0
    %2034 = vmatpush1.xpose.msra.mxu0 0.0
    %2035 = vmatprep.subr.mxu0 0.0
    %2036 = vmatpush1.xpose.msra.mxu0 0.0
    %2037 = vmatprep.subr.mxu0 0.0
    %2038 = vmatpush1.xpose.msra.mxu0 0.0
    %2039 = vmatprep.subr.mxu0 0.0
    %2040 = vmatpush1.xpose.msra.mxu0 0.0
    %2041 = vmatprep.subr.mxu0 0.0
    %2042 = vmatpush1.xpose.msra.mxu0 0.0
    %2043 = vmatprep.subr.mxu0 0.0
    %2044 = vmatpush1.xpose.msra.mxu0 0.0
    %2045 = vmatprep.subr.mxu0 0.0
    %2046 = vmatpush1.xpose.msra.mxu0 0.0
    %2047 = vmatprep.subr.mxu0 0.0
    %2048 = vmatpush1.xpose.msra.mxu0 0.0
    %2049 = vmatprep.subr.mxu0 0.0
    %2050 = vmatpush1.xpose.msra.mxu0 0.0
    %2051 = vmatprep.mubr.f32.mxu0 0.0
    %2052 = vmatmul.mubr.f32.gmra.mrb[0].mxu0 %v1983
    %v2053 = vpop.f32.mrb[0].mxu0
    %v2054 = vadd.f32 0.0, %v2053
    %v2055 = vpop.f32.mrb[0].mxu0
    %2056 = vdwg.mxu0
    %v2057 = vsel %vm354, %v1973, 0
    %v2059 = vsel %vm354, %v1977, 0
    %2061 = vmatprep.subr.mxu0 0.0
    %2062 = vmatpush1.xpose.msra.mxu0 %v2059
    %2063 = vmatprep.subr.mxu0 0.0
    %2064 = vmatpush1.xpose.msra.mxu0 0.0
    %2065 = vmatprep.subr.mxu0 0.0
    %2066 = vmatpush1.xpose.msra.mxu0 0.0
    %2067 = vmatprep.subr.mxu0 0.0
    %2068 = vmatpush1.xpose.msra.mxu0 0.0
    %2069 = vmatprep.subr.mxu0 0.0
    %2070 = vmatpush1.xpose.msra.mxu0 0.0
    %2071 = vmatprep.subr.mxu0 0.0
    %2072 = vmatpush1.xpose.msra.mxu0 0.0
    %2073 = vmatprep.subr.mxu0 0.0
    %2074 = vmatpush1.xpose.msra.mxu0 0.0
    %2075 = vmatprep.subr.mxu0 0.0
    %2076 = vmatpush1.xpose.msra.mxu0 0.0
    %2077 = vmatprep.subr.mxu0 0.0
    %2078 = vmatpush1.xpose.msra.mxu0 0.0
    %2079 = vmatprep.subr.mxu0 0.0
    %2080 = vmatpush1.xpose.msra.mxu0 0.0
    %2081 = vmatprep.subr.mxu0 0.0
    %2082 = vmatpush1.xpose.msra.mxu0 0.0
    %2083 = vmatprep.subr.mxu0 0.0
    %2084 = vmatpush1.xpose.msra.mxu0 0.0
    %2085 = vmatprep.subr.mxu0 0.0
    %2086 = vmatpush1.xpose.msra.mxu0 0.0
    %2087 = vmatprep.subr.mxu0 0.0
    %2088 = vmatpush1.xpose.msra.mxu0 0.0
    %2089 = vmatprep.subr.mxu0 0.0
    %2090 = vmatpush1.xpose.msra.mxu0 0.0
    %2091 = vmatprep.subr.mxu0 0.0
    %2092 = vmatpush1.xpose.msra.mxu0 0.0
    %2093 = vmatprep.subr.mxu0 0.0
    %2094 = vmatpush1.xpose.msra.mxu0 0.0
    %2095 = vmatprep.subr.mxu0 0.0
    %2096 = vmatpush1.xpose.msra.mxu0 0.0
    %2097 = vmatprep.subr.mxu0 0.0
    %2098 = vmatpush1.xpose.msra.mxu0 0.0
    %2099 = vmatprep.subr.mxu0 0.0
    %2100 = vmatpush1.xpose.msra.mxu0 0.0
    %2101 = vmatprep.subr.mxu0 0.0
    %2102 = vmatpush1.xpose.msra.mxu0 0.0
    %2103 = vmatprep.subr.mxu0 0.0
    %2104 = vmatpush1.xpose.msra.mxu0 0.0
    %2105 = vmatprep.subr.mxu0 0.0
    %2106 = vmatpush1.xpose.msra.mxu0 0.0
    %2107 = vmatprep.subr.mxu0 0.0
    %2108 = vmatpush1.xpose.msra.mxu0 0.0
    %2109 = vmatprep.subr.mxu0 0.0
    %2110 = vmatpush1.xpose.msra.mxu0 0.0
    %2111 = vmatprep.subr.mxu0 0.0
    %2112 = vmatpush1.xpose.msra.mxu0 0.0
    %2113 = vmatprep.subr.mxu0 0.0
    %2114 = vmatpush1.xpose.msra.mxu0 0.0
    %2115 = vmatprep.subr.mxu0 0.0
    %2116 = vmatpush1.xpose.msra.mxu0 0.0
    %2117 = vmatprep.subr.mxu0 0.0
    %2118 = vmatpush1.xpose.msra.mxu0 0.0
    %2119 = vmatprep.subr.mxu0 0.0
    %2120 = vmatpush1.xpose.msra.mxu0 0.0
    %2121 = vmatprep.subr.mxu0 0.0
    %2122 = vmatpush1.xpose.msra.mxu0 0.0
    %2123 = vmatprep.subr.mxu0 0.0
    %2124 = vmatpush1.xpose.msra.mxu0 0.0
    %2125 = vmatprep.mubr.f32.mxu0 0.0
    %2126 = vmatmul.mubr.f32.gmra.mrb[0].mxu0 %v2057
    %v2127 = vpop.f32.mrb[0].mxu0
    %v2128 = vadd.f32 0.0, %v2127
    %v2129 = vpop.f32.mrb[0].mxu0
    %2130 = vdwg.mxu0
    %v2131 = vsel %vm354, %v1792, 0
    %v2133 = vsel %vm354, %v1880, 0
    %2135 = vmatprep.subr.mxu0 0.0
    %2136 = vmatpush1.xpose.msra.mxu0 %v2133
    %2137 = vmatprep.subr.mxu0 0.0
    %2138 = vmatpush1.xpose.msra.mxu0 0.0
    %2139 = vmatprep.subr.mxu0 0.0
    %2140 = vmatpush1.xpose.msra.mxu0 0.0
    %2141 = vmatprep.subr.mxu0 0.0
    %2142 = vmatpush1.xpose.msra.mxu0 0.0
    %2143 = vmatprep.subr.mxu0 0.0
    %2144 = vmatpush1.xpose.msra.mxu0 0.0
    %2145 = vmatprep.subr.mxu0 0.0
    %2146 = vmatpush1.xpose.msra.mxu0 0.0
    %2147 = vmatprep.subr.mxu0 0.0
    %2148 = vmatpush1.xpose.msra.mxu0 0.0
    %2149 = vmatprep.subr.mxu0 0.0
    %2150 = vmatpush1.xpose.msra.mxu0 0.0
    %2151 = vmatprep.subr.mxu0 0.0
    %2152 = vmatpush1.xpose.msra.mxu0 0.0
    %2153 = vmatprep.subr.mxu0 0.0
    %2154 = vmatpush1.xpose.msra.mxu0 0.0
    %2155 = vmatprep.subr.mxu0 0.0
    %2156 = vmatpush1.xpose.msra.mxu0 0.0
    %2157 = vmatprep.subr.mxu0 0.0
    %2158 = vmatpush1.xpose.msra.mxu0 0.0
    %2159 = vmatprep.subr.mxu0 0.0
    %2160 = vmatpush1.xpose.msra.mxu0 0.0
    %2161 = vmatprep.subr.mxu0 0.0
    %2162 = vmatpush1.xpose.msra.mxu0 0.0
    %2163 = vmatprep.subr.mxu0 0.0
    %2164 = vmatpush1.xpose.msra.mxu0 0.0
    %2165 = vmatprep.subr.mxu0 0.0
    %2166 = vmatpush1.xpose.msra.mxu0 0.0
    %2167 = vmatprep.subr.mxu0 0.0
    %2168 = vmatpush1.xpose.msra.mxu0 0.0
    %2169 = vmatprep.subr.mxu0 0.0
    %2170 = vmatpush1.xpose.msra.mxu0 0.0
    %2171 = vmatprep.subr.mxu0 0.0
    %2172 = vmatpush1.xpose.msra.mxu0 0.0
    %2173 = vmatprep.subr.mxu0 0.0
    %2174 = vmatpush1.xpose.msra.mxu0 0.0
    %2175 = vmatprep.subr.mxu0 0.0
    %2176 = vmatpush1.xpose.msra.mxu0 0.0
    %2177 = vmatprep.subr.mxu0 0.0
    %2178 = vmatpush1.xpose.msra.mxu0 0.0
    %2179 = vmatprep.subr.mxu0 0.0
    %2180 = vmatpush1.xpose.msra.mxu0 0.0
    %2181 = vmatprep.subr.mxu0 0.0
    %2182 = vmatpush1.xpose.msra.mxu0 0.0
    %2183 = vmatprep.subr.mxu0 0.0
    %2184 = vmatpush1.xpose.msra.mxu0 0.0
    %2185 = vmatprep.subr.mxu0 0.0
    %2186 = vmatpush1.xpose.msra.mxu0 0.0
    %2187 = vmatprep.subr.mxu0 0.0
    %2188 = vmatpush1.xpose.msra.mxu0 0.0
    %2189 = vmatprep.subr.mxu0 0.0
    %2190 = vmatpush1.xpose.msra.mxu0 0.0
    %2191 = vmatprep.subr.mxu0 0.0
    %2192 = vmatpush1.xpose.msra.mxu0 0.0
    %2193 = vmatprep.subr.mxu0 0.0
    %2194 = vmatpush1.xpose.msra.mxu0 0.0
    %2195 = vmatprep.subr.mxu0 0.0
    %2196 = vmatpush1.xpose.msra.mxu0 0.0
    %2197 = vmatprep.subr.mxu0 0.0
    %2198 = vmatpush1.xpose.msra.mxu0 0.0
    %2199 = vmatprep.mubr.f32.mxu0 0.0
    %2200 = vmatmul.mubr.f32.gmra.mrb[0].mxu0 %v2131
    %v2201 = vpop.f32.mrb[0].mxu0
    %v2202 = vadd.f32 0.0, %v2201
    %v2203 = vpop.f32.mrb[0].mxu0
    %2204 = vdwg.mxu0
    %v2205 = vsel %vm354, %v1974, 0
    %v2207 = vsel %vm354, %v1978, 0
    %2209 = vmatprep.subr.mxu0 0.0
    %2210 = vmatpush1.xpose.msra.mxu0 %v2207
    %2211 = vmatprep.subr.mxu0 0.0
    %2212 = vmatpush1.xpose.msra.mxu0 0.0
    %2213 = vmatprep.subr.mxu0 0.0
    %2214 = vmatpush1.xpose.msra.mxu0 0.0
    %2215 = vmatprep.subr.mxu0 0.0
    %2216 = vmatpush1.xpose.msra.mxu0 0.0
    %2217 = vmatprep.subr.mxu0 0.0
    %2218 = vmatpush1.xpose.msra.mxu0 0.0
    %2219 = vmatprep.subr.mxu0 0.0
    %2220 = vmatpush1.xpose.msra.mxu0 0.0
    %2221 = vmatprep.subr.mxu0 0.0
    %2222 = vmatpush1.xpose.msra.mxu0 0.0
    %2223 = vmatprep.subr.mxu0 0.0
    %2224 = vmatpush1.xpose.msra.mxu0 0.0
    %2225 = vmatprep.subr.mxu0 0.0
    %2226 = vmatpush1.xpose.msra.mxu0 0.0
    %2227 = vmatprep.subr.mxu0 0.0
    %2228 = vmatpush1.xpose.msra.mxu0 0.0
    %2229 = vmatprep.subr.mxu0 0.0
    %2230 = vmatpush1.xpose.msra.mxu0 0.0
    %2231 = vmatprep.subr.mxu0 0.0
    %2232 = vmatpush1.xpose.msra.mxu0 0.0
    %2233 = vmatprep.subr.mxu0 0.0
    %2234 = vmatpush1.xpose.msra.mxu0 0.0
    %2235 = vmatprep.subr.mxu0 0.0
    %2236 = vmatpush1.xpose.msra.mxu0 0.0
    %2237 = vmatprep.subr.mxu0 0.0
    %2238 = vmatpush1.xpose.msra.mxu0 0.0
    %2239 = vmatprep.subr.mxu0 0.0
    %2240 = vmatpush1.xpose.msra.mxu0 0.0
    %2241 = vmatprep.subr.mxu0 0.0
    %2242 = vmatpush1.xpose.msra.mxu0 0.0
    %2243 = vmatprep.subr.mxu0 0.0
    %2244 = vmatpush1.xpose.msra.mxu0 0.0
    %2245 = vmatprep.subr.mxu0 0.0
    %2246 = vmatpush1.xpose.msra.mxu0 0.0
    %2247 = vmatprep.subr.mxu0 0.0
    %2248 = vmatpush1.xpose.msra.mxu0 0.0
    %2249 = vmatprep.subr.mxu0 0.0
    %2250 = vmatpush1.xpose.msra.mxu0 0.0
    %2251 = vmatprep.subr.mxu0 0.0
    %2252 = vmatpush1.xpose.msra.mxu0 0.0
    %2253 = vmatprep.subr.mxu0 0.0
    %2254 = vmatpush1.xpose.msra.mxu0 0.0
    %2255 = vmatprep.subr.mxu0 0.0
    %2256 = vmatpush1.xpose.msra.mxu0 0.0
    %2257 = vmatprep.subr.mxu0 0.0
    %2258 = vmatpush1.xpose.msra.mxu0 0.0
    %2259 = vmatprep.subr.mxu0 0.0
    %2260 = vmatpush1.xpose.msra.mxu0 0.0
    %2261 = vmatprep.subr.mxu0 0.0
    %2262 = vmatpush1.xpose.msra.mxu0 0.0
    %2263 = vmatprep.subr.mxu0 0.0
    %2264 = vmatpush1.xpose.msra.mxu0 0.0
    %2265 = vmatprep.subr.mxu0 0.0
    %2266 = vmatpush1.xpose.msra.mxu0 0.0
    %2267 = vmatprep.subr.mxu0 0.0
    %2268 = vmatpush1.xpose.msra.mxu0 0.0
    %2269 = vmatprep.subr.mxu0 0.0
    %2270 = vmatpush1.xpose.msra.mxu0 0.0
    %2271 = vmatprep.subr.mxu0 0.0
    %2272 = vmatpush1.xpose.msra.mxu0 0.0
    %2273 = vmatprep.mubr.f32.mxu0 0.0
    %2274 = vmatmul.mubr.f32.gmra.mrb[0].mxu0 %v2205
    %v2275 = vpop.f32.mrb[0].mxu0
    %v2276 = vadd.f32 0.0, %v2275
    %v2277 = vpop.f32.mrb[0].mxu0
    %2278 = vdwg.mxu0
    %v2279 = vsel %vm974, %v2054, -inf
    %2280 = vmax.xlane.f32.xlu0 %v2279
    %v2281 = vpop.xlane.xlu0 %2280
    %v2282 = vsel %vm974, %v2128, -inf
    %2283 = vmax.xlane.f32.xlu0 %v2282
    %v2284 = vpop.xlane.xlu0 %2283
    %v2285 = vsel %vm974, %v2202, -inf
    %2286 = vmax.xlane.f32.xlu0 %v2285
    %v2287 = vpop.xlane.xlu0 %2286
    %v2288 = vsel %vm974, %v2276, -inf
    %2289 = vmax.xlane.f32.xlu0 %v2288
    %v2290 = vpop.xlane.xlu0 %2289
    %v2291 = vsub.f32 %v2054, %v2281
    %v2292 = vsub.f32 %v2128, %v2284
    %v2293 = vsub.f32 %v2202, %v2287
    %v2294 = vsub.f32 %v2276, %v2290
    %v2295 = vmul.f32 %v2291, 1.442695
    %v2296 = vpow.pop %v2295
    %v2297 = vmul.f32 %v2292, 1.442695
    %v2298 = vpow.pop %v2297
    %v2299 = vmul.f32 %v2293, 1.442695
    %v2300 = vpow.pop %v2299
    %v2301 = vmul.f32 %v2294, 1.442695
    %v2302 = vpow.pop %v2301
    %v2303 = vsel %vm974, %v2296, 0.0
    %2304 = vadd.xlane.f32.xlu0 %v2303
    %v2305 = vpop.xlane.xlu0 %2304
    %v2306 = vsel %vm974, %v2298, 0.0
    %2307 = vadd.xlane.f32.xlu0 %v2306
    %v2308 = vpop.xlane.xlu0 %2307
    %v2309 = vsel %vm974, %v2300, 0.0
    %2310 = vadd.xlane.f32.xlu0 %v2309
    %v2311 = vpop.xlane.xlu0 %2310
    %v2312 = vsel %vm974, %v2302, 0.0
    %2313 = vadd.xlane.f32.xlu0 %v2312
    %v2314 = vpop.xlane.xlu0 %2313
    %v2315 = vrcp.pop %v2305
    %v2316 = vrcp.pop %v2308
    %v2317 = vrcp.pop %v2311
    %v2318 = vrcp.pop %v2314
    %v2319 = vmul.f32 %v2296, %v2315
    %v2320 = vmul.f32 %v2298, %v2316
    %v2321 = vmul.f32 %v2300, %v2317
    %v2322 = vmul.f32 %v2302, %v2318
    %v2324 = vsel %vm1019, %v2319, 0
    %v2326 = vsel %vm1023, %v1963, 0
    %2328 = vmatprep.subr.mxu0 0.0
    %2329 = vmatpush1.msra.mxu0 %v2326
    %2330 = vmatprep.subr.mxu0 0.0
    %2331 = vmatpush1.msra.mxu0 0.0
    %2332 = vmatprep.subr.mxu0 0.0
    %2333 = vmatpush1.msra.mxu0 0.0
    %2334 = vmatprep.subr.mxu0 0.0
    %2335 = vmatpush1.msra.mxu0 0.0
    %2336 = vmatprep.subr.mxu0 0.0
    %2337 = vmatpush1.msra.mxu0 0.0
    %2338 = vmatprep.subr.mxu0 0.0
    %2339 = vmatpush1.msra.mxu0 0.0
    %2340 = vmatprep.subr.mxu0 0.0
    %2341 = vmatpush1.msra.mxu0 0.0
    %2342 = vmatprep.subr.mxu0 0.0
    %2343 = vmatpush1.msra.mxu0 0.0
    %2344 = vmatprep.subr.mxu0 0.0
    %2345 = vmatpush1.msra.mxu0 0.0
    %2346 = vmatprep.subr.mxu0 0.0
    %2347 = vmatpush1.msra.mxu0 0.0
    %2348 = vmatprep.subr.mxu0 0.0
    %2349 = vmatpush1.msra.mxu0 0.0
    %2350 = vmatprep.subr.mxu0 0.0
    %2351 = vmatpush1.msra.mxu0 0.0
    %2352 = vmatprep.subr.mxu0 0.0
    %2353 = vmatpush1.msra.mxu0 0.0
    %2354 = vmatprep.subr.mxu0 0.0
    %2355 = vmatpush1.msra.mxu0 0.0
    %2356 = vmatprep.subr.mxu0 0.0
    %2357 = vmatpush1.msra.mxu0 0.0
    %2358 = vmatprep.subr.mxu0 0.0
    %2359 = vmatpush1.msra.mxu0 0.0
    %2360 = vmatprep.subr.mxu0 0.0
    %2361 = vmatpush1.msra.mxu0 0.0
    %2362 = vmatprep.subr.mxu0 0.0
    %2363 = vmatpush1.msra.mxu0 0.0
    %2364 = vmatprep.subr.mxu0 0.0
    %2365 = vmatpush1.msra.mxu0 0.0
    %2366 = vmatprep.subr.mxu0 0.0
    %2367 = vmatpush1.msra.mxu0 0.0
    %2368 = vmatprep.subr.mxu0 0.0
    %2369 = vmatpush1.msra.mxu0 0.0
    %2370 = vmatprep.subr.mxu0 0.0
    %2371 = vmatpush1.msra.mxu0 0.0
    %2372 = vmatprep.subr.mxu0 0.0
    %2373 = vmatpush1.msra.mxu0 0.0
    %2374 = vmatprep.subr.mxu0 0.0
    %2375 = vmatpush1.msra.mxu0 0.0
    %2376 = vmatprep.subr.mxu0 0.0
    %2377 = vmatpush1.msra.mxu0 0.0
    %2378 = vmatprep.subr.mxu0 0.0
    %2379 = vmatpush1.msra.mxu0 0.0
    %2380 = vmatprep.subr.mxu0 0.0
    %2381 = vmatpush1.msra.mxu0 0.0
    %2382 = vmatprep.subr.mxu0 0.0
    %2383 = vmatpush1.msra.mxu0 0.0
    %2384 = vmatprep.subr.mxu0 0.0
    %2385 = vmatpush1.msra.mxu0 0.0
    %2386 = vmatprep.subr.mxu0 0.0
    %2387 = vmatpush1.msra.mxu0 0.0
    %2388 = vmatprep.subr.mxu0 0.0
    %2389 = vmatpush1.msra.mxu0 0.0
    %2390 = vmatprep.subr.mxu0 0.0
    %2391 = vmatpush1.msra.mxu0 0.0
    %2392 = vmatprep.mubr.f32.mxu0 0.0
    %2393 = vmatmul.mubr.f32.gmra.mrb[0].mxu0 %v2324
    %v2394 = vpop.f32.mrb[0].mxu0
    %v2395 = vadd.f32 0.0, %v2394
    %v2396 = vpop.f32.mrb[0].mxu0
    %2397 = vdwg.mxu0
    %v2399 = vsel %vm1019, %v2320, 0
    %v2401 = vsel %vm1023, %v1981, 0
    %2403 = vmatprep.subr.mxu0 0.0
    %2404 = vmatpush1.msra.mxu0 %v2401
    %2405 = vmatprep.subr.mxu0 0.0
    %2406 = vmatpush1.msra.mxu0 0.0
    %2407 = vmatprep.subr.mxu0 0.0
    %2408 = vmatpush1.msra.mxu0 0.0
    %2409 = vmatprep.subr.mxu0 0.0
    %2410 = vmatpush1.msra.mxu0 0.0
    %2411 = vmatprep.subr.mxu0 0.0
    %2412 = vmatpush1.msra.mxu0 0.0
    %2413 = vmatprep.subr.mxu0 0.0
    %2414 = vmatpush1.msra.mxu0 0.0
    %2415 = vmatprep.subr.mxu0 0.0
    %2416 = vmatpush1.msra.mxu0 0.0
    %2417 = vmatprep.subr.mxu0 0.0
    %2418 = vmatpush1.msra.mxu0 0.0
    %2419 = vmatprep.subr.mxu0 0.0
    %2420 = vmatpush1.msra.mxu0 0.0
    %2421 = vmatprep.subr.mxu0 0.0
    %2422 = vmatpush1.msra.mxu0 0.0
    %2423 = vmatprep.subr.mxu0 0.0
    %2424 = vmatpush1.msra.mxu0 0.0
    %2425 = vmatprep.subr.mxu0 0.0
    %2426 = vmatpush1.msra.mxu0 0.0
    %2427 = vmatprep.subr.mxu0 0.0
    %2428 = vmatpush1.msra.mxu0 0.0
    %2429 = vmatprep.subr.mxu0 0.0
    %2430 = vmatpush1.msra.mxu0 0.0
    %2431 = vmatprep.subr.mxu0 0.0
    %2432 = vmatpush1.msra.mxu0 0.0
    %2433 = vmatprep.subr.mxu0 0.0
    %2434 = vmatpush1.msra.mxu0 0.0
    %2435 = vmatprep.subr.mxu0 0.0
    %2436 = vmatpush1.msra.mxu0 0.0
    %2437 = vmatprep.subr.mxu0 0.0
    %2438 = vmatpush1.msra.mxu0 0.0
    %2439 = vmatprep.subr.mxu0 0.0
    %2440 = vmatpush1.msra.mxu0 0.0
    %2441 = vmatprep.subr.mxu0 0.0
    %2442 = vmatpush1.msra.mxu0 0.0
    %2443 = vmatprep.subr.mxu0 0.0
    %2444 = vmatpush1.msra.mxu0 0.0
    %2445 = vmatprep.subr.mxu0 0.0
    %2446 = vmatpush1.msra.mxu0 0.0
    %2447 = vmatprep.subr.mxu0 0.0
    %2448 = vmatpush1.msra.mxu0 0.0
    %2449 = vmatprep.subr.mxu0 0.0
    %2450 = vmatpush1.msra.mxu0 0.0
    %2451 = vmatprep.subr.mxu0 0.0
    %2452 = vmatpush1.msra.mxu0 0.0
    %2453 = vmatprep.subr.mxu0 0.0
    %2454 = vmatpush1.msra.mxu0 0.0
    %2455 = vmatprep.subr.mxu0 0.0
    %2456 = vmatpush1.msra.mxu0 0.0
    %2457 = vmatprep.subr.mxu0 0.0
    %2458 = vmatpush1.msra.mxu0 0.0
    %2459 = vmatprep.subr.mxu0 0.0
    %2460 = vmatpush1.msra.mxu0 0.0
    %2461 = vmatprep.subr.mxu0 0.0
    %2462 = vmatpush1.msra.mxu0 0.0
    %2463 = vmatprep.subr.mxu0 0.0
    %2464 = vmatpush1.msra.mxu0 0.0
    %2465 = vmatprep.subr.mxu0 0.0
    %2466 = vmatpush1.msra.mxu0 0.0
    %2467 = vmatprep.mubr.f32.mxu0 0.0
    %2468 = vmatmul.mubr.f32.gmra.mrb[0].mxu0 %v2399
    %v2469 = vpop.f32.mrb[0].mxu0
    %v2470 = vadd.f32 0.0, %v2469
    %v2471 = vpop.f32.mrb[0].mxu0
    %2472 = vdwg.mxu0
    %v2474 = vsel %vm1019, %v2321, 0
    %v2476 = vsel %vm1023, %v1968, 0
    %2478 = vmatprep.subr.mxu0 0.0
    %2479 = vmatpush1.msra.mxu0 %v2476
    %2480 = vmatprep.subr.mxu0 0.0
    %2481 = vmatpush1.msra.mxu0 0.0
    %2482 = vmatprep.subr.mxu0 0.0
    %2483 = vmatpush1.msra.mxu0 0.0
    %2484 = vmatprep.subr.mxu0 0.0
    %2485 = vmatpush1.msra.mxu0 0.0
    %2486 = vmatprep.subr.mxu0 0.0
    %2487 = vmatpush1.msra.mxu0 0.0
    %2488 = vmatprep.subr.mxu0 0.0
    %2489 = vmatpush1.msra.mxu0 0.0
    %2490 = vmatprep.subr.mxu0 0.0
    %2491 = vmatpush1.msra.mxu0 0.0
    %2492 = vmatprep.subr.mxu0 0.0
    %2493 = vmatpush1.msra.mxu0 0.0
    %2494 = vmatprep.subr.mxu0 0.0
    %2495 = vmatpush1.msra.mxu0 0.0
    %2496 = vmatprep.subr.mxu0 0.0
    %2497 = vmatpush1.msra.mxu0 0.0
    %2498 = vmatprep.subr.mxu0 0.0
    %2499 = vmatpush1.msra.mxu0 0.0
    %2500 = vmatprep.subr.mxu0 0.0
    %2501 = vmatpush1.msra.mxu0 0.0
    %2502 = vmatprep.subr.mxu0 0.0
    %2503 = vmatpush1.msra.mxu0 0.0
    %2504 = vmatprep.subr.mxu0 0.0
    %2505 = vmatpush1.msra.mxu0 0.0
    %2506 = vmatprep.subr.mxu0 0.0
    %2507 = vmatpush1.msra.mxu0 0.0
    %2508 = vmatprep.subr.mxu0 0.0
    %2509 = vmatpush1.msra.mxu0 0.0
    %2510 = vmatprep.subr.mxu0 0.0
    %2511 = vmatpush1.msra.mxu0 0.0
    %2512 = vmatprep.subr.mxu0 0.0
    %2513 = vmatpush1.msra.mxu0 0.0
    %2514 = vmatprep.subr.mxu0 0.0
    %2515 = vmatpush1.msra.mxu0 0.0
    %2516 = vmatprep.subr.mxu0 0.0
    %2517 = vmatpush1.msra.mxu0 0.0
    %2518 = vmatprep.subr.mxu0 0.0
    %2519 = vmatpush1.msra.mxu0 0.0
    %2520 = vmatprep.subr.mxu0 0.0
    %2521 = vmatpush1.msra.mxu0 0.0
    %2522 = vmatprep.subr.mxu0 0.0
    %2523 = vmatpush1.msra.mxu0 0.0
    %2524 = vmatprep.subr.mxu0 0.0
    %2525 = vmatpush1.msra.mxu0 0.0
    %2526 = vmatprep.subr.mxu0 0.0
    %2527 = vmatpush1.msra.mxu0 0.0
    %2528 = vmatprep.subr.mxu0 0.0
    %2529 = vmatpush1.msra.mxu0 0.0
    %2530 = vmatprep.subr.mxu0 0.0
    %2531 = vmatpush1.msra.mxu0 0.0
    %2532 = vmatprep.subr.mxu0 0.0
    %2533 = vmatpush1.msra.mxu0 0.0
    %2534 = vmatprep.subr.mxu0 0.0
    %2535 = vmatpush1.msra.mxu0 0.0
    %2536 = vmatprep.subr.mxu0 0.0
    %2537 = vmatpush1.msra.mxu0 0.0
    %2538 = vmatprep.subr.mxu0 0.0
    %2539 = vmatpush1.msra.mxu0 0.0
    %2540 = vmatprep.subr.mxu0 0.0
    %2541 = vmatpush1.msra.mxu0 0.0
    %2542 = vmatprep.mubr.f32.mxu0 0.0
    %2543 = vmatmul.mubr.f32.gmra.mrb[0].mxu0 %v2474
    %v2544 = vpop.f32.mrb[0].mxu0
    %v2545 = vadd.f32 0.0, %v2544
    %v2546 = vpop.f32.mrb[0].mxu0
    %2547 = vdwg.mxu0
    %v2549 = vsel %vm1019, %v2322, 0
    %v2551 = vsel %vm1023, %v1982, 0
    %2553 = vmatprep.subr.mxu0 0.0
    %2554 = vmatpush1.msra.mxu0 %v2551
    %2555 = vmatprep.subr.mxu0 0.0
    %2556 = vmatpush1.msra.mxu0 0.0
    %2557 = vmatprep.subr.mxu0 0.0
    %2558 = vmatpush1.msra.mxu0 0.0
    %2559 = vmatprep.subr.mxu0 0.0
    %2560 = vmatpush1.msra.mxu0 0.0
    %2561 = vmatprep.subr.mxu0 0.0
    %2562 = vmatpush1.msra.mxu0 0.0
    %2563 = vmatprep.subr.mxu0 0.0
    %2564 = vmatpush1.msra.mxu0 0.0
    %2565 = vmatprep.subr.mxu0 0.0
    %2566 = vmatpush1.msra.mxu0 0.0
    %2567 = vmatprep.subr.mxu0 0.0
    %2568 = vmatpush1.msra.mxu0 0.0
    %2569 = vmatprep.subr.mxu0 0.0
    %2570 = vmatpush1.msra.mxu0 0.0
    %2571 = vmatprep.subr.mxu0 0.0
    %2572 = vmatpush1.msra.mxu0 0.0
    %2573 = vmatprep.subr.mxu0 0.0
    %2574 = vmatpush1.msra.mxu0 0.0
    %2575 = vmatprep.subr.mxu0 0.0
    %2576 = vmatpush1.msra.mxu0 0.0
    %2577 = vmatprep.subr.mxu0 0.0
    %2578 = vmatpush1.msra.mxu0 0.0
    %2579 = vmatprep.subr.mxu0 0.0
    %2580 = vmatpush1.msra.mxu0 0.0
    %2581 = vmatprep.subr.mxu0 0.0
    %2582 = vmatpush1.msra.mxu0 0.0
    %2583 = vmatprep.subr.mxu0 0.0
    %2584 = vmatpush1.msra.mxu0 0.0
    %2585 = vmatprep.subr.mxu0 0.0
    %2586 = vmatpush1.msra.mxu0 0.0
    %2587 = vmatprep.subr.mxu0 0.0
    %2588 = vmatpush1.msra.mxu0 0.0
    %2589 = vmatprep.subr.mxu0 0.0
    %2590 = vmatpush1.msra.mxu0 0.0
    %2591 = vmatprep.subr.mxu0 0.0
    %2592 = vmatpush1.msra.mxu0 0.0
    %2593 = vmatprep.subr.mxu0 0.0
    %2594 = vmatpush1.msra.mxu0 0.0
    %2595 = vmatprep.subr.mxu0 0.0
    %2596 = vmatpush1.msra.mxu0 0.0
    %2597 = vmatprep.subr.mxu0 0.0
    %2598 = vmatpush1.msra.mxu0 0.0
    %2599 = vmatprep.subr.mxu0 0.0
    %2600 = vmatpush1.msra.mxu0 0.0
    %2601 = vmatprep.subr.mxu0 0.0
    %2602 = vmatpush1.msra.mxu0 0.0
    %2603 = vmatprep.subr.mxu0 0.0
    %2604 = vmatpush1.msra.mxu0 0.0
    %2605 = vmatprep.subr.mxu0 0.0
    %2606 = vmatpush1.msra.mxu0 0.0
    %2607 = vmatprep.subr.mxu0 0.0
    %2608 = vmatpush1.msra.mxu0 0.0
    %2609 = vmatprep.subr.mxu0 0.0
    %2610 = vmatpush1.msra.mxu0 0.0
    %2611 = vmatprep.subr.mxu0 0.0
    %2612 = vmatpush1.msra.mxu0 0.0
    %2613 = vmatprep.subr.mxu0 0.0
    %2614 = vmatpush1.msra.mxu0 0.0
    %2615 = vmatprep.subr.mxu0 0.0
    %2616 = vmatpush1.msra.mxu0 0.0
    %2617 = vmatprep.mubr.f32.mxu0 0.0
    %2618 = vmatmul.mubr.f32.gmra.mrb[0].mxu0 %v2549
    %v2619 = vpop.f32.mrb[0].mxu0
    %v2620 = vadd.f32 0.0, %v2619
    %v2621 = vpop.f32.mrb[0].mxu0
    %2622 = vdwg.mxu0
    %s2623 = scalar_lea.vmem [#allocation16], 32
    %v2624 = vld [vmem:[%s2623] sm:$0xff]
    %v2625 = vld [vmem:[%s2623 + $0x8] sm:$0xff]
    %v2626 = vld [vmem:[%s2623 + $0x10] sm:$0xff]
    %v2627 = vld [vmem:[%s2623 + $0x18] sm:$0xff]
    %v2632 = vcombine.low %v2395, %v2470
    %v2633 = vcombine.low %v2545, %v2620
    %v2634 = vsel %vm354, %v2632, 0
    %v2636 = vsel %vm354, %v2633, 0
    %2638 = vmatprep.subr.mxu0 0.0
    %2639 = vmatpush1.msra.mxu0 %v2624
    %2640 = vmatprep.subr.mxu0 0.0
    %2641 = vmatpush1.msra.mxu0 %v2625
    %2642 = vmatprep.subr.mxu0 0.0
    %2643 = vmatpush1.msra.mxu0 %v2626
    %2644 = vmatprep.subr.mxu0 0.0
    %2645 = vmatpush1.msra.mxu0 %v2627
    %2646 = vmatprep.subr.mxu0 0.0
    %2647 = vmatpush1.msra.mxu0 0.0
    %2648 = vmatprep.subr.mxu0 0.0
    %2649 = vmatpush1.msra.mxu0 0.0
    %2650 = vmatprep.subr.mxu0 0.0
    %2651 = vmatpush1.msra.mxu0 0.0
    %2652 = vmatprep.subr.mxu0 0.0
    %2653 = vmatpush1.msra.mxu0 0.0
    %2654 = vmatprep.subr.mxu0 0.0
    %2655 = vmatpush1.msra.mxu0 0.0
    %2656 = vmatprep.subr.mxu0 0.0
    %2657 = vmatpush1.msra.mxu0 0.0
    %2658 = vmatprep.subr.mxu0 0.0
    %2659 = vmatpush1.msra.mxu0 0.0
    %2660 = vmatprep.subr.mxu0 0.0
    %2661 = vmatpush1.msra.mxu0 0.0
    %2662 = vmatprep.subr.mxu0 0.0
    %2663 = vmatpush1.msra.mxu0 0.0
    %2664 = vmatprep.subr.mxu0 0.0
    %2665 = vmatpush1.msra.mxu0 0.0
    %2666 = vmatprep.subr.mxu0 0.0
    %2667 = vmatpush1.msra.mxu0 0.0
    %2668 = vmatprep.subr.mxu0 0.0
    %2669 = vmatpush1.msra.mxu0 0.0
    %2670 = vmatprep.subr.mxu0 0.0
    %2671 = vmatpush1.msra.mxu0 0.0
    %2672 = vmatprep.subr.mxu0 0.0
    %2673 = vmatpush1.msra.mxu0 0.0
    %2674 = vmatprep.subr.mxu0 0.0
    %2675 = vmatpush1.msra.mxu0 0.0
    %2676 = vmatprep.subr.mxu0 0.0
    %2677 = vmatpush1.msra.mxu0 0.0
    %2678 = vmatprep.subr.mxu0 0.0
    %2679 = vmatpush1.msra.mxu0 0.0
    %2680 = vmatprep.subr.mxu0 0.0
    %2681 = vmatpush1.msra.mxu0 0.0
    %2682 = vmatprep.subr.mxu0 0.0
    %2683 = vmatpush1.msra.mxu0 0.0
    %2684 = vmatprep.subr.mxu0 0.0
    %2685 = vmatpush1.msra.mxu0 0.0
    %2686 = vmatprep.subr.mxu0 0.0
    %2687 = vmatpush1.msra.mxu0 0.0
    %2688 = vmatprep.subr.mxu0 0.0
    %2689 = vmatpush1.msra.mxu0 0.0
    %2690 = vmatprep.subr.mxu0 0.0
    %2691 = vmatpush1.msra.mxu0 0.0
    %2692 = vmatprep.subr.mxu0 0.0
    %2693 = vmatpush1.msra.mxu0 0.0
    %2694 = vmatprep.subr.mxu0 0.0
    %2695 = vmatpush1.msra.mxu0 0.0
    %2696 = vmatprep.subr.mxu0 0.0
    %2697 = vmatpush1.msra.mxu0 0.0
    %2698 = vmatprep.subr.mxu0 0.0
    %2699 = vmatpush1.msra.mxu0 0.0
    %2700 = vmatprep.subr.mxu0 0.0
    %2701 = vmatpush1.msra.mxu0 0.0
    %2702 = vmatprep.mubr.f32.mxu0 0.0
    %2703 = vmatmul.mubr.f32.gmra.mrb[0].mxu0 %v2634
    %v2704 = vpop.f32.mrb[0].mxu0
    %v2705 = vadd.f32 0.0, %v2704
    %v2706 = vpop.f32.mrb[0].mxu0
    %2707 = vmatprep.mubr.f32.mxu0 0.0
    %2708 = vmatmul.mubr.f32.gmra.mrb[0].mxu0 %v2636
    %v2709 = vpop.f32.mrb[0].mxu0
    %v2710 = vadd.f32 0.0, %v2709
    %v2711 = vpop.f32.mrb[0].mxu0
    %2712 = vdwg.mxu0
    %v2713 = vadd.f32 %v1653, %v2705
    %v2714 = vadd.f32 %v1654, %v2710
    %s2715 = scalar_lea.vmem [#allocation17], 1
    %v2716 = vld [vmem:[%s2715] sm:$0x1]
    %v2718 = vlaneseq
    %v2719 = vshrl.u32 %v2718, 7
    %v2720 = vsub.s32 0, %v2719
    %v2721 = vrot.slane %v2716, %v2720
    %v2723 = vadd.f32 %v2713, %v2721
    %v2724 = vadd.f32 %v2714, %v2721
    %s2725 = scalar_lea.vmem [#allocation19], 1
    %v2726 = vld [vmem:[%s2725] sm:$0x1]
    %s2727 = scalar_lea.vmem [#allocation20], 1
    %v2728 = vld [vmem:[%s2727] sm:$0x1]
    %v2729 = vsel %vm354, %v2723, 0.0
    %2730 = vadd.xlane.f32.xlu0 %v2729
    %v2731 = vpop.xlane.xlu0 %2730
    %v2732 = vsel %vm354, %v2724, 0.0
    %2733 = vadd.xlane.f32.xlu0 %v2732
    %v2734 = vpop.xlane.xlu0 %2733
    %v2735 = vmul.f32 %v2731, %v361
    %v2736 = vmul.f32 %v2734, %v361
    %v2737 = vsub.f32 %v2723, %v2735
    %v2738 = vsub.f32 %v2724, %v2736
    %v2739 = vmul.f32 %v2737, %v2737
    %v2740 = vmul.f32 %v2738, %v2738
    %v2741 = vsel %vm354, %v2739, 0.0
    %2742 = vadd.xlane.f32.xlu0 %v2741
    %v2743 = vpop.xlane.xlu0 %2742
    %v2744 = vsel %vm354, %v2740, 0.0
    %2745 = vadd.xlane.f32.xlu0 %v2744
    %v2746 = vpop.xlane.xlu0 %2745
    %v2747 = vmul.f32 %v2743, %v361
    %v2748 = vmul.f32 %v2746, %v361
    %v2749 = vadd.f32 %v2747, 1e-05
    %v2750 = vadd.f32 %v2748, 1e-05
    %v2751 = vrsqrt.pop %v2749
    %v2752 = vrsqrt.pop %v2750
    %v2753 = vmul.f32 %v2737, %v2751
    %v2754 = vmul.f32 %v2738, %v2752
    %v2756 = vlaneseq
    %v2757 = vshrl.u32 %v2756, 7
    %v2758 = vsub.s32 0, %v2757
    %v2759 = vrot.slane %v2726, %v2758
    %v2761 = vmul.f32 %v2753, %v2759
    %v2762 = vmul.f32 %v2754, %v2759
    %v2764 = vlaneseq
    %v2765 = vshrl.u32 %v2764, 7
    %v2766 = vsub.s32 0, %v2765
    %v2767 = vrot.slane %v2728, %v2766
    %v2769 = vadd.f32 %v2761, %v2767
    %v2770 = vadd.f32 %v2762, %v2767
    %s2771 = scalar_lea.vmem [#allocation22], 32
    %v2772 = vld [vmem:[%s2771] sm:$0xff]
    %v2773 = vld [vmem:[%s2771 + $0x8] sm:$0xff]
    %v2774 = vld [vmem:[%s2771 + $0x10] sm:$0xff]
    %v2775 = vld [vmem:[%s2771 + $0x18] sm:$0xff]
    %s2776 = scalar_lea.vmem [#allocation23], 1
    %v2777 = vld [vmem:[%s2776] sm:$0x1]
    %v2779 = vlaneseq
    %v2780 = vshrl.u32 %v2779, 7
    %v2781 = vsub.s32 0, %v2780
    %v2782 = vrot.slane %v2777, %v2781
    %v2785 = vsel %vm354, %v2769, 0
    %v2788 = vsel %vm354, %v2770, 0
    %2790 = vmatprep.subr.mxu0 0.0
    %2791 = vmatpush1.msra.mxu0 %v2772
    %2792 = vmatprep.subr.mxu0 0.0
    %2793 = vmatpush1.msra.mxu0 %v2773
    %2794 = vmatprep.subr.mxu0 0.0
    %2795 = vmatpush1.msra.mxu0 %v2774
    %2796 = vmatprep.subr.mxu0 0.0
    %2797 = vmatpush1.msra.mxu0 %v2775
    %2798 = vmatprep.subr.mxu0 0.0
    %2799 = vmatpush1.msra.mxu0 0.0
    %2800 = vmatprep.subr.mxu0 0.0
    %2801 = vmatpush1.msra.mxu0 0.0
    %2802 = vmatprep.subr.mxu0 0.0
    %2803 = vmatpush1.msra.mxu0 0.0
    %2804 = vmatprep.subr.mxu0 0.0
    %2805 = vmatpush1.msra.mxu0 0.0
    %2806 = vmatprep.subr.mxu0 0.0
    %2807 = vmatpush1.msra.mxu0 0.0
    %2808 = vmatprep.subr.mxu0 0.0
    %2809 = vmatpush1.msra.mxu0 0.0
    %2810 = vmatprep.subr.mxu0 0.0
    %2811 = vmatpush1.msra.mxu0 0.0
    %2812 = vmatprep.subr.mxu0 0.0
    %2813 = vmatpush1.msra.mxu0 0.0
    %2814 = vmatprep.subr.mxu0 0.0
    %2815 = vmatpush1.msra.mxu0 0.0
    %2816 = vmatprep.subr.mxu0 0.0
    %2817 = vmatpush1.msra.mxu0 0.0
    %2818 = vmatprep.subr.mxu0 0.0
    %2819 = vmatpush1.msra.mxu0 0.0
    %2820 = vmatprep.subr.mxu0 0.0
    %2821 = vmatpush1.msra.mxu0 0.0
    %2822 = vmatprep.subr.mxu0 0.0
    %2823 = vmatpush1.msra.mxu0 0.0
    %2824 = vmatprep.subr.mxu0 0.0
    %2825 = vmatpush1.msra.mxu0 0.0
    %2826 = vmatprep.subr.mxu0 0.0
    %2827 = vmatpush1.msra.mxu0 0.0
    %2828 = vmatprep.subr.mxu0 0.0
    %2829 = vmatpush1.msra.mxu0 0.0
    %2830 = vmatprep.subr.mxu0 0.0
    %2831 = vmatpush1.msra.mxu0 0.0
    %2832 = vmatprep.subr.mxu0 0.0
    %2833 = vmatpush1.msra.mxu0 0.0
    %2834 = vmatprep.subr.mxu0 0.0
    %2835 = vmatpush1.msra.mxu0 0.0
    %2836 = vmatprep.subr.mxu0 0.0
    %2837 = vmatpush1.msra.mxu0 0.0
    %2838 = vmatprep.subr.mxu0 0.0
    %2839 = vmatpush1.msra.mxu0 0.0
    %2840 = vmatprep.subr.mxu0 0.0
    %2841 = vmatpush1.msra.mxu0 0.0
    %2842 = vmatprep.subr.mxu0 0.0
    %2843 = vmatpush1.msra.mxu0 0.0
    %2844 = vmatprep.subr.mxu0 0.0
    %2845 = vmatpush1.msra.mxu0 0.0
    %2846 = vmatprep.subr.mxu0 0.0
    %2847 = vmatpush1.msra.mxu0 0.0
    %2848 = vmatprep.subr.mxu0 0.0
    %2849 = vmatpush1.msra.mxu0 0.0
    %2850 = vmatprep.subr.mxu0 0.0
    %2851 = vmatpush1.msra.mxu0 0.0
    %2852 = vmatprep.subr.mxu0 0.0
    %2853 = vmatpush1.msra.mxu0 0.0
    %2854 = vmatprep.mubr.f32.mxu0 0.0
    %2855 = vmatmul.mubr.f32.gmra.mrb[0].mxu0 %v2785
    %v2856 = vpop.f32.mrb[0].mxu0
    %v2857 = vadd.f32 %v2782, %v2856
    %v2858 = vpop.f32.mrb[0].mxu0
    %2859 = vmatprep.mubr.f32.mxu0 0.0
    %2860 = vmatmul.mubr.f32.gmra.mrb[0].mxu0 %v2788
    %v2861 = vpop.f32.mrb[0].mxu0
    %v2862 = vadd.f32 %v2782, %v2861
    %v2863 = vpop.f32.mrb[0].mxu0
    %2864 = vdwg.mxu0
    %v2865 = vmax.f32 %v2857, 0.0
    %v2866 = vmax.f32 %v2862, 0.0
    %s2867 = scalar_lea.vmem %s14, 32
    %v2868 = vld [vmem:[%s2867] sm:$0xff]
    %v2869 = vld [vmem:[%s2867 + $0x8] sm:$0xff]
    %v2870 = vld [vmem:[%s2867 + $0x10] sm:$0xff]
    %v2871 = vld [vmem:[%s2867 + $0x18] sm:$0xff]
    %v2873 = vsel %vm354, %v2865, 0
    %v2876 = vsel %vm354, %v2866, 0
    %2878 = vmatprep.subr.mxu0 0.0
    %2879 = vmatpush1.msra.mxu0 %v2868
    %2880 = vmatprep.subr.mxu0 0.0
    %2881 = vmatpush1.msra.mxu0 %v2869
    %2882 = vmatprep.subr.mxu0 0.0
    %2883 = vmatpush1.msra.mxu0 %v2870
    %2884 = vmatprep.subr.mxu0 0.0
    %2885 = vmatpush1.msra.mxu0 %v2871
    %2886 = vmatprep.subr.mxu0 0.0
    %2887 = vmatpush1.msra.mxu0 0.0
    %2888 = vmatprep.subr.mxu0 0.0
    %2889 = vmatpush1.msra.mxu0 0.0
    %2890 = vmatprep.subr.mxu0 0.0
    %2891 = vmatpush1.msra.mxu0 0.0
    %2892 = vmatprep.subr.mxu0 0.0
    %2893 = vmatpush1.msra.mxu0 0.0
    %2894 = vmatprep.subr.mxu0 0.0
    %2895 = vmatpush1.msra.mxu0 0.0
    %2896 = vmatprep.subr.mxu0 0.0
    %2897 = vmatpush1.msra.mxu0 0.0
    %2898 = vmatprep.subr.mxu0 0.0
    %2899 = vmatpush1.msra.mxu0 0.0
    %2900 = vmatprep.subr.mxu0 0.0
    %2901 = vmatpush1.msra.mxu0 0.0
    %2902 = vmatprep.subr.mxu0 0.0
    %2903 = vmatpush1.msra.mxu0 0.0
    %2904 = vmatprep.subr.mxu0 0.0
    %2905 = vmatpush1.msra.mxu0 0.0
    %2906 = vmatprep.subr.mxu0 0.0
    %2907 = vmatpush1.msra.mxu0 0.0
    %2908 = vmatprep.subr.mxu0 0.0
    %2909 = vmatpush1.msra.mxu0 0.0
    %2910 = vmatprep.subr.mxu0 0.0
    %2911 = vmatpush1.msra.mxu0 0.0
    %2912 = vmatprep.subr.mxu0 0.0
    %2913 = vmatpush1.msra.mxu0 0.0
    %2914 = vmatprep.subr.mxu0 0.0
    %2915 = vmatpush1.msra.mxu0 0.0
    %2916 = vmatprep.subr.mxu0 0.0
    %2917 = vmatpush1.msra.mxu0 0.0
    %2918 = vmatprep.subr.mxu0 0.0
    %2919 = vmatpush1.msra.mxu0 0.0
    %2920 = vmatprep.subr.mxu0 0.0
    %2921 = vmatpush1.msra.mxu0 0.0
    %2922 = vmatprep.subr.mxu0 0.0
    %2923 = vmatpush1.msra.mxu0 0.0
    %2924 = vmatprep.subr.mxu0 0.0
    %2925 = vmatpush1.msra.mxu0 0.0
    %2926 = vmatprep.subr.mxu0 0.0
    %2927 = vmatpush1.msra.mxu0 0.0
    %2928 = vmatprep.subr.mxu0 0.0
    %2929 = vmatpush1.msra.mxu0 0.0
    %2930 = vmatprep.subr.mxu0 0.0
    %2931 = vmatpush1.msra.mxu0 0.0
    %2932 = vmatprep.subr.mxu0 0.0
    %2933 = vmatpush1.msra.mxu0 0.0
    %2934 = vmatprep.subr.mxu0 0.0
    %2935 = vmatpush1.msra.mxu0 0.0
    %2936 = vmatprep.subr.mxu0 0.0
    %2937 = vmatpush1.msra.mxu0 0.0
    %2938 = vmatprep.subr.mxu0 0.0
    %2939 = vmatpush1.msra.mxu0 0.0
    %2940 = vmatprep.subr.mxu0 0.0
    %2941 = vmatpush1.msra.mxu0 0.0
    %2942 = vmatprep.mubr.f32.mxu0 0.0
    %2943 = vmatmul.mubr.f32.gmra.mrb[0].mxu0 %v2873
    %v2944 = vpop.f32.mrb[0].mxu0
    %v2945 = vadd.f32 0.0, %v2944
    %v2946 = vpop.f32.mrb[0].mxu0
    %2947 = vmatprep.mubr.f32.mxu0 0.0
    %2948 = vmatmul.mubr.f32.gmra.mrb[0].mxu0 %v2876
    %v2949 = vpop.f32.mrb[0].mxu0
    %v2950 = vadd.f32 0.0, %v2949
    %v2951 = vpop.f32.mrb[0].mxu0
    %2952 = vdwg.mxu0
    %v2953 = vadd.f32 %v2723, %v2945
    %v2954 = vadd.f32 %v2724, %v2950
    %s2955 = scalar_lea.vmem [#allocation25], 1
    %v2956 = vld [vmem:[%s2955] sm:$0x1]
    %v2958 = vlaneseq
    %v2959 = vshrl.u32 %v2958, 7
    %v2960 = vsub.s32 0, %v2959
    %v2961 = vrot.slane %v2956, %v2960
    %v2963 = vadd.f32 %v2953, %v2961
    %v2964 = vadd.f32 %v2954, %v2961
    %v2965 = vsel %vm354, %v2963, 0.0
    %2966 = vadd.xlane.f32.xlu0 %v2965
    %v2967 = vpop.xlane.xlu0 %2966
    %v2968 = vsel %vm354, %v2964, 0.0
    %2969 = vadd.xlane.f32.xlu0 %v2968
    %v2970 = vpop.xlane.xlu0 %2969
    %v2971 = vmul.f32 %v2967, %v361
    %v2972 = vmul.f32 %v2970, %v361
    %v2973 = vld [vmem:[%s16] sm:$0xff]
    %v2974 = vld [vmem:[%s17] sm:$0x1]
    %v2976 = vlaneseq
    %v2977 = vshrl.u32 %v2976, 7
    %v2978 = vsub.s32 0, %v2977
    %v2979 = vrot.slane %v2974, %v2978
    %v2983 = vlaneseq
    %v2984 = vand.u32 %v2983, 127
    %v2985 = vlaneseq
    %v2986 = vshrl.u32 %v2985, 7
    %v2987 = vsub.s32 %v2984, %v2986
    %v2988 = vrot.slane %v2971, %v2987
    %v2989 = vlaneseq
    %v2990 = vshrl.u32 %v2989, 7
    %v2991 = vsub.s32 %v2984, %v2990
    %v2992 = vrot.slane %v2972, %v2991
    %vm2993 = vcmask 1041409
    %v2994 = vsel %vm2993, %v2992, %v2988
    %v2995 = vsel %vm267, %v2994, 0
    %2997 = vmatprep.subr.mxu0 0.0
    %2998 = vmatpush1.msra.mxu0 %v2973
    %2999 = vmatprep.subr.mxu0 0.0
    %3000 = vmatpush1.msra.mxu0 0.0
    %3001 = vmatprep.subr.mxu0 0.0
    %3002 = vmatpush1.msra.mxu0 0.0
    %3003 = vmatprep.subr.mxu0 0.0
    %3004 = vmatpush1.msra.mxu0 0.0
    %3005 = vmatprep.subr.mxu0 0.0
    %3006 = vmatpush1.msra.mxu0 0.0
    %3007 = vmatprep.subr.mxu0 0.0
    %3008 = vmatpush1.msra.mxu0 0.0
    %3009 = vmatprep.subr.mxu0 0.0
    %3010 = vmatpush1.msra.mxu0 0.0
    %3011 = vmatprep.subr.mxu0 0.0
    %3012 = vmatpush1.msra.mxu0 0.0
    %3013 = vmatprep.subr.mxu0 0.0
    %3014 = vmatpush1.msra.mxu0 0.0
    %3015 = vmatprep.subr.mxu0 0.0
    %3016 = vmatpush1.msra.mxu0 0.0
    %3017 = vmatprep.subr.mxu0 0.0
    %3018 = vmatpush1.msra.mxu0 0.0
    %3019 = vmatprep.subr.mxu0 0.0
    %3020 = vmatpush1.msra.mxu0 0.0
    %3021 = vmatprep.subr.mxu0 0.0
    %3022 = vmatpush1.msra.mxu0 0.0
    %3023 = vmatprep.subr.mxu0 0.0
    %3024 = vmatpush1.msra.mxu0 0.0
    %3025 = vmatprep.subr.mxu0 0.0
    %3026 = vmatpush1.msra.mxu0 0.0
    %3027 = vmatprep.subr.mxu0 0.0
    %3028 = vmatpush1.msra.mxu0 0.0
    %3029 = vmatprep.subr.mxu0 0.0
    %3030 = vmatpush1.msra.mxu0 0.0
    %3031 = vmatprep.subr.mxu0 0.0
    %3032 = vmatpush1.msra.mxu0 0.0
    %3033 = vmatprep.subr.mxu0 0.0
    %3034 = vmatpush1.msra.mxu0 0.0
    %3035 = vmatprep.subr.mxu0 0.0
    %3036 = vmatpush1.msra.mxu0 0.0
    %3037 = vmatprep.subr.mxu0 0.0
    %3038 = vmatpush1.msra.mxu0 0.0
    %3039 = vmatprep.subr.mxu0 0.0
    %3040 = vmatpush1.msra.mxu0 0.0
    %3041 = vmatprep.subr.mxu0 0.0
    %3042 = vmatpush1.msra.mxu0 0.0
    %3043 = vmatprep.subr.mxu0 0.0
    %3044 = vmatpush1.msra.mxu0 0.0
    %3045 = vmatprep.subr.mxu0 0.0
    %3046 = vmatpush1.msra.mxu0 0.0
    %3047 = vmatprep.subr.mxu0 0.0
    %3048 = vmatpush1.msra.mxu0 0.0
    %3049 = vmatprep.subr.mxu0 0.0
    %3050 = vmatpush1.msra.mxu0 0.0
    %3051 = vmatprep.subr.mxu0 0.0
    %3052 = vmatpush1.msra.mxu0 0.0
    %3053 = vmatprep.subr.mxu0 0.0
    %3054 = vmatpush1.msra.mxu0 0.0
    %3055 = vmatprep.subr.mxu0 0.0
    %3056 = vmatpush1.msra.mxu0 0.0
    %3057 = vmatprep.subr.mxu0 0.0
    %3058 = vmatpush1.msra.mxu0 0.0
    %3059 = vmatprep.subr.mxu0 0.0
    %3060 = vmatpush1.msra.mxu0 0.0
    %3061 = vmatprep.mubr.f32.mxu0 0.0
    %3062 = vmatmul.mubr.f32.gmra.mrb[0].mxu0 %v2995
    %v3063 = vpop.f32.mrb[0].mxu0
    %v3064 = vadd.f32 %v2979, %v3063
    %v3065 = vpop.f32.mrb[0].mxu0
    %3066 = vdwg.mxu0
    %vm3067 = vcmask 25600
    %3068 = vst.msk [vmem:[#allocation26] sm:$0x3] %vm3067, %v3064
    // Predicated region
    $region134: #{tpu_custom_call.1} parent=1 // pred_check
      _
    $region135: #{tpu_custom_call.1} parent=1 // pred_check_branch
      %3070 = sbr.rel (0) target = $region137
    $region136: #{tpu_custom_call.1} parent=1 // pred_region
      %s3072 = ssub.s32 32, 32
      %3073 = vsyncadd [#allocation4], %s3072
      %s3075 = sshll.u32 [#allocation26], 4
      %s3076 = int_to_ptr.vmem [resolvable:$true] %s3075
      %3078 = dma.vmem_to_hbm [thread:$0]  %s3076, 32, %s18, [#allocation4]
    $region137: #{tpu_custom_call.1} parent=1 // pred_fallthru
      _
    // Predicated region
    $region138: #{tpu_custom_call.1} parent=1 // pred_check
      _
    $region139: #{tpu_custom_call.1} parent=1 // pred_check_branch
      %3080 = sbr.rel (0) target = $region141
    $region140: #{tpu_custom_call.1} parent=1 // pred_region
      %3081 = dma.done [#allocation4], 32
    $region141: #{tpu_custom_call.1} parent=1 // pred_fallthru
      _
    %3082 = vsyncpa [#allocation3], 1
    %3083 = vsyncpa [#allocation6], 1
    %3084 = vsyncpa [#allocation9], 1
    %3085 = vsyncpa [#allocation12], 1
    %3086 = vsyncpa [#allocation15], 1
    %3087 = vsyncpa [#allocation18], 1
    %3088 = vsyncpa [#allocation21], 1
    %3089 = vsyncpa [#allocation24], 1
    %3090 = vsyncpa [#allocation4], 1

</llo_original>
